<compile_context>
chip_gen: v7x
topology: tpu7x:2x2x1
jax: 0.10.0
libtpu: 0.0.40
codegen_flags: <defaults>
</compile_context>

<pallas_src>
import jax
import jax.numpy as jnp
from jax import lax
from jax.experimental import pallas as pl
from jax.experimental.pallas import tpu as pltpu

EPS = 1e-7
WIN_RAD = 1
WIN_DIAM = 2 * WIN_RAD + 1          # 3
WIN_SIZE = WIN_DIAM * WIN_DIAM      # 9


def _round_up(x, m):
    return ((x + m - 1) // m) * m


# ---------------------------------------------------------------------------
# in-kernel symmetric 3x3 box filter
#   out[i, j] = sum_{|di|<=1, |dj|<=1} p[i+di, j+dj]
# Rows (sublane axis): zero-filled slice+concat (unambiguous, non-minor concat).
# Cols (lane axis): pltpu.roll in both directions (sign convention irrelevant
# because both are summed; wrapped lanes only reach masked columns).
# ---------------------------------------------------------------------------
def _box3(p):
    z = jnp.zeros((1, p.shape[1]), p.dtype)
    rs = (p
          + jnp.concatenate([p[1:, :], z], axis=0)
          + jnp.concatenate([z, p[:-1, :]], axis=0))
    n = p.shape[1]
    return rs + pltpu.roll(rs, 1, 1) + pltpu.roll(rs, n - 1, 1)


# ---------------------------------------------------------------------------
# fused kernel factory
#   grid = (B, n_row_tiles); each step handles TR output pixel rows for all C
#   classes and writes one (1,1) partial sum of squared residuals.
# ---------------------------------------------------------------------------
def _make_fused_kernel(C, TR, Wp, conf_val):
    inv_ws = 1.0 / float(WIN_SIZE)
    c_reg = EPS / float(WIN_SIZE)

    def kernel(img_a, img_b, x_a, x_b, wm_a, wm_b, tri_ref, out_ref):
        # Slabs with a 2-row halo on each side of the TR output rows.
        # slab row s  <->  padded pixel row t*TR + s  <->  true row t*TR + s - 2
        img_s = jnp.concatenate([img_a[...], img_b[:, :4, :]], axis=1)   # (3, TR+4, Wp)
        x_s = jnp.concatenate([x_a[...], x_b[:, :4, :]], axis=1)         # (C, TR+4, Wp)
        wm = jnp.concatenate([wm_a[...], wm_b[:4, :]], axis=0)           # (TR+4, Wp)
        tri = tri_ref[...]                                               # (TR, Wp)

        i0, i1, i2 = img_s[0], img_s[1], img_s[2]

        # ---- class-independent per-window statistics (window = 3x3 around
        # its center; center fields share the full (TR+4, Wp) slab shape) ----
        mu0 = _box3(i0) * inv_ws
        mu1 = _box3(i1) * inv_ws
        mu2 = _box3(i2) * inv_ws

        m00 = _box3(i0 * i0) * inv_ws - mu0 * mu0 + c_reg
        m01 = _box3(i0 * i1) * inv_ws - mu0 * mu1
        m02 = _box3(i0 * i2) * inv_ws - mu0 * mu2
        m11 = _box3(i1 * i1) * inv_ws - mu1 * mu1 + c_reg
        m12 = _box3(i1 * i2) * inv_ws - mu1 * mu2
        m22 = _box3(i2 * i2) * inv_ws - mu2 * mu2 + c_reg

        # symmetric 3x3 inverse via cofactors (shared with det)
        cof00 = m11 * m22 - m12 * m12
        cof01 = m02 * m12 - m01 * m22
        cof02 = m01 * m12 - m02 * m11
        det = m00 * cof00 + m01 * cof01 + m02 * cof02
        rdet = pl.reciprocal(det, approx=False)
        v00 = cof00 * rdet
        v01 = cof01 * rdet
        v02 = cof02 * rdet
        v11 = (m00 * m22 - m02 * m02) * rdet
        v12 = (m02 * m01 - m00 * m12) * rdet
        v22 = (m00 * m11 - m01 * m01) * rdet

        # per-pixel quantities for the TR output rows (slab rows [2, TR+2))
        nv = _box3(wm)[2:TR + 2]                     # number of valid windows per pixel
        conf = jnp.where(tri != jnp.float32(128.0),
                         jnp.float32(conf_val), jnp.float32(0.0))
        ip0 = i0[2:TR + 2]
        ip1 = i1[2:TR + 2]
        ip2 = i2[2:TR + 2]

        sq = jnp.zeros((TR, Wp), jnp.float32)
        for c in range(C):                            # static unroll over classes
            xc = x_s[c]                               # (TR+4, Wp)
            S = _box3(xc)                             # sum of x over each window
            z0 = _box3(i0 * xc) - mu0 * S
            z1 = _box3(i1 * xc) - mu1 * S
            z2 = _box3(i2 * xc) - mu2 * S
            w0 = v00 * z0 + v01 * z1 + v02 * z2
            w1 = v01 * z0 + v11 * z1 + v12 * z2
            w2 = v02 * z0 + v12 * z1 + v22 * z2
            q = wm * (S - (mu0 * w0 + mu1 * w1 + mu2 * w2))
            r0 = wm * w0
            r1 = wm * w1
            r2 = wm * w2
            # scatter-add of the window contributions = reverse 3x3 box sums
            Qr = _box3(q)[2:TR + 2]
            R0 = _box3(r0)[2:TR + 2]
            R1 = _box3(r1)[2:TR + 2]
            R2 = _box3(r2)[2:TR + 2]
            xp = xc[2:TR + 2]
            Lx = xp * nv - inv_ws * (Qr + ip0 * R0 + ip1 * R1 + ip2 * R2)
            bvec = jnp.where(tri == jnp.float32(c + 1),
                             jnp.float32(conf_val), jnp.float32(0.0))
            res = Lx + conf * xp - bvec
            sq = sq + res * res

        part = jnp.sum(sq, axis=1, keepdims=True)              # (TR, 1)
        out_ref[...] = jnp.sum(part, axis=0, keepdims=True)    # (1, 1)

    return kernel


# ---------------------------------------------------------------------------
# plain-JAX glue
# ---------------------------------------------------------------------------
def _choose_row_tile(H, Wp, C, budget_bytes=8 * 1024 * 1024):
    # per-step input blocks, double-buffered; image/cprob/mask are passed
    # twice (halo trick), trimap once.
    per_row = (2 * 3 + 2 * C + 2 + 1) * Wp * 4 * 2
    tr = budget_bytes // max(per_row, 1)
    tr = max(8, min(128, (tr // 8) * 8))
    return int(min(tr, _round_up(H, 8)))


def _vmem_limit_bytes():
    try:
        cap = int(pltpu.get_tpu_info().vmem_capacity_bytes)
    except Exception:
        cap = 64 * 1024 * 1024
    return int(max(32 * 1024 * 1024, min(cap * 3 // 4, 96 * 1024 * 1024)))


def compute_window_mask(consts):
    """cv2.dilate(~consts, 3x3) then per-window (3x3, VALID) sum > 0."""
    shp = consts.shape
    m = jnp.logical_not(consts).reshape((-1,) + shp[-2:]).astype(jnp.float32)
    dil = lax.reduce_window(m, -jnp.inf, lax.max, (1, 3, 3), (1, 1, 1),
                            padding=((0, 0), (1, 1), (1, 1)))
    ws = lax.reduce_window(dil, 0.0, lax.add, (1, 3, 3), (1, 1, 1),
                           padding='VALID')
    return (ws > 0).astype(jnp.float32).reshape(shp[:-2] + ws.shape[1:])


def gen_trimaps_batched(trimap, n_classes):
    """Mirror of ClosedFormLoss.__gentrimaps: values in {0, 128, 255}."""
    tags = jnp.arange(1, n_classes + 1, dtype=trimap.dtype).reshape(1, n_classes, 1, 1)
    t = trimap[:, None, :, :]
    tri = jnp.where(t == tags, 255.0, jnp.where(t != 128, 0.0, 128.0))
    return tri.astype(jnp.float32)                                     # (B, C, H, W)


def window_indices(H, W):
    """Only used by the dense pure-JAX reference."""
    ch, cw = H - 2 * WIN_RAD, W - 2 * WIN_RAD
    ii, jj = jnp.meshgrid(jnp.arange(ch), jnp.arange(cw), indexing='ij')
    base = (ii * W + jj).reshape(-1)                                   # (Nw,)
    offs = jnp.array([di * W + dj for di in range(WIN_DIAM)
                      for dj in range(WIN_DIAM)], dtype=jnp.int32)     # (9,)
    return base[:, None] + offs[None, :]                               # (Nw, 9)


def closed_form_loss(cprob, img_org, trimap, n_classes,
                     trimap_confidence=100.0, row_tile=None):
    B, C, H, W = cprob.shape
    assert C == n_classes
    hw = H * W
    ch, cw = H - 2 * WIN_RAD, W - 2 * WIN_RAD
    Wp = _round_up(W, 128)

    if row_tile is None:
        TR = _choose_row_tile(H, Wp, C)
    else:
        TR = max(8, _round_up(int(row_tile), 8))
        TR = min(TR, _round_up(H, 8))
    n_tiles = (H + TR - 1) // TR
    Hp = (n_tiles + 1) * TR          # halo'd arrays: 2 top pad rows + bottom pad
    Hr = n_tiles * TR                # trimap rows (output-aligned, no top pad)

    # image: /255 then -0.5 (translation-invariant moments -> better f32
    # conditioning of E[ab]-mu*mu), channel-first, 2-row top pad.
    img = jnp.transpose(img_org.astype(jnp.float32), (0, 3, 1, 2)) / 255.0 - 0.5
    img_pad = jnp.pad(img, ((0, 0), (0, 0), (2, Hp - 2 - H), (0, Wp - W)))
    x_pad = jnp.pad(cprob.astype(jnp.float32),
                    ((0, 0), (0, 0), (2, Hp - 2 - H), (0, Wp - W)))

    tri_f = trimap.astype(jnp.float32)
    consts = tri_f != 128.0                              # class independent
    wmask = compute_window_mask(consts)                  # (B, ch, cw), top-left indexed
    # re-index by window CENTER and place on padded pixel coordinates
    wmask_pad = jnp.pad(wmask, ((0, 0), (3, Hp - 3 - ch), (1, Wp - 1 - cw)))
    tri_pad = jnp.pad(tri_f, ((0, 0), (0, Hr - H), (0, Wp - W)))

    kernel = _make_fused_kernel(C, TR, Wp, float(trimap_confidence))

    partials = pl.pallas_call(
        kernel,
        out_shape=jax.ShapeDtypeStruct((B, n_tiles, 1, 1), jnp.float32),
        grid_spec=pltpu.PrefetchScalarGridSpec(
            num_scalar_prefetch=0,
            grid=(B, n_tiles),
            in_specs=[
                # image rows t*TR .. and the next block (halo) of the SAME array
                pl.BlockSpec((None, 3, TR, Wp), lambda b, t: (b, 0, t, 0)),
                pl.BlockSpec((None, 3, TR, Wp), lambda b, t: (b, 0, t + 1, 0)),
                # cprob: same halo trick, all C classes per step
                pl.BlockSpec((None, C, TR, Wp), lambda b, t: (b, 0, t, 0)),
                pl.BlockSpec((None, C, TR, Wp), lambda b, t: (b, 0, t + 1, 0)),
                # window validity mask (class independent, center indexed)
                pl.BlockSpec((None, TR, Wp), lambda b, t: (b, t, 0)),
                pl.BlockSpec((None, TR, Wp), lambda b, t: (b, t + 1, 0)),
                # raw trimap for the output rows (conf / target derived in-kernel)
                pl.BlockSpec((None, TR, Wp), lambda b, t: (b, t, 0)),
            ],
            out_specs=pl.BlockSpec((None, None, 1, 1), lambda b, t: (b, t, 0, 0)),
        ),
        compiler_params=pltpu.CompilerParams(
            dimension_semantics=("parallel", "parallel"),
            vmem_limit_bytes=_vmem_limit_bytes(),
        ),
    )(img_pad, img_pad, x_pad, x_pad, wmask_pad, wmask_pad, tri_pad)

    # loss[n,c] = MSE(A x, b) / hw = sum(res^2)/hw^2 ; total = sum over (n,c)
    return jnp.sum(partials) / jnp.float32(hw * hw)


# ---------------------------------------------------------------------------
# pure-JAX (dense) reference, mirroring the torch code path
# ---------------------------------------------------------------------------
def reference_loss(cprob, img_org, trimap, n_classes, trimap_confidence=100.0):
    B, C, H, W = cprob.shape
    hw = H * W
    win_inds = window_indices(H, W)
    eye3 = jnp.eye(3, dtype=jnp.float32)
    eye9 = jnp.eye(WIN_SIZE, dtype=jnp.float32)
    tri_all = gen_trimaps_batched(trimap, C)
    prior_all = tri_all / 255.0
    consts_all = (prior_all < 0.1) | (prior_all > 0.9)
    conf_all = trimap_confidence * consts_all.astype(jnp.float32)
    wmask_all = compute_window_mask(consts_all)
    total = jnp.float32(0.0)
    for n in range(B):
        img = img_org[n].astype(jnp.float32) / 255.0
        ravel_img = img.reshape(hw, 3)
        winI = ravel_img[win_inds]                                     # (Nw, 9, 3)
        for c in range(C):
            prior = prior_all[n, c]
            conf = conf_all[n, c]
            wmask = wmask_all[n, c].reshape(-1)
            mu = jnp.mean(winI, axis=1, keepdims=True)
            var = (jnp.einsum('nji,njk->nik', winI, winI) / WIN_SIZE
                   - jnp.einsum('nji,njk->nik', mu, mu))
            inv = jnp.linalg.inv(var + (EPS / WIN_SIZE) * eye3)
            X = jnp.einsum('nij,njk->nik', winI - mu, inv)
            vals = eye9 - (1.0 / WIN_SIZE) * (
                1.0 + jnp.einsum('nij,nkj->nik', X, winI - mu))
            vals = vals * wmask[:, None, None]
            rows = jnp.repeat(win_inds, WIN_SIZE, axis=1).reshape(-1)
            cols = jnp.tile(win_inds, (1, WIN_SIZE)).reshape(-1)
            L = jnp.zeros((hw, hw), jnp.float32).at[rows, cols].add(
                vals.reshape(-1))
            A = L + jnp.diag(conf.reshape(-1))
            x = cprob[n, c].reshape(hw).astype(jnp.float32)
            b = prior.reshape(-1) * conf.reshape(-1)
            res = A @ x - b
            total = total + jnp.mean(res * res) / hw
    return total


if __name__ == "__main__":
    key = jax.random.PRNGKey(0)
    B, C, H, W = 2, 3, 16, 16
    k1, k2, k3 = jax.random.split(key, 3)

    cprob = jax.random.uniform(k1, (B, C, H, W), dtype=jnp.float32)
    img_org = jax.random.uniform(k2, (B, H, W, 3), dtype=jnp.float32) * 255.0
    label_vals = jnp.array([128, 1, 2, 3], dtype=jnp.int32)
    trimap = label_vals[jax.random.randint(k3, (B, H, W), 0, 4)]

    # row_tile=8 -> two row tiles per image so the halo path (real-data halo
    # for tile 0, all-padding halo for the last tile) is exercised.
    loss = closed_form_loss(cprob, img_org, trimap, n_classes=C, row_tile=8)
    loss = jax.block_until_ready(loss)

    ref = reference_loss(cprob, img_org, trimap, n_classes=C)
    ref = jax.block_until_ready(ref)

    assert bool(jnp.isfinite(loss)), "kernel produced non-finite loss"
    rel = abs(float(loss) - float(ref)) / max(1e-6, abs(float(ref)))
    assert rel < 1e-3, (float(loss), float(ref), rel)

    print("KERNEL_OK")
</pallas_src>

<mosaic_0001>
module attributes {stable_mosaic.version = 11 : i64} {
  func.func @kernel(%arg0: i32, %arg1: i32, %arg2: memref<1x3x8x128xf32, #tpu.memory_space<vmem>>, %arg3: memref<1x3x8x128xf32, #tpu.memory_space<vmem>>, %arg4: memref<1x3x8x128xf32, #tpu.memory_space<vmem>>, %arg5: memref<1x3x8x128xf32, #tpu.memory_space<vmem>>, %arg6: memref<1x8x128xf32, #tpu.memory_space<vmem>>, %arg7: memref<1x8x128xf32, #tpu.memory_space<vmem>>, %arg8: memref<1x8x128xf32, #tpu.memory_space<vmem>>, %arg9: memref<1x1x1x1xf32, #tpu.memory_space<vmem>>) attributes {dimension_semantics = [#tpu.dimension_semantics<parallel>, #tpu.dimension_semantics<parallel>], iteration_bounds = array<i64: 2, 2>, scalar_prefetch = 0 : i64, scratch_operands = 0 : i64, tpu.core_type = #tpu.core_type<tc>, window_params = [{transform_indices = @transform_0, window_bounds = array<i64: 1, 3, 8, 128>}, {transform_indices = @transform_1, window_bounds = array<i64: 1, 3, 8, 128>}, {transform_indices = @transform_2, window_bounds = array<i64: 1, 3, 8, 128>}, {transform_indices = @transform_3, window_bounds = array<i64: 1, 3, 8, 128>}, {transform_indices = @transform_4, window_bounds = array<i64: 1, 8, 128>}, {transform_indices = @transform_5, window_bounds = array<i64: 1, 8, 128>}, {transform_indices = @transform_6, window_bounds = array<i64: 1, 8, 128>}, {transform_indices = @transform_7, window_bounds = array<i64: 1, 1, 1, 1>}]} {
    %c0 = arith.constant 0 : index
    %c0_0 = arith.constant 0 : index
    %c0_1 = arith.constant 0 : index
    %c0_2 = arith.constant 0 : index
    %0 = vector.load %arg2[%c0, %c0_0, %c0_1, %c0_2] : memref<1x3x8x128xf32, #tpu.memory_space<vmem>>, vector<1x3x8x128xf32>
    %1 = vector.shape_cast %0 : vector<1x3x8x128xf32> to vector<3x8x128xf32>
    %c0_3 = arith.constant 0 : index
    %c0_4 = arith.constant 0 : index
    %c0_5 = arith.constant 0 : index
    %c0_6 = arith.constant 0 : index
    %2 = vector.load %arg3[%c0_3, %c0_4, %c0_5, %c0_6] : memref<1x3x8x128xf32, #tpu.memory_space<vmem>>, vector<1x3x4x128xf32>
    %3 = vector.shape_cast %2 : vector<1x3x4x128xf32> to vector<3x4x128xf32>
    %4 = tpu.concatenate %1, %3 in 1 : vector<3x8x128xf32>, vector<3x4x128xf32> -> vector<3x12x128xf32>
    %c0_7 = arith.constant 0 : index
    %c0_8 = arith.constant 0 : index
    %c0_9 = arith.constant 0 : index
    %c0_10 = arith.constant 0 : index
    %5 = vector.load %arg4[%c0_7, %c0_8, %c0_9, %c0_10] : memref<1x3x8x128xf32, #tpu.memory_space<vmem>>, vector<1x3x8x128xf32>
    %6 = vector.shape_cast %5 : vector<1x3x8x128xf32> to vector<3x8x128xf32>
    %c0_11 = arith.constant 0 : index
    %c0_12 = arith.constant 0 : index
    %c0_13 = arith.constant 0 : index
    %c0_14 = arith.constant 0 : index
    %7 = vector.load %arg5[%c0_11, %c0_12, %c0_13, %c0_14] : memref<1x3x8x128xf32, #tpu.memory_space<vmem>>, vector<1x3x4x128xf32>
    %8 = vector.shape_cast %7 : vector<1x3x4x128xf32> to vector<3x4x128xf32>
    %9 = tpu.concatenate %6, %8 in 1 : vector<3x8x128xf32>, vector<3x4x128xf32> -> vector<3x12x128xf32>
    %c0_15 = arith.constant 0 : index
    %c0_16 = arith.constant 0 : index
    %c0_17 = arith.constant 0 : index
    %10 = vector.load %arg6[%c0_15, %c0_16, %c0_17] : memref<1x8x128xf32, #tpu.memory_space<vmem>>, vector<1x8x128xf32>
    %11 = vector.shape_cast %10 : vector<1x8x128xf32> to vector<8x128xf32>
    %c0_18 = arith.constant 0 : index
    %c0_19 = arith.constant 0 : index
    %c0_20 = arith.constant 0 : index
    %12 = vector.load %arg7[%c0_18, %c0_19, %c0_20] : memref<1x8x128xf32, #tpu.memory_space<vmem>>, vector<1x4x128xf32>
    %13 = vector.shape_cast %12 : vector<1x4x128xf32> to vector<4x128xf32>
    %14 = tpu.concatenate %11, %13 in 0 : vector<8x128xf32>, vector<4x128xf32> -> vector<12x128xf32>
    %c0_21 = arith.constant 0 : index
    %c0_22 = arith.constant 0 : index
    %c0_23 = arith.constant 0 : index
    %15 = vector.load %arg8[%c0_21, %c0_22, %c0_23] : memref<1x8x128xf32, #tpu.memory_space<vmem>>, vector<1x8x128xf32>
    %16 = vector.shape_cast %15 : vector<1x8x128xf32> to vector<8x128xf32>
    %17 = vector.extract_strided_slice %4 {offsets = [0, 0, 0], sizes = [1, 12, 128], strides = [1, 1, 1]} : vector<3x12x128xf32> to vector<1x12x128xf32>
    %18 = vector.shape_cast %17 : vector<1x12x128xf32> to vector<12x128xf32>
    %19 = vector.extract_strided_slice %4 {offsets = [1, 0, 0], sizes = [1, 12, 128], strides = [1, 1, 1]} : vector<3x12x128xf32> to vector<1x12x128xf32>
    %20 = vector.shape_cast %19 : vector<1x12x128xf32> to vector<12x128xf32>
    %21 = vector.extract_strided_slice %4 {offsets = [2, 0, 0], sizes = [1, 12, 128], strides = [1, 1, 1]} : vector<3x12x128xf32> to vector<1x12x128xf32>
    %22 = vector.shape_cast %21 : vector<1x12x128xf32> to vector<12x128xf32>
    %cst = arith.constant 0.000000e+00 : f32
    %23 = vector.broadcast %cst : f32 to vector<1x128xf32>
    %24 = vector.extract_strided_slice %18 {offsets = [1, 0], sizes = [11, 128], strides = [1, 1]} : vector<12x128xf32> to vector<11x128xf32>
    %25 = tpu.concatenate %24, %23 in 0 : vector<11x128xf32>, vector<1x128xf32> -> vector<12x128xf32>
    %26 = arith.addf %18, %25 : vector<12x128xf32>
    %27 = vector.extract_strided_slice %18 {offsets = [0, 0], sizes = [11, 128], strides = [1, 1]} : vector<12x128xf32> to vector<11x128xf32>
    %28 = tpu.concatenate %23, %27 in 0 : vector<1x128xf32>, vector<11x128xf32> -> vector<12x128xf32>
    %29 = arith.addf %26, %28 : vector<12x128xf32>
    %c1_i32 = arith.constant 1 : i32
    %30 = tpu.dynamic_rotate %29 by %c1_i32 dim 1 : vector<12x128xf32>, i32 -> vector<12x128xf32>
    %31 = arith.addf %29, %30 : vector<12x128xf32>
    %c127_i32 = arith.constant 127 : i32
    %32 = tpu.dynamic_rotate %29 by %c127_i32 dim 1 : vector<12x128xf32>, i32 -> vector<12x128xf32>
    %33 = arith.addf %31, %32 : vector<12x128xf32>
    %cst_24 = arith.constant 0.111111112 : f32
    %34 = vector.broadcast %cst_24 : f32 to vector<12x128xf32>
    %35 = arith.mulf %33, %34 : vector<12x128xf32>
    %cst_25 = arith.constant 0.000000e+00 : f32
    %36 = vector.broadcast %cst_25 : f32 to vector<1x128xf32>
    %37 = vector.extract_strided_slice %20 {offsets = [1, 0], sizes = [11, 128], strides = [1, 1]} : vector<12x128xf32> to vector<11x128xf32>
    %38 = tpu.concatenate %37, %36 in 0 : vector<11x128xf32>, vector<1x128xf32> -> vector<12x128xf32>
    %39 = arith.addf %20, %38 : vector<12x128xf32>
    %40 = vector.extract_strided_slice %20 {offsets = [0, 0], sizes = [11, 128], strides = [1, 1]} : vector<12x128xf32> to vector<11x128xf32>
    %41 = tpu.concatenate %36, %40 in 0 : vector<1x128xf32>, vector<11x128xf32> -> vector<12x128xf32>
    %42 = arith.addf %39, %41 : vector<12x128xf32>
    %c1_i32_26 = arith.constant 1 : i32
    %43 = tpu.dynamic_rotate %42 by %c1_i32_26 dim 1 : vector<12x128xf32>, i32 -> vector<12x128xf32>
    %44 = arith.addf %42, %43 : vector<12x128xf32>
    %c127_i32_27 = arith.constant 127 : i32
    %45 = tpu.dynamic_rotate %42 by %c127_i32_27 dim 1 : vector<12x128xf32>, i32 -> vector<12x128xf32>
    %46 = arith.addf %44, %45 : vector<12x128xf32>
    %cst_28 = arith.constant 0.111111112 : f32
    %47 = vector.broadcast %cst_28 : f32 to vector<12x128xf32>
    %48 = arith.mulf %46, %47 : vector<12x128xf32>
    %cst_29 = arith.constant 0.000000e+00 : f32
    %49 = vector.broadcast %cst_29 : f32 to vector<1x128xf32>
    %50 = vector.extract_strided_slice %22 {offsets = [1, 0], sizes = [11, 128], strides = [1, 1]} : vector<12x128xf32> to vector<11x128xf32>
    %51 = tpu.concatenate %50, %49 in 0 : vector<11x128xf32>, vector<1x128xf32> -> vector<12x128xf32>
    %52 = arith.addf %22, %51 : vector<12x128xf32>
    %53 = vector.extract_strided_slice %22 {offsets = [0, 0], sizes = [11, 128], strides = [1, 1]} : vector<12x128xf32> to vector<11x128xf32>
    %54 = tpu.concatenate %49, %53 in 0 : vector<1x128xf32>, vector<11x128xf32> -> vector<12x128xf32>
    %55 = arith.addf %52, %54 : vector<12x128xf32>
    %c1_i32_30 = arith.constant 1 : i32
    %56 = tpu.dynamic_rotate %55 by %c1_i32_30 dim 1 : vector<12x128xf32>, i32 -> vector<12x128xf32>
    %57 = arith.addf %55, %56 : vector<12x128xf32>
    %c127_i32_31 = arith.constant 127 : i32
    %58 = tpu.dynamic_rotate %55 by %c127_i32_31 dim 1 : vector<12x128xf32>, i32 -> vector<12x128xf32>
    %59 = arith.addf %57, %58 : vector<12x128xf32>
    %cst_32 = arith.constant 0.111111112 : f32
    %60 = vector.broadcast %cst_32 : f32 to vector<12x128xf32>
    %61 = arith.mulf %59, %60 : vector<12x128xf32>
    %62 = arith.mulf %18, %18 : vector<12x128xf32>
    %cst_33 = arith.constant 0.000000e+00 : f32
    %63 = vector.broadcast %cst_33 : f32 to vector<1x128xf32>
    %64 = vector.extract_strided_slice %62 {offsets = [1, 0], sizes = [11, 128], strides = [1, 1]} : vector<12x128xf32> to vector<11x128xf32>
    %65 = tpu.concatenate %64, %63 in 0 : vector<11x128xf32>, vector<1x128xf32> -> vector<12x128xf32>
    %66 = arith.addf %62, %65 : vector<12x128xf32>
    %67 = vector.extract_strided_slice %62 {offsets = [0, 0], sizes = [11, 128], strides = [1, 1]} : vector<12x128xf32> to vector<11x128xf32>
    %68 = tpu.concatenate %63, %67 in 0 : vector<1x128xf32>, vector<11x128xf32> -> vector<12x128xf32>
    %69 = arith.addf %66, %68 : vector<12x128xf32>
    %c1_i32_34 = arith.constant 1 : i32
    %70 = tpu.dynamic_rotate %69 by %c1_i32_34 dim 1 : vector<12x128xf32>, i32 -> vector<12x128xf32>
    %71 = arith.addf %69, %70 : vector<12x128xf32>
    %c127_i32_35 = arith.constant 127 : i32
    %72 = tpu.dynamic_rotate %69 by %c127_i32_35 dim 1 : vector<12x128xf32>, i32 -> vector<12x128xf32>
    %73 = arith.addf %71, %72 : vector<12x128xf32>
    %cst_36 = arith.constant 0.111111112 : f32
    %74 = vector.broadcast %cst_36 : f32 to vector<12x128xf32>
    %75 = arith.mulf %73, %74 : vector<12x128xf32>
    %76 = arith.mulf %35, %35 : vector<12x128xf32>
    %77 = arith.subf %75, %76 : vector<12x128xf32>
    %cst_37 = arith.constant 1.11111111E-8 : f32
    %78 = vector.broadcast %cst_37 : f32 to vector<12x128xf32>
    %79 = arith.addf %77, %78 : vector<12x128xf32>
    %80 = arith.mulf %18, %20 : vector<12x128xf32>
    %cst_38 = arith.constant 0.000000e+00 : f32
    %81 = vector.broadcast %cst_38 : f32 to vector<1x128xf32>
    %82 = vector.extract_strided_slice %80 {offsets = [1, 0], sizes = [11, 128], strides = [1, 1]} : vector<12x128xf32> to vector<11x128xf32>
    %83 = tpu.concatenate %82, %81 in 0 : vector<11x128xf32>, vector<1x128xf32> -> vector<12x128xf32>
    %84 = arith.addf %80, %83 : vector<12x128xf32>
    %85 = vector.extract_strided_slice %80 {offsets = [0, 0], sizes = [11, 128], strides = [1, 1]} : vector<12x128xf32> to vector<11x128xf32>
    %86 = tpu.concatenate %81, %85 in 0 : vector<1x128xf32>, vector<11x128xf32> -> vector<12x128xf32>
    %87 = arith.addf %84, %86 : vector<12x128xf32>
    %c1_i32_39 = arith.constant 1 : i32
    %88 = tpu.dynamic_rotate %87 by %c1_i32_39 dim 1 : vector<12x128xf32>, i32 -> vector<12x128xf32>
    %89 = arith.addf %87, %88 : vector<12x128xf32>
    %c127_i32_40 = arith.constant 127 : i32
    %90 = tpu.dynamic_rotate %87 by %c127_i32_40 dim 1 : vector<12x128xf32>, i32 -> vector<12x128xf32>
    %91 = arith.addf %89, %90 : vector<12x128xf32>
    %cst_41 = arith.constant 0.111111112 : f32
    %92 = vector.broadcast %cst_41 : f32 to vector<12x128xf32>
    %93 = arith.mulf %91, %92 : vector<12x128xf32>
    %94 = arith.mulf %35, %48 : vector<12x128xf32>
    %95 = arith.subf %93, %94 : vector<12x128xf32>
    %96 = arith.mulf %18, %22 : vector<12x128xf32>
    %cst_42 = arith.constant 0.000000e+00 : f32
    %97 = vector.broadcast %cst_42 : f32 to vector<1x128xf32>
    %98 = vector.extract_strided_slice %96 {offsets = [1, 0], sizes = [11, 128], strides = [1, 1]} : vector<12x128xf32> to vector<11x128xf32>
    %99 = tpu.concatenate %98, %97 in 0 : vector<11x128xf32>, vector<1x128xf32> -> vector<12x128xf32>
    %100 = arith.addf %96, %99 : vector<12x128xf32>
    %101 = vector.extract_strided_slice %96 {offsets = [0, 0], sizes = [11, 128], strides = [1, 1]} : vector<12x128xf32> to vector<11x128xf32>
    %102 = tpu.concatenate %97, %101 in 0 : vector<1x128xf32>, vector<11x128xf32> -> vector<12x128xf32>
    %103 = arith.addf %100, %102 : vector<12x128xf32>
    %c1_i32_43 = arith.constant 1 : i32
    %104 = tpu.dynamic_rotate %103 by %c1_i32_43 dim 1 : vector<12x128xf32>, i32 -> vector<12x128xf32>
    %105 = arith.addf %103, %104 : vector<12x128xf32>
    %c127_i32_44 = arith.constant 127 : i32
    %106 = tpu.dynamic_rotate %103 by %c127_i32_44 dim 1 : vector<12x128xf32>, i32 -> vector<12x128xf32>
    %107 = arith.addf %105, %106 : vector<12x128xf32>
    %cst_45 = arith.constant 0.111111112 : f32
    %108 = vector.broadcast %cst_45 : f32 to vector<12x128xf32>
    %109 = arith.mulf %107, %108 : vector<12x128xf32>
    %110 = arith.mulf %35, %61 : vector<12x128xf32>
    %111 = arith.subf %109, %110 : vector<12x128xf32>
    %112 = arith.mulf %20, %20 : vector<12x128xf32>
    %cst_46 = arith.constant 0.000000e+00 : f32
    %113 = vector.broadcast %cst_46 : f32 to vector<1x128xf32>
    %114 = vector.extract_strided_slice %112 {offsets = [1, 0], sizes = [11, 128], strides = [1, 1]} : vector<12x128xf32> to vector<11x128xf32>
    %115 = tpu.concatenate %114, %113 in 0 : vector<11x128xf32>, vector<1x128xf32> -> vector<12x128xf32>
    %116 = arith.addf %112, %115 : vector<12x128xf32>
    %117 = vector.extract_strided_slice %112 {offsets = [0, 0], sizes = [11, 128], strides = [1, 1]} : vector<12x128xf32> to vector<11x128xf32>
    %118 = tpu.concatenate %113, %117 in 0 : vector<1x128xf32>, vector<11x128xf32> -> vector<12x128xf32>
    %119 = arith.addf %116, %118 : vector<12x128xf32>
    %c1_i32_47 = arith.constant 1 : i32
    %120 = tpu.dynamic_rotate %119 by %c1_i32_47 dim 1 : vector<12x128xf32>, i32 -> vector<12x128xf32>
    %121 = arith.addf %119, %120 : vector<12x128xf32>
    %c127_i32_48 = arith.constant 127 : i32
    %122 = tpu.dynamic_rotate %119 by %c127_i32_48 dim 1 : vector<12x128xf32>, i32 -> vector<12x128xf32>
    %123 = arith.addf %121, %122 : vector<12x128xf32>
    %cst_49 = arith.constant 0.111111112 : f32
    %124 = vector.broadcast %cst_49 : f32 to vector<12x128xf32>
    %125 = arith.mulf %123, %124 : vector<12x128xf32>
    %126 = arith.mulf %48, %48 : vector<12x128xf32>
    %127 = arith.subf %125, %126 : vector<12x128xf32>
    %cst_50 = arith.constant 1.11111111E-8 : f32
    %128 = vector.broadcast %cst_50 : f32 to vector<12x128xf32>
    %129 = arith.addf %127, %128 : vector<12x128xf32>
    %130 = arith.mulf %20, %22 : vector<12x128xf32>
    %cst_51 = arith.constant 0.000000e+00 : f32
    %131 = vector.broadcast %cst_51 : f32 to vector<1x128xf32>
    %132 = vector.extract_strided_slice %130 {offsets = [1, 0], sizes = [11, 128], strides = [1, 1]} : vector<12x128xf32> to vector<11x128xf32>
    %133 = tpu.concatenate %132, %131 in 0 : vector<11x128xf32>, vector<1x128xf32> -> vector<12x128xf32>
    %134 = arith.addf %130, %133 : vector<12x128xf32>
    %135 = vector.extract_strided_slice %130 {offsets = [0, 0], sizes = [11, 128], strides = [1, 1]} : vector<12x128xf32> to vector<11x128xf32>
    %136 = tpu.concatenate %131, %135 in 0 : vector<1x128xf32>, vector<11x128xf32> -> vector<12x128xf32>
    %137 = arith.addf %134, %136 : vector<12x128xf32>
    %c1_i32_52 = arith.constant 1 : i32
    %138 = tpu.dynamic_rotate %137 by %c1_i32_52 dim 1 : vector<12x128xf32>, i32 -> vector<12x128xf32>
    %139 = arith.addf %137, %138 : vector<12x128xf32>
    %c127_i32_53 = arith.constant 127 : i32
    %140 = tpu.dynamic_rotate %137 by %c127_i32_53 dim 1 : vector<12x128xf32>, i32 -> vector<12x128xf32>
    %141 = arith.addf %139, %140 : vector<12x128xf32>
    %cst_54 = arith.constant 0.111111112 : f32
    %142 = vector.broadcast %cst_54 : f32 to vector<12x128xf32>
    %143 = arith.mulf %141, %142 : vector<12x128xf32>
    %144 = arith.mulf %48, %61 : vector<12x128xf32>
    %145 = arith.subf %143, %144 : vector<12x128xf32>
    %146 = arith.mulf %22, %22 : vector<12x128xf32>
    %cst_55 = arith.constant 0.000000e+00 : f32
    %147 = vector.broadcast %cst_55 : f32 to vector<1x128xf32>
    %148 = vector.extract_strided_slice %146 {offsets = [1, 0], sizes = [11, 128], strides = [1, 1]} : vector<12x128xf32> to vector<11x128xf32>
    %149 = tpu.concatenate %148, %147 in 0 : vector<11x128xf32>, vector<1x128xf32> -> vector<12x128xf32>
    %150 = arith.addf %146, %149 : vector<12x128xf32>
    %151 = vector.extract_strided_slice %146 {offsets = [0, 0], sizes = [11, 128], strides = [1, 1]} : vector<12x128xf32> to vector<11x128xf32>
    %152 = tpu.concatenate %147, %151 in 0 : vector<1x128xf32>, vector<11x128xf32> -> vector<12x128xf32>
    %153 = arith.addf %150, %152 : vector<12x128xf32>
    %c1_i32_56 = arith.constant 1 : i32
    %154 = tpu.dynamic_rotate %153 by %c1_i32_56 dim 1 : vector<12x128xf32>, i32 -> vector<12x128xf32>
    %155 = arith.addf %153, %154 : vector<12x128xf32>
    %c127_i32_57 = arith.constant 127 : i32
    %156 = tpu.dynamic_rotate %153 by %c127_i32_57 dim 1 : vector<12x128xf32>, i32 -> vector<12x128xf32>
    %157 = arith.addf %155, %156 : vector<12x128xf32>
    %cst_58 = arith.constant 0.111111112 : f32
    %158 = vector.broadcast %cst_58 : f32 to vector<12x128xf32>
    %159 = arith.mulf %157, %158 : vector<12x128xf32>
    %160 = arith.mulf %61, %61 : vector<12x128xf32>
    %161 = arith.subf %159, %160 : vector<12x128xf32>
    %cst_59 = arith.constant 1.11111111E-8 : f32
    %162 = vector.broadcast %cst_59 : f32 to vector<12x128xf32>
    %163 = arith.addf %161, %162 : vector<12x128xf32>
    %164 = arith.mulf %129, %163 : vector<12x128xf32>
    %165 = arith.mulf %145, %145 : vector<12x128xf32>
    %166 = arith.subf %164, %165 : vector<12x128xf32>
    %167 = arith.mulf %111, %145 : vector<12x128xf32>
    %168 = arith.mulf %95, %163 : vector<12x128xf32>
    %169 = arith.subf %167, %168 : vector<12x128xf32>
    %170 = arith.mulf %95, %145 : vector<12x128xf32>
    %171 = arith.mulf %111, %129 : vector<12x128xf32>
    %172 = arith.subf %170, %171 : vector<12x128xf32>
    %173 = arith.mulf %79, %166 : vector<12x128xf32>
    %174 = arith.mulf %95, %169 : vector<12x128xf32>
    %175 = arith.addf %173, %174 : vector<12x128xf32>
    %176 = arith.mulf %111, %172 : vector<12x128xf32>
    %177 = arith.addf %175, %176 : vector<12x128xf32>
    %178 = tpu.reciprocal %177 : vector<12x128xf32> -> vector<12x128xf32>
    %179 = arith.mulf %166, %178 : vector<12x128xf32>
    %180 = arith.mulf %169, %178 : vector<12x128xf32>
    %181 = arith.mulf %172, %178 : vector<12x128xf32>
    %182 = arith.mulf %79, %163 : vector<12x128xf32>
    %183 = arith.mulf %111, %111 : vector<12x128xf32>
    %184 = arith.subf %182, %183 : vector<12x128xf32>
    %185 = arith.mulf %184, %178 : vector<12x128xf32>
    %186 = arith.mulf %111, %95 : vector<12x128xf32>
    %187 = arith.mulf %79, %145 : vector<12x128xf32>
    %188 = arith.subf %186, %187 : vector<12x128xf32>
    %189 = arith.mulf %188, %178 : vector<12x128xf32>
    %190 = arith.mulf %79, %129 : vector<12x128xf32>
    %191 = arith.mulf %95, %95 : vector<12x128xf32>
    %192 = arith.subf %190, %191 : vector<12x128xf32>
    %193 = arith.mulf %192, %178 : vector<12x128xf32>
    %cst_60 = arith.constant 0.000000e+00 : f32
    %194 = vector.broadcast %cst_60 : f32 to vector<1x128xf32>
    %195 = vector.extract_strided_slice %14 {offsets = [1, 0], sizes = [11, 128], strides = [1, 1]} : vector<12x128xf32> to vector<11x128xf32>
    %196 = tpu.concatenate %195, %194 in 0 : vector<11x128xf32>, vector<1x128xf32> -> vector<12x128xf32>
    %197 = arith.addf %14, %196 : vector<12x128xf32>
    %198 = vector.extract_strided_slice %14 {offsets = [0, 0], sizes = [11, 128], strides = [1, 1]} : vector<12x128xf32> to vector<11x128xf32>
    %199 = tpu.concatenate %194, %198 in 0 : vector<1x128xf32>, vector<11x128xf32> -> vector<12x128xf32>
    %200 = arith.addf %197, %199 : vector<12x128xf32>
    %c1_i32_61 = arith.constant 1 : i32
    %201 = tpu.dynamic_rotate %200 by %c1_i32_61 dim 1 : vector<12x128xf32>, i32 -> vector<12x128xf32>
    %202 = arith.addf %200, %201 : vector<12x128xf32>
    %c127_i32_62 = arith.constant 127 : i32
    %203 = tpu.dynamic_rotate %200 by %c127_i32_62 dim 1 : vector<12x128xf32>, i32 -> vector<12x128xf32>
    %204 = arith.addf %202, %203 : vector<12x128xf32>
    %205 = vector.extract_strided_slice %204 {offsets = [2, 0], sizes = [8, 128], strides = [1, 1]} : vector<12x128xf32> to vector<8x128xf32>
    %cst_63 = arith.constant 1.280000e+02 : f32
    %206 = vector.broadcast %cst_63 : f32 to vector<8x128xf32>
    %207 = arith.cmpf one, %16, %206 : vector<8x128xf32>
    %cst_64 = arith.constant 1.000000e+02 : f32
    %cst_65 = arith.constant 0.000000e+00 : f32
    %208 = vector.broadcast %cst_64 : f32 to vector<8x128xf32>
    %209 = vector.broadcast %cst_65 : f32 to vector<8x128xf32>
    %210 = arith.select %207, %208, %209 : vector<8x128xi1>, vector<8x128xf32>
    %211 = vector.extract_strided_slice %18 {offsets = [2, 0], sizes = [8, 128], strides = [1, 1]} : vector<12x128xf32> to vector<8x128xf32>
    %212 = vector.extract_strided_slice %20 {offsets = [2, 0], sizes = [8, 128], strides = [1, 1]} : vector<12x128xf32> to vector<8x128xf32>
    %213 = vector.extract_strided_slice %22 {offsets = [2, 0], sizes = [8, 128], strides = [1, 1]} : vector<12x128xf32> to vector<8x128xf32>
    %cst_66 = arith.constant 0.000000e+00 : f32
    %214 = vector.broadcast %cst_66 : f32 to vector<8x128xf32>
    %215 = vector.extract_strided_slice %9 {offsets = [0, 0, 0], sizes = [1, 12, 128], strides = [1, 1, 1]} : vector<3x12x128xf32> to vector<1x12x128xf32>
    %216 = vector.shape_cast %215 : vector<1x12x128xf32> to vector<12x128xf32>
    %cst_67 = arith.constant 0.000000e+00 : f32
    %217 = vector.broadcast %cst_67 : f32 to vector<1x128xf32>
    %218 = vector.extract_strided_slice %216 {offsets = [1, 0], sizes = [11, 128], strides = [1, 1]} : vector<12x128xf32> to vector<11x128xf32>
    %219 = tpu.concatenate %218, %217 in 0 : vector<11x128xf32>, vector<1x128xf32> -> vector<12x128xf32>
    %220 = arith.addf %216, %219 : vector<12x128xf32>
    %221 = vector.extract_strided_slice %216 {offsets = [0, 0], sizes = [11, 128], strides = [1, 1]} : vector<12x128xf32> to vector<11x128xf32>
    %222 = tpu.concatenate %217, %221 in 0 : vector<1x128xf32>, vector<11x128xf32> -> vector<12x128xf32>
    %223 = arith.addf %220, %222 : vector<12x128xf32>
    %c1_i32_68 = arith.constant 1 : i32
    %224 = tpu.dynamic_rotate %223 by %c1_i32_68 dim 1 : vector<12x128xf32>, i32 -> vector<12x128xf32>
    %225 = arith.addf %223, %224 : vector<12x128xf32>
    %c127_i32_69 = arith.constant 127 : i32
    %226 = tpu.dynamic_rotate %223 by %c127_i32_69 dim 1 : vector<12x128xf32>, i32 -> vector<12x128xf32>
    %227 = arith.addf %225, %226 : vector<12x128xf32>
    %228 = arith.mulf %18, %216 : vector<12x128xf32>
    %cst_70 = arith.constant 0.000000e+00 : f32
    %229 = vector.broadcast %cst_70 : f32 to vector<1x128xf32>
    %230 = vector.extract_strided_slice %228 {offsets = [1, 0], sizes = [11, 128], strides = [1, 1]} : vector<12x128xf32> to vector<11x128xf32>
    %231 = tpu.concatenate %230, %229 in 0 : vector<11x128xf32>, vector<1x128xf32> -> vector<12x128xf32>
    %232 = arith.addf %228, %231 : vector<12x128xf32>
    %233 = vector.extract_strided_slice %228 {offsets = [0, 0], sizes = [11, 128], strides = [1, 1]} : vector<12x128xf32> to vector<11x128xf32>
    %234 = tpu.concatenate %229, %233 in 0 : vector<1x128xf32>, vector<11x128xf32> -> vector<12x128xf32>
    %235 = arith.addf %232, %234 : vector<12x128xf32>
    %c1_i32_71 = arith.constant 1 : i32
    %236 = tpu.dynamic_rotate %235 by %c1_i32_71 dim 1 : vector<12x128xf32>, i32 -> vector<12x128xf32>
    %237 = arith.addf %235, %236 : vector<12x128xf32>
    %c127_i32_72 = arith.constant 127 : i32
    %238 = tpu.dynamic_rotate %235 by %c127_i32_72 dim 1 : vector<12x128xf32>, i32 -> vector<12x128xf32>
    %239 = arith.addf %237, %238 : vector<12x128xf32>
    %240 = arith.mulf %35, %227 : vector<12x128xf32>
    %241 = arith.subf %239, %240 : vector<12x128xf32>
    %242 = arith.mulf %20, %216 : vector<12x128xf32>
    %cst_73 = arith.constant 0.000000e+00 : f32
    %243 = vector.broadcast %cst_73 : f32 to vector<1x128xf32>
    %244 = vector.extract_strided_slice %242 {offsets = [1, 0], sizes = [11, 128], strides = [1, 1]} : vector<12x128xf32> to vector<11x128xf32>
    %245 = tpu.concatenate %244, %243 in 0 : vector<11x128xf32>, vector<1x128xf32> -> vector<12x128xf32>
    %246 = arith.addf %242, %245 : vector<12x128xf32>
    %247 = vector.extract_strided_slice %242 {offsets = [0, 0], sizes = [11, 128], strides = [1, 1]} : vector<12x128xf32> to vector<11x128xf32>
    %248 = tpu.concatenate %243, %247 in 0 : vector<1x128xf32>, vector<11x128xf32> -> vector<12x128xf32>
    %249 = arith.addf %246, %248 : vector<12x128xf32>
    %c1_i32_74 = arith.constant 1 : i32
    %250 = tpu.dynamic_rotate %249 by %c1_i32_74 dim 1 : vector<12x128xf32>, i32 -> vector<12x128xf32>
    %251 = arith.addf %249, %250 : vector<12x128xf32>
    %c127_i32_75 = arith.constant 127 : i32
    %252 = tpu.dynamic_rotate %249 by %c127_i32_75 dim 1 : vector<12x128xf32>, i32 -> vector<12x128xf32>
    %253 = arith.addf %251, %252 : vector<12x128xf32>
    %254 = arith.mulf %48, %227 : vector<12x128xf32>
    %255 = arith.subf %253, %254 : vector<12x128xf32>
    %256 = arith.mulf %22, %216 : vector<12x128xf32>
    %cst_76 = arith.constant 0.000000e+00 : f32
    %257 = vector.broadcast %cst_76 : f32 to vector<1x128xf32>
    %258 = vector.extract_strided_slice %256 {offsets = [1, 0], sizes = [11, 128], strides = [1, 1]} : vector<12x128xf32> to vector<11x128xf32>
    %259 = tpu.concatenate %258, %257 in 0 : vector<11x128xf32>, vector<1x128xf32> -> vector<12x128xf32>
    %260 = arith.addf %256, %259 : vector<12x128xf32>
    %261 = vector.extract_strided_slice %256 {offsets = [0, 0], sizes = [11, 128], strides = [1, 1]} : vector<12x128xf32> to vector<11x128xf32>
    %262 = tpu.concatenate %257, %261 in 0 : vector<1x128xf32>, vector<11x128xf32> -> vector<12x128xf32>
    %263 = arith.addf %260, %262 : vector<12x128xf32>
    %c1_i32_77 = arith.constant 1 : i32
    %264 = tpu.dynamic_rotate %263 by %c1_i32_77 dim 1 : vector<12x128xf32>, i32 -> vector<12x128xf32>
    %265 = arith.addf %263, %264 : vector<12x128xf32>
    %c127_i32_78 = arith.constant 127 : i32
    %266 = tpu.dynamic_rotate %263 by %c127_i32_78 dim 1 : vector<12x128xf32>, i32 -> vector<12x128xf32>
    %267 = arith.addf %265, %266 : vector<12x128xf32>
    %268 = arith.mulf %61, %227 : vector<12x128xf32>
    %269 = arith.subf %267, %268 : vector<12x128xf32>
    %270 = arith.mulf %179, %241 : vector<12x128xf32>
    %271 = arith.mulf %180, %255 : vector<12x128xf32>
    %272 = arith.addf %270, %271 : vector<12x128xf32>
    %273 = arith.mulf %181, %269 : vector<12x128xf32>
    %274 = arith.addf %272, %273 : vector<12x128xf32>
    %275 = arith.mulf %180, %241 : vector<12x128xf32>
    %276 = arith.mulf %185, %255 : vector<12x128xf32>
    %277 = arith.addf %275, %276 : vector<12x128xf32>
    %278 = arith.mulf %189, %269 : vector<12x128xf32>
    %279 = arith.addf %277, %278 : vector<12x128xf32>
    %280 = arith.mulf %181, %241 : vector<12x128xf32>
    %281 = arith.mulf %189, %255 : vector<12x128xf32>
    %282 = arith.addf %280, %281 : vector<12x128xf32>
    %283 = arith.mulf %193, %269 : vector<12x128xf32>
    %284 = arith.addf %282, %283 : vector<12x128xf32>
    %285 = arith.mulf %35, %274 : vector<12x128xf32>
    %286 = arith.mulf %48, %279 : vector<12x128xf32>
    %287 = arith.addf %285, %286 : vector<12x128xf32>
    %288 = arith.mulf %61, %284 : vector<12x128xf32>
    %289 = arith.addf %287, %288 : vector<12x128xf32>
    %290 = arith.subf %227, %289 : vector<12x128xf32>
    %291 = arith.mulf %14, %290 : vector<12x128xf32>
    %292 = arith.mulf %14, %274 : vector<12x128xf32>
    %293 = arith.mulf %14, %279 : vector<12x128xf32>
    %294 = arith.mulf %14, %284 : vector<12x128xf32>
    %cst_79 = arith.constant 0.000000e+00 : f32
    %295 = vector.broadcast %cst_79 : f32 to vector<1x128xf32>
    %296 = vector.extract_strided_slice %291 {offsets = [1, 0], sizes = [11, 128], strides = [1, 1]} : vector<12x128xf32> to vector<11x128xf32>
    %297 = tpu.concatenate %296, %295 in 0 : vector<11x128xf32>, vector<1x128xf32> -> vector<12x128xf32>
    %298 = arith.addf %291, %297 : vector<12x128xf32>
    %299 = vector.extract_strided_slice %291 {offsets = [0, 0], sizes = [11, 128], strides = [1, 1]} : vector<12x128xf32> to vector<11x128xf32>
    %300 = tpu.concatenate %295, %299 in 0 : vector<1x128xf32>, vector<11x128xf32> -> vector<12x128xf32>
    %301 = arith.addf %298, %300 : vector<12x128xf32>
    %c1_i32_80 = arith.constant 1 : i32
    %302 = tpu.dynamic_rotate %301 by %c1_i32_80 dim 1 : vector<12x128xf32>, i32 -> vector<12x128xf32>
    %303 = arith.addf %301, %302 : vector<12x128xf32>
    %c127_i32_81 = arith.constant 127 : i32
    %304 = tpu.dynamic_rotate %301 by %c127_i32_81 dim 1 : vector<12x128xf32>, i32 -> vector<12x128xf32>
    %305 = arith.addf %303, %304 : vector<12x128xf32>
    %306 = vector.extract_strided_slice %305 {offsets = [2, 0], sizes = [8, 128], strides = [1, 1]} : vector<12x128xf32> to vector<8x128xf32>
    %cst_82 = arith.constant 0.000000e+00 : f32
    %307 = vector.broadcast %cst_82 : f32 to vector<1x128xf32>
    %308 = vector.extract_strided_slice %292 {offsets = [1, 0], sizes = [11, 128], strides = [1, 1]} : vector<12x128xf32> to vector<11x128xf32>
    %309 = tpu.concatenate %308, %307 in 0 : vector<11x128xf32>, vector<1x128xf32> -> vector<12x128xf32>
    %310 = arith.addf %292, %309 : vector<12x128xf32>
    %311 = vector.extract_strided_slice %292 {offsets = [0, 0], sizes = [11, 128], strides = [1, 1]} : vector<12x128xf32> to vector<11x128xf32>
    %312 = tpu.concatenate %307, %311 in 0 : vector<1x128xf32>, vector<11x128xf32> -> vector<12x128xf32>
    %313 = arith.addf %310, %312 : vector<12x128xf32>
    %c1_i32_83 = arith.constant 1 : i32
    %314 = tpu.dynamic_rotate %313 by %c1_i32_83 dim 1 : vector<12x128xf32>, i32 -> vector<12x128xf32>
    %315 = arith.addf %313, %314 : vector<12x128xf32>
    %c127_i32_84 = arith.constant 127 : i32
    %316 = tpu.dynamic_rotate %313 by %c127_i32_84 dim 1 : vector<12x128xf32>, i32 -> vector<12x128xf32>
    %317 = arith.addf %315, %316 : vector<12x128xf32>
    %318 = vector.extract_strided_slice %317 {offsets = [2, 0], sizes = [8, 128], strides = [1, 1]} : vector<12x128xf32> to vector<8x128xf32>
    %cst_85 = arith.constant 0.000000e+00 : f32
    %319 = vector.broadcast %cst_85 : f32 to vector<1x128xf32>
    %320 = vector.extract_strided_slice %293 {offsets = [1, 0], sizes = [11, 128], strides = [1, 1]} : vector<12x128xf32> to vector<11x128xf32>
    %321 = tpu.concatenate %320, %319 in 0 : vector<11x128xf32>, vector<1x128xf32> -> vector<12x128xf32>
    %322 = arith.addf %293, %321 : vector<12x128xf32>
    %323 = vector.extract_strided_slice %293 {offsets = [0, 0], sizes = [11, 128], strides = [1, 1]} : vector<12x128xf32> to vector<11x128xf32>
    %324 = tpu.concatenate %319, %323 in 0 : vector<1x128xf32>, vector<11x128xf32> -> vector<12x128xf32>
    %325 = arith.addf %322, %324 : vector<12x128xf32>
    %c1_i32_86 = arith.constant 1 : i32
    %326 = tpu.dynamic_rotate %325 by %c1_i32_86 dim 1 : vector<12x128xf32>, i32 -> vector<12x128xf32>
    %327 = arith.addf %325, %326 : vector<12x128xf32>
    %c127_i32_87 = arith.constant 127 : i32
    %328 = tpu.dynamic_rotate %325 by %c127_i32_87 dim 1 : vector<12x128xf32>, i32 -> vector<12x128xf32>
    %329 = arith.addf %327, %328 : vector<12x128xf32>
    %330 = vector.extract_strided_slice %329 {offsets = [2, 0], sizes = [8, 128], strides = [1, 1]} : vector<12x128xf32> to vector<8x128xf32>
    %cst_88 = arith.constant 0.000000e+00 : f32
    %331 = vector.broadcast %cst_88 : f32 to vector<1x128xf32>
    %332 = vector.extract_strided_slice %294 {offsets = [1, 0], sizes = [11, 128], strides = [1, 1]} : vector<12x128xf32> to vector<11x128xf32>
    %333 = tpu.concatenate %332, %331 in 0 : vector<11x128xf32>, vector<1x128xf32> -> vector<12x128xf32>
    %334 = arith.addf %294, %333 : vector<12x128xf32>
    %335 = vector.extract_strided_slice %294 {offsets = [0, 0], sizes = [11, 128], strides = [1, 1]} : vector<12x128xf32> to vector<11x128xf32>
    %336 = tpu.concatenate %331, %335 in 0 : vector<1x128xf32>, vector<11x128xf32> -> vector<12x128xf32>
    %337 = arith.addf %334, %336 : vector<12x128xf32>
    %c1_i32_89 = arith.constant 1 : i32
    %338 = tpu.dynamic_rotate %337 by %c1_i32_89 dim 1 : vector<12x128xf32>, i32 -> vector<12x128xf32>
    %339 = arith.addf %337, %338 : vector<12x128xf32>
    %c127_i32_90 = arith.constant 127 : i32
    %340 = tpu.dynamic_rotate %337 by %c127_i32_90 dim 1 : vector<12x128xf32>, i32 -> vector<12x128xf32>
    %341 = arith.addf %339, %340 : vector<12x128xf32>
    %342 = vector.extract_strided_slice %341 {offsets = [2, 0], sizes = [8, 128], strides = [1, 1]} : vector<12x128xf32> to vector<8x128xf32>
    %343 = vector.extract_strided_slice %216 {offsets = [2, 0], sizes = [8, 128], strides = [1, 1]} : vector<12x128xf32> to vector<8x128xf32>
    %344 = arith.mulf %343, %205 : vector<8x128xf32>
    %345 = arith.mulf %211, %318 : vector<8x128xf32>
    %346 = arith.addf %306, %345 : vector<8x128xf32>
    %347 = arith.mulf %212, %330 : vector<8x128xf32>
    %348 = arith.addf %346, %347 : vector<8x128xf32>
    %349 = arith.mulf %213, %342 : vector<8x128xf32>
    %350 = arith.addf %348, %349 : vector<8x128xf32>
    %cst_91 = arith.constant 0.111111112 : f32
    %351 = vector.broadcast %cst_91 : f32 to vector<8x128xf32>
    %352 = arith.mulf %351, %350 : vector<8x128xf32>
    %353 = arith.subf %344, %352 : vector<8x128xf32>
    %cst_92 = arith.constant 1.000000e+00 : f32
    %354 = vector.broadcast %cst_92 : f32 to vector<8x128xf32>
    %355 = arith.cmpf oeq, %16, %354 : vector<8x128xf32>
    %cst_93 = arith.constant 1.000000e+02 : f32
    %cst_94 = arith.constant 0.000000e+00 : f32
    %356 = vector.broadcast %cst_93 : f32 to vector<8x128xf32>
    %357 = vector.broadcast %cst_94 : f32 to vector<8x128xf32>
    %358 = arith.select %355, %356, %357 : vector<8x128xi1>, vector<8x128xf32>
    %359 = arith.mulf %210, %343 : vector<8x128xf32>
    %360 = arith.addf %353, %359 : vector<8x128xf32>
    %361 = arith.subf %360, %358 : vector<8x128xf32>
    %362 = arith.mulf %361, %361 : vector<8x128xf32>
    %363 = arith.addf %214, %362 : vector<8x128xf32>
    %364 = vector.extract_strided_slice %9 {offsets = [1, 0, 0], sizes = [1, 12, 128], strides = [1, 1, 1]} : vector<3x12x128xf32> to vector<1x12x128xf32>
    %365 = vector.shape_cast %364 : vector<1x12x128xf32> to vector<12x128xf32>
    %cst_95 = arith.constant 0.000000e+00 : f32
    %366 = vector.broadcast %cst_95 : f32 to vector<1x128xf32>
    %367 = vector.extract_strided_slice %365 {offsets = [1, 0], sizes = [11, 128], strides = [1, 1]} : vector<12x128xf32> to vector<11x128xf32>
    %368 = tpu.concatenate %367, %366 in 0 : vector<11x128xf32>, vector<1x128xf32> -> vector<12x128xf32>
    %369 = arith.addf %365, %368 : vector<12x128xf32>
    %370 = vector.extract_strided_slice %365 {offsets = [0, 0], sizes = [11, 128], strides = [1, 1]} : vector<12x128xf32> to vector<11x128xf32>
    %371 = tpu.concatenate %366, %370 in 0 : vector<1x128xf32>, vector<11x128xf32> -> vector<12x128xf32>
    %372 = arith.addf %369, %371 : vector<12x128xf32>
    %c1_i32_96 = arith.constant 1 : i32
    %373 = tpu.dynamic_rotate %372 by %c1_i32_96 dim 1 : vector<12x128xf32>, i32 -> vector<12x128xf32>
    %374 = arith.addf %372, %373 : vector<12x128xf32>
    %c127_i32_97 = arith.constant 127 : i32
    %375 = tpu.dynamic_rotate %372 by %c127_i32_97 dim 1 : vector<12x128xf32>, i32 -> vector<12x128xf32>
    %376 = arith.addf %374, %375 : vector<12x128xf32>
    %377 = arith.mulf %18, %365 : vector<12x128xf32>
    %cst_98 = arith.constant 0.000000e+00 : f32
    %378 = vector.broadcast %cst_98 : f32 to vector<1x128xf32>
    %379 = vector.extract_strided_slice %377 {offsets = [1, 0], sizes = [11, 128], strides = [1, 1]} : vector<12x128xf32> to vector<11x128xf32>
    %380 = tpu.concatenate %379, %378 in 0 : vector<11x128xf32>, vector<1x128xf32> -> vector<12x128xf32>
    %381 = arith.addf %377, %380 : vector<12x128xf32>
    %382 = vector.extract_strided_slice %377 {offsets = [0, 0], sizes = [11, 128], strides = [1, 1]} : vector<12x128xf32> to vector<11x128xf32>
    %383 = tpu.concatenate %378, %382 in 0 : vector<1x128xf32>, vector<11x128xf32> -> vector<12x128xf32>
    %384 = arith.addf %381, %383 : vector<12x128xf32>
    %c1_i32_99 = arith.constant 1 : i32
    %385 = tpu.dynamic_rotate %384 by %c1_i32_99 dim 1 : vector<12x128xf32>, i32 -> vector<12x128xf32>
    %386 = arith.addf %384, %385 : vector<12x128xf32>
    %c127_i32_100 = arith.constant 127 : i32
    %387 = tpu.dynamic_rotate %384 by %c127_i32_100 dim 1 : vector<12x128xf32>, i32 -> vector<12x128xf32>
    %388 = arith.addf %386, %387 : vector<12x128xf32>
    %389 = arith.mulf %35, %376 : vector<12x128xf32>
    %390 = arith.subf %388, %389 : vector<12x128xf32>
    %391 = arith.mulf %20, %365 : vector<12x128xf32>
    %cst_101 = arith.constant 0.000000e+00 : f32
    %392 = vector.broadcast %cst_101 : f32 to vector<1x128xf32>
    %393 = vector.extract_strided_slice %391 {offsets = [1, 0], sizes = [11, 128], strides = [1, 1]} : vector<12x128xf32> to vector<11x128xf32>
    %394 = tpu.concatenate %393, %392 in 0 : vector<11x128xf32>, vector<1x128xf32> -> vector<12x128xf32>
    %395 = arith.addf %391, %394 : vector<12x128xf32>
    %396 = vector.extract_strided_slice %391 {offsets = [0, 0], sizes = [11, 128], strides = [1, 1]} : vector<12x128xf32> to vector<11x128xf32>
    %397 = tpu.concatenate %392, %396 in 0 : vector<1x128xf32>, vector<11x128xf32> -> vector<12x128xf32>
    %398 = arith.addf %395, %397 : vector<12x128xf32>
    %c1_i32_102 = arith.constant 1 : i32
    %399 = tpu.dynamic_rotate %398 by %c1_i32_102 dim 1 : vector<12x128xf32>, i32 -> vector<12x128xf32>
    %400 = arith.addf %398, %399 : vector<12x128xf32>
    %c127_i32_103 = arith.constant 127 : i32
    %401 = tpu.dynamic_rotate %398 by %c127_i32_103 dim 1 : vector<12x128xf32>, i32 -> vector<12x128xf32>
    %402 = arith.addf %400, %401 : vector<12x128xf32>
    %403 = arith.mulf %48, %376 : vector<12x128xf32>
    %404 = arith.subf %402, %403 : vector<12x128xf32>
    %405 = arith.mulf %22, %365 : vector<12x128xf32>
    %cst_104 = arith.constant 0.000000e+00 : f32
    %406 = vector.broadcast %cst_104 : f32 to vector<1x128xf32>
    %407 = vector.extract_strided_slice %405 {offsets = [1, 0], sizes = [11, 128], strides = [1, 1]} : vector<12x128xf32> to vector<11x128xf32>
    %408 = tpu.concatenate %407, %406 in 0 : vector<11x128xf32>, vector<1x128xf32> -> vector<12x128xf32>
    %409 = arith.addf %405, %408 : vector<12x128xf32>
    %410 = vector.extract_strided_slice %405 {offsets = [0, 0], sizes = [11, 128], strides = [1, 1]} : vector<12x128xf32> to vector<11x128xf32>
    %411 = tpu.concatenate %406, %410 in 0 : vector<1x128xf32>, vector<11x128xf32> -> vector<12x128xf32>
    %412 = arith.addf %409, %411 : vector<12x128xf32>
    %c1_i32_105 = arith.constant 1 : i32
    %413 = tpu.dynamic_rotate %412 by %c1_i32_105 dim 1 : vector<12x128xf32>, i32 -> vector<12x128xf32>
    %414 = arith.addf %412, %413 : vector<12x128xf32>
    %c127_i32_106 = arith.constant 127 : i32
    %415 = tpu.dynamic_rotate %412 by %c127_i32_106 dim 1 : vector<12x128xf32>, i32 -> vector<12x128xf32>
    %416 = arith.addf %414, %415 : vector<12x128xf32>
    %417 = arith.mulf %61, %376 : vector<12x128xf32>
    %418 = arith.subf %416, %417 : vector<12x128xf32>
    %419 = arith.mulf %179, %390 : vector<12x128xf32>
    %420 = arith.mulf %180, %404 : vector<12x128xf32>
    %421 = arith.addf %419, %420 : vector<12x128xf32>
    %422 = arith.mulf %181, %418 : vector<12x128xf32>
    %423 = arith.addf %421, %422 : vector<12x128xf32>
    %424 = arith.mulf %180, %390 : vector<12x128xf32>
    %425 = arith.mulf %185, %404 : vector<12x128xf32>
    %426 = arith.addf %424, %425 : vector<12x128xf32>
    %427 = arith.mulf %189, %418 : vector<12x128xf32>
    %428 = arith.addf %426, %427 : vector<12x128xf32>
    %429 = arith.mulf %181, %390 : vector<12x128xf32>
    %430 = arith.mulf %189, %404 : vector<12x128xf32>
    %431 = arith.addf %429, %430 : vector<12x128xf32>
    %432 = arith.mulf %193, %418 : vector<12x128xf32>
    %433 = arith.addf %431, %432 : vector<12x128xf32>
    %434 = arith.mulf %35, %423 : vector<12x128xf32>
    %435 = arith.mulf %48, %428 : vector<12x128xf32>
    %436 = arith.addf %434, %435 : vector<12x128xf32>
    %437 = arith.mulf %61, %433 : vector<12x128xf32>
    %438 = arith.addf %436, %437 : vector<12x128xf32>
    %439 = arith.subf %376, %438 : vector<12x128xf32>
    %440 = arith.mulf %14, %439 : vector<12x128xf32>
    %441 = arith.mulf %14, %423 : vector<12x128xf32>
    %442 = arith.mulf %14, %428 : vector<12x128xf32>
    %443 = arith.mulf %14, %433 : vector<12x128xf32>
    %cst_107 = arith.constant 0.000000e+00 : f32
    %444 = vector.broadcast %cst_107 : f32 to vector<1x128xf32>
    %445 = vector.extract_strided_slice %440 {offsets = [1, 0], sizes = [11, 128], strides = [1, 1]} : vector<12x128xf32> to vector<11x128xf32>
    %446 = tpu.concatenate %445, %444 in 0 : vector<11x128xf32>, vector<1x128xf32> -> vector<12x128xf32>
    %447 = arith.addf %440, %446 : vector<12x128xf32>
    %448 = vector.extract_strided_slice %440 {offsets = [0, 0], sizes = [11, 128], strides = [1, 1]} : vector<12x128xf32> to vector<11x128xf32>
    %449 = tpu.concatenate %444, %448 in 0 : vector<1x128xf32>, vector<11x128xf32> -> vector<12x128xf32>
    %450 = arith.addf %447, %449 : vector<12x128xf32>
    %c1_i32_108 = arith.constant 1 : i32
    %451 = tpu.dynamic_rotate %450 by %c1_i32_108 dim 1 : vector<12x128xf32>, i32 -> vector<12x128xf32>
    %452 = arith.addf %450, %451 : vector<12x128xf32>
    %c127_i32_109 = arith.constant 127 : i32
    %453 = tpu.dynamic_rotate %450 by %c127_i32_109 dim 1 : vector<12x128xf32>, i32 -> vector<12x128xf32>
    %454 = arith.addf %452, %453 : vector<12x128xf32>
    %455 = vector.extract_strided_slice %454 {offsets = [2, 0], sizes = [8, 128], strides = [1, 1]} : vector<12x128xf32> to vector<8x128xf32>
    %cst_110 = arith.constant 0.000000e+00 : f32
    %456 = vector.broadcast %cst_110 : f32 to vector<1x128xf32>
    %457 = vector.extract_strided_slice %441 {offsets = [1, 0], sizes = [11, 128], strides = [1, 1]} : vector<12x128xf32> to vector<11x128xf32>
    %458 = tpu.concatenate %457, %456 in 0 : vector<11x128xf32>, vector<1x128xf32> -> vector<12x128xf32>
    %459 = arith.addf %441, %458 : vector<12x128xf32>
    %460 = vector.extract_strided_slice %441 {offsets = [0, 0], sizes = [11, 128], strides = [1, 1]} : vector<12x128xf32> to vector<11x128xf32>
    %461 = tpu.concatenate %456, %460 in 0 : vector<1x128xf32>, vector<11x128xf32> -> vector<12x128xf32>
    %462 = arith.addf %459, %461 : vector<12x128xf32>
    %c1_i32_111 = arith.constant 1 : i32
    %463 = tpu.dynamic_rotate %462 by %c1_i32_111 dim 1 : vector<12x128xf32>, i32 -> vector<12x128xf32>
    %464 = arith.addf %462, %463 : vector<12x128xf32>
    %c127_i32_112 = arith.constant 127 : i32
    %465 = tpu.dynamic_rotate %462 by %c127_i32_112 dim 1 : vector<12x128xf32>, i32 -> vector<12x128xf32>
    %466 = arith.addf %464, %465 : vector<12x128xf32>
    %467 = vector.extract_strided_slice %466 {offsets = [2, 0], sizes = [8, 128], strides = [1, 1]} : vector<12x128xf32> to vector<8x128xf32>
    %cst_113 = arith.constant 0.000000e+00 : f32
    %468 = vector.broadcast %cst_113 : f32 to vector<1x128xf32>
    %469 = vector.extract_strided_slice %442 {offsets = [1, 0], sizes = [11, 128], strides = [1, 1]} : vector<12x128xf32> to vector<11x128xf32>
    %470 = tpu.concatenate %469, %468 in 0 : vector<11x128xf32>, vector<1x128xf32> -> vector<12x128xf32>
    %471 = arith.addf %442, %470 : vector<12x128xf32>
    %472 = vector.extract_strided_slice %442 {offsets = [0, 0], sizes = [11, 128], strides = [1, 1]} : vector<12x128xf32> to vector<11x128xf32>
    %473 = tpu.concatenate %468, %472 in 0 : vector<1x128xf32>, vector<11x128xf32> -> vector<12x128xf32>
    %474 = arith.addf %471, %473 : vector<12x128xf32>
    %c1_i32_114 = arith.constant 1 : i32
    %475 = tpu.dynamic_rotate %474 by %c1_i32_114 dim 1 : vector<12x128xf32>, i32 -> vector<12x128xf32>
    %476 = arith.addf %474, %475 : vector<12x128xf32>
    %c127_i32_115 = arith.constant 127 : i32
    %477 = tpu.dynamic_rotate %474 by %c127_i32_115 dim 1 : vector<12x128xf32>, i32 -> vector<12x128xf32>
    %478 = arith.addf %476, %477 : vector<12x128xf32>
    %479 = vector.extract_strided_slice %478 {offsets = [2, 0], sizes = [8, 128], strides = [1, 1]} : vector<12x128xf32> to vector<8x128xf32>
    %cst_116 = arith.constant 0.000000e+00 : f32
    %480 = vector.broadcast %cst_116 : f32 to vector<1x128xf32>
    %481 = vector.extract_strided_slice %443 {offsets = [1, 0], sizes = [11, 128], strides = [1, 1]} : vector<12x128xf32> to vector<11x128xf32>
    %482 = tpu.concatenate %481, %480 in 0 : vector<11x128xf32>, vector<1x128xf32> -> vector<12x128xf32>
    %483 = arith.addf %443, %482 : vector<12x128xf32>
    %484 = vector.extract_strided_slice %443 {offsets = [0, 0], sizes = [11, 128], strides = [1, 1]} : vector<12x128xf32> to vector<11x128xf32>
    %485 = tpu.concatenate %480, %484 in 0 : vector<1x128xf32>, vector<11x128xf32> -> vector<12x128xf32>
    %486 = arith.addf %483, %485 : vector<12x128xf32>
    %c1_i32_117 = arith.constant 1 : i32
    %487 = tpu.dynamic_rotate %486 by %c1_i32_117 dim 1 : vector<12x128xf32>, i32 -> vector<12x128xf32>
    %488 = arith.addf %486, %487 : vector<12x128xf32>
    %c127_i32_118 = arith.constant 127 : i32
    %489 = tpu.dynamic_rotate %486 by %c127_i32_118 dim 1 : vector<12x128xf32>, i32 -> vector<12x128xf32>
    %490 = arith.addf %488, %489 : vector<12x128xf32>
    %491 = vector.extract_strided_slice %490 {offsets = [2, 0], sizes = [8, 128], strides = [1, 1]} : vector<12x128xf32> to vector<8x128xf32>
    %492 = vector.extract_strided_slice %365 {offsets = [2, 0], sizes = [8, 128], strides = [1, 1]} : vector<12x128xf32> to vector<8x128xf32>
    %493 = arith.mulf %492, %205 : vector<8x128xf32>
    %494 = arith.mulf %211, %467 : vector<8x128xf32>
    %495 = arith.addf %455, %494 : vector<8x128xf32>
    %496 = arith.mulf %212, %479 : vector<8x128xf32>
    %497 = arith.addf %495, %496 : vector<8x128xf32>
    %498 = arith.mulf %213, %491 : vector<8x128xf32>
    %499 = arith.addf %497, %498 : vector<8x128xf32>
    %cst_119 = arith.constant 0.111111112 : f32
    %500 = vector.broadcast %cst_119 : f32 to vector<8x128xf32>
    %501 = arith.mulf %500, %499 : vector<8x128xf32>
    %502 = arith.subf %493, %501 : vector<8x128xf32>
    %cst_120 = arith.constant 2.000000e+00 : f32
    %503 = vector.broadcast %cst_120 : f32 to vector<8x128xf32>
    %504 = arith.cmpf oeq, %16, %503 : vector<8x128xf32>
    %cst_121 = arith.constant 1.000000e+02 : f32
    %cst_122 = arith.constant 0.000000e+00 : f32
    %505 = vector.broadcast %cst_121 : f32 to vector<8x128xf32>
    %506 = vector.broadcast %cst_122 : f32 to vector<8x128xf32>
    %507 = arith.select %504, %505, %506 : vector<8x128xi1>, vector<8x128xf32>
    %508 = arith.mulf %210, %492 : vector<8x128xf32>
    %509 = arith.addf %502, %508 : vector<8x128xf32>
    %510 = arith.subf %509, %507 : vector<8x128xf32>
    %511 = arith.mulf %510, %510 : vector<8x128xf32>
    %512 = arith.addf %363, %511 : vector<8x128xf32>
    %513 = vector.extract_strided_slice %9 {offsets = [2, 0, 0], sizes = [1, 12, 128], strides = [1, 1, 1]} : vector<3x12x128xf32> to vector<1x12x128xf32>
    %514 = vector.shape_cast %513 : vector<1x12x128xf32> to vector<12x128xf32>
    %cst_123 = arith.constant 0.000000e+00 : f32
    %515 = vector.broadcast %cst_123 : f32 to vector<1x128xf32>
    %516 = vector.extract_strided_slice %514 {offsets = [1, 0], sizes = [11, 128], strides = [1, 1]} : vector<12x128xf32> to vector<11x128xf32>
    %517 = tpu.concatenate %516, %515 in 0 : vector<11x128xf32>, vector<1x128xf32> -> vector<12x128xf32>
    %518 = arith.addf %514, %517 : vector<12x128xf32>
    %519 = vector.extract_strided_slice %514 {offsets = [0, 0], sizes = [11, 128], strides = [1, 1]} : vector<12x128xf32> to vector<11x128xf32>
    %520 = tpu.concatenate %515, %519 in 0 : vector<1x128xf32>, vector<11x128xf32> -> vector<12x128xf32>
    %521 = arith.addf %518, %520 : vector<12x128xf32>
    %c1_i32_124 = arith.constant 1 : i32
    %522 = tpu.dynamic_rotate %521 by %c1_i32_124 dim 1 : vector<12x128xf32>, i32 -> vector<12x128xf32>
    %523 = arith.addf %521, %522 : vector<12x128xf32>
    %c127_i32_125 = arith.constant 127 : i32
    %524 = tpu.dynamic_rotate %521 by %c127_i32_125 dim 1 : vector<12x128xf32>, i32 -> vector<12x128xf32>
    %525 = arith.addf %523, %524 : vector<12x128xf32>
    %526 = arith.mulf %18, %514 : vector<12x128xf32>
    %cst_126 = arith.constant 0.000000e+00 : f32
    %527 = vector.broadcast %cst_126 : f32 to vector<1x128xf32>
    %528 = vector.extract_strided_slice %526 {offsets = [1, 0], sizes = [11, 128], strides = [1, 1]} : vector<12x128xf32> to vector<11x128xf32>
    %529 = tpu.concatenate %528, %527 in 0 : vector<11x128xf32>, vector<1x128xf32> -> vector<12x128xf32>
    %530 = arith.addf %526, %529 : vector<12x128xf32>
    %531 = vector.extract_strided_slice %526 {offsets = [0, 0], sizes = [11, 128], strides = [1, 1]} : vector<12x128xf32> to vector<11x128xf32>
    %532 = tpu.concatenate %527, %531 in 0 : vector<1x128xf32>, vector<11x128xf32> -> vector<12x128xf32>
    %533 = arith.addf %530, %532 : vector<12x128xf32>
    %c1_i32_127 = arith.constant 1 : i32
    %534 = tpu.dynamic_rotate %533 by %c1_i32_127 dim 1 : vector<12x128xf32>, i32 -> vector<12x128xf32>
    %535 = arith.addf %533, %534 : vector<12x128xf32>
    %c127_i32_128 = arith.constant 127 : i32
    %536 = tpu.dynamic_rotate %533 by %c127_i32_128 dim 1 : vector<12x128xf32>, i32 -> vector<12x128xf32>
    %537 = arith.addf %535, %536 : vector<12x128xf32>
    %538 = arith.mulf %35, %525 : vector<12x128xf32>
    %539 = arith.subf %537, %538 : vector<12x128xf32>
    %540 = arith.mulf %20, %514 : vector<12x128xf32>
    %cst_129 = arith.constant 0.000000e+00 : f32
    %541 = vector.broadcast %cst_129 : f32 to vector<1x128xf32>
    %542 = vector.extract_strided_slice %540 {offsets = [1, 0], sizes = [11, 128], strides = [1, 1]} : vector<12x128xf32> to vector<11x128xf32>
    %543 = tpu.concatenate %542, %541 in 0 : vector<11x128xf32>, vector<1x128xf32> -> vector<12x128xf32>
    %544 = arith.addf %540, %543 : vector<12x128xf32>
    %545 = vector.extract_strided_slice %540 {offsets = [0, 0], sizes = [11, 128], strides = [1, 1]} : vector<12x128xf32> to vector<11x128xf32>
    %546 = tpu.concatenate %541, %545 in 0 : vector<1x128xf32>, vector<11x128xf32> -> vector<12x128xf32>
    %547 = arith.addf %544, %546 : vector<12x128xf32>
    %c1_i32_130 = arith.constant 1 : i32
    %548 = tpu.dynamic_rotate %547 by %c1_i32_130 dim 1 : vector<12x128xf32>, i32 -> vector<12x128xf32>
    %549 = arith.addf %547, %548 : vector<12x128xf32>
    %c127_i32_131 = arith.constant 127 : i32
    %550 = tpu.dynamic_rotate %547 by %c127_i32_131 dim 1 : vector<12x128xf32>, i32 -> vector<12x128xf32>
    %551 = arith.addf %549, %550 : vector<12x128xf32>
    %552 = arith.mulf %48, %525 : vector<12x128xf32>
    %553 = arith.subf %551, %552 : vector<12x128xf32>
    %554 = arith.mulf %22, %514 : vector<12x128xf32>
    %cst_132 = arith.constant 0.000000e+00 : f32
    %555 = vector.broadcast %cst_132 : f32 to vector<1x128xf32>
    %556 = vector.extract_strided_slice %554 {offsets = [1, 0], sizes = [11, 128], strides = [1, 1]} : vector<12x128xf32> to vector<11x128xf32>
    %557 = tpu.concatenate %556, %555 in 0 : vector<11x128xf32>, vector<1x128xf32> -> vector<12x128xf32>
    %558 = arith.addf %554, %557 : vector<12x128xf32>
    %559 = vector.extract_strided_slice %554 {offsets = [0, 0], sizes = [11, 128], strides = [1, 1]} : vector<12x128xf32> to vector<11x128xf32>
    %560 = tpu.concatenate %555, %559 in 0 : vector<1x128xf32>, vector<11x128xf32> -> vector<12x128xf32>
    %561 = arith.addf %558, %560 : vector<12x128xf32>
    %c1_i32_133 = arith.constant 1 : i32
    %562 = tpu.dynamic_rotate %561 by %c1_i32_133 dim 1 : vector<12x128xf32>, i32 -> vector<12x128xf32>
    %563 = arith.addf %561, %562 : vector<12x128xf32>
    %c127_i32_134 = arith.constant 127 : i32
    %564 = tpu.dynamic_rotate %561 by %c127_i32_134 dim 1 : vector<12x128xf32>, i32 -> vector<12x128xf32>
    %565 = arith.addf %563, %564 : vector<12x128xf32>
    %566 = arith.mulf %61, %525 : vector<12x128xf32>
    %567 = arith.subf %565, %566 : vector<12x128xf32>
    %568 = arith.mulf %179, %539 : vector<12x128xf32>
    %569 = arith.mulf %180, %553 : vector<12x128xf32>
    %570 = arith.addf %568, %569 : vector<12x128xf32>
    %571 = arith.mulf %181, %567 : vector<12x128xf32>
    %572 = arith.addf %570, %571 : vector<12x128xf32>
    %573 = arith.mulf %180, %539 : vector<12x128xf32>
    %574 = arith.mulf %185, %553 : vector<12x128xf32>
    %575 = arith.addf %573, %574 : vector<12x128xf32>
    %576 = arith.mulf %189, %567 : vector<12x128xf32>
    %577 = arith.addf %575, %576 : vector<12x128xf32>
    %578 = arith.mulf %181, %539 : vector<12x128xf32>
    %579 = arith.mulf %189, %553 : vector<12x128xf32>
    %580 = arith.addf %578, %579 : vector<12x128xf32>
    %581 = arith.mulf %193, %567 : vector<12x128xf32>
    %582 = arith.addf %580, %581 : vector<12x128xf32>
    %583 = arith.mulf %35, %572 : vector<12x128xf32>
    %584 = arith.mulf %48, %577 : vector<12x128xf32>
    %585 = arith.addf %583, %584 : vector<12x128xf32>
    %586 = arith.mulf %61, %582 : vector<12x128xf32>
    %587 = arith.addf %585, %586 : vector<12x128xf32>
    %588 = arith.subf %525, %587 : vector<12x128xf32>
    %589 = arith.mulf %14, %588 : vector<12x128xf32>
    %590 = arith.mulf %14, %572 : vector<12x128xf32>
    %591 = arith.mulf %14, %577 : vector<12x128xf32>
    %592 = arith.mulf %14, %582 : vector<12x128xf32>
    %cst_135 = arith.constant 0.000000e+00 : f32
    %593 = vector.broadcast %cst_135 : f32 to vector<1x128xf32>
    %594 = vector.extract_strided_slice %589 {offsets = [1, 0], sizes = [11, 128], strides = [1, 1]} : vector<12x128xf32> to vector<11x128xf32>
    %595 = tpu.concatenate %594, %593 in 0 : vector<11x128xf32>, vector<1x128xf32> -> vector<12x128xf32>
    %596 = arith.addf %589, %595 : vector<12x128xf32>
    %597 = vector.extract_strided_slice %589 {offsets = [0, 0], sizes = [11, 128], strides = [1, 1]} : vector<12x128xf32> to vector<11x128xf32>
    %598 = tpu.concatenate %593, %597 in 0 : vector<1x128xf32>, vector<11x128xf32> -> vector<12x128xf32>
    %599 = arith.addf %596, %598 : vector<12x128xf32>
    %c1_i32_136 = arith.constant 1 : i32
    %600 = tpu.dynamic_rotate %599 by %c1_i32_136 dim 1 : vector<12x128xf32>, i32 -> vector<12x128xf32>
    %601 = arith.addf %599, %600 : vector<12x128xf32>
    %c127_i32_137 = arith.constant 127 : i32
    %602 = tpu.dynamic_rotate %599 by %c127_i32_137 dim 1 : vector<12x128xf32>, i32 -> vector<12x128xf32>
    %603 = arith.addf %601, %602 : vector<12x128xf32>
    %604 = vector.extract_strided_slice %603 {offsets = [2, 0], sizes = [8, 128], strides = [1, 1]} : vector<12x128xf32> to vector<8x128xf32>
    %cst_138 = arith.constant 0.000000e+00 : f32
    %605 = vector.broadcast %cst_138 : f32 to vector<1x128xf32>
    %606 = vector.extract_strided_slice %590 {offsets = [1, 0], sizes = [11, 128], strides = [1, 1]} : vector<12x128xf32> to vector<11x128xf32>
    %607 = tpu.concatenate %606, %605 in 0 : vector<11x128xf32>, vector<1x128xf32> -> vector<12x128xf32>
    %608 = arith.addf %590, %607 : vector<12x128xf32>
    %609 = vector.extract_strided_slice %590 {offsets = [0, 0], sizes = [11, 128], strides = [1, 1]} : vector<12x128xf32> to vector<11x128xf32>
    %610 = tpu.concatenate %605, %609 in 0 : vector<1x128xf32>, vector<11x128xf32> -> vector<12x128xf32>
    %611 = arith.addf %608, %610 : vector<12x128xf32>
    %c1_i32_139 = arith.constant 1 : i32
    %612 = tpu.dynamic_rotate %611 by %c1_i32_139 dim 1 : vector<12x128xf32>, i32 -> vector<12x128xf32>
    %613 = arith.addf %611, %612 : vector<12x128xf32>
    %c127_i32_140 = arith.constant 127 : i32
    %614 = tpu.dynamic_rotate %611 by %c127_i32_140 dim 1 : vector<12x128xf32>, i32 -> vector<12x128xf32>
    %615 = arith.addf %613, %614 : vector<12x128xf32>
    %616 = vector.extract_strided_slice %615 {offsets = [2, 0], sizes = [8, 128], strides = [1, 1]} : vector<12x128xf32> to vector<8x128xf32>
    %cst_141 = arith.constant 0.000000e+00 : f32
    %617 = vector.broadcast %cst_141 : f32 to vector<1x128xf32>
    %618 = vector.extract_strided_slice %591 {offsets = [1, 0], sizes = [11, 128], strides = [1, 1]} : vector<12x128xf32> to vector<11x128xf32>
    %619 = tpu.concatenate %618, %617 in 0 : vector<11x128xf32>, vector<1x128xf32> -> vector<12x128xf32>
    %620 = arith.addf %591, %619 : vector<12x128xf32>
    %621 = vector.extract_strided_slice %591 {offsets = [0, 0], sizes = [11, 128], strides = [1, 1]} : vector<12x128xf32> to vector<11x128xf32>
    %622 = tpu.concatenate %617, %621 in 0 : vector<1x128xf32>, vector<11x128xf32> -> vector<12x128xf32>
    %623 = arith.addf %620, %622 : vector<12x128xf32>
    %c1_i32_142 = arith.constant 1 : i32
    %624 = tpu.dynamic_rotate %623 by %c1_i32_142 dim 1 : vector<12x128xf32>, i32 -> vector<12x128xf32>
    %625 = arith.addf %623, %624 : vector<12x128xf32>
    %c127_i32_143 = arith.constant 127 : i32
    %626 = tpu.dynamic_rotate %623 by %c127_i32_143 dim 1 : vector<12x128xf32>, i32 -> vector<12x128xf32>
    %627 = arith.addf %625, %626 : vector<12x128xf32>
    %628 = vector.extract_strided_slice %627 {offsets = [2, 0], sizes = [8, 128], strides = [1, 1]} : vector<12x128xf32> to vector<8x128xf32>
    %cst_144 = arith.constant 0.000000e+00 : f32
    %629 = vector.broadcast %cst_144 : f32 to vector<1x128xf32>
    %630 = vector.extract_strided_slice %592 {offsets = [1, 0], sizes = [11, 128], strides = [1, 1]} : vector<12x128xf32> to vector<11x128xf32>
    %631 = tpu.concatenate %630, %629 in 0 : vector<11x128xf32>, vector<1x128xf32> -> vector<12x128xf32>
    %632 = arith.addf %592, %631 : vector<12x128xf32>
    %633 = vector.extract_strided_slice %592 {offsets = [0, 0], sizes = [11, 128], strides = [1, 1]} : vector<12x128xf32> to vector<11x128xf32>
    %634 = tpu.concatenate %629, %633 in 0 : vector<1x128xf32>, vector<11x128xf32> -> vector<12x128xf32>
    %635 = arith.addf %632, %634 : vector<12x128xf32>
    %c1_i32_145 = arith.constant 1 : i32
    %636 = tpu.dynamic_rotate %635 by %c1_i32_145 dim 1 : vector<12x128xf32>, i32 -> vector<12x128xf32>
    %637 = arith.addf %635, %636 : vector<12x128xf32>
    %c127_i32_146 = arith.constant 127 : i32
    %638 = tpu.dynamic_rotate %635 by %c127_i32_146 dim 1 : vector<12x128xf32>, i32 -> vector<12x128xf32>
    %639 = arith.addf %637, %638 : vector<12x128xf32>
    %640 = vector.extract_strided_slice %639 {offsets = [2, 0], sizes = [8, 128], strides = [1, 1]} : vector<12x128xf32> to vector<8x128xf32>
    %641 = vector.extract_strided_slice %514 {offsets = [2, 0], sizes = [8, 128], strides = [1, 1]} : vector<12x128xf32> to vector<8x128xf32>
    %642 = arith.mulf %641, %205 : vector<8x128xf32>
    %643 = arith.mulf %211, %616 : vector<8x128xf32>
    %644 = arith.addf %604, %643 : vector<8x128xf32>
    %645 = arith.mulf %212, %628 : vector<8x128xf32>
    %646 = arith.addf %644, %645 : vector<8x128xf32>
    %647 = arith.mulf %213, %640 : vector<8x128xf32>
    %648 = arith.addf %646, %647 : vector<8x128xf32>
    %cst_147 = arith.constant 0.111111112 : f32
    %649 = vector.broadcast %cst_147 : f32 to vector<8x128xf32>
    %650 = arith.mulf %649, %648 : vector<8x128xf32>
    %651 = arith.subf %642, %650 : vector<8x128xf32>
    %cst_148 = arith.constant 3.000000e+00 : f32
    %652 = vector.broadcast %cst_148 : f32 to vector<8x128xf32>
    %653 = arith.cmpf oeq, %16, %652 : vector<8x128xf32>
    %cst_149 = arith.constant 1.000000e+02 : f32
    %cst_150 = arith.constant 0.000000e+00 : f32
    %654 = vector.broadcast %cst_149 : f32 to vector<8x128xf32>
    %655 = vector.broadcast %cst_150 : f32 to vector<8x128xf32>
    %656 = arith.select %653, %654, %655 : vector<8x128xi1>, vector<8x128xf32>
    %657 = arith.mulf %210, %641 : vector<8x128xf32>
    %658 = arith.addf %651, %657 : vector<8x128xf32>
    %659 = arith.subf %658, %656 : vector<8x128xf32>
    %660 = arith.mulf %659, %659 : vector<8x128xf32>
    %661 = arith.addf %512, %660 : vector<8x128xf32>
    %cst_151 = arith.constant dense<0.000000e+00> : vector<8xf32>
    %662 = vector.multi_reduction <add>, %661, %cst_151 [1] : vector<8x128xf32> to vector<8xf32>
    %663 = vector.shape_cast %662 : vector<8xf32> to vector<8x1xf32>
    %cst_152 = arith.constant dense<0.000000e+00> : vector<1xf32>
    %664 = vector.multi_reduction <add>, %663, %cst_152 [0] : vector<8x1xf32> to vector<1xf32>
    %665 = vector.shape_cast %664 : vector<1xf32> to vector<1x1xf32>
    %c0_153 = arith.constant 0 : index
    %c0_154 = arith.constant 0 : index
    %c0_155 = arith.constant 0 : index
    %c0_156 = arith.constant 0 : index
    %666 = vector.load %arg9[%c0_153, %c0_154, %c0_155, %c0_156] : memref<1x1x1x1xf32, #tpu.memory_space<vmem>>, vector<1x1x1x1xf32>
    %667 = vector.shape_cast %666 : vector<1x1x1x1xf32> to vector<1x1xf32>
    %668 = vector.shape_cast %665 : vector<1x1xf32> to vector<1x1x1x1xf32>
    tpu.vector_store %arg9[%c0_153, %c0_154, %c0_155, %c0_156], %668 {strides = array<i32>} : memref<1x1x1x1xf32, #tpu.memory_space<vmem>>, vector<1x1x1x1xf32>,
    return
  }
  func.func @transform_0(%arg0: i32, %arg1: i32) -> (i32, i32, i32, i32) {
    %c0_i32 = arith.constant 0 : i32
    %c0_i32_0 = arith.constant 0 : i32
    %c0_i32_1 = arith.constant 0 : i32
    return %arg0, %c0_i32, %arg1, %c0_i32_0 : i32, i32, i32, i32
  }
  func.func @transform_1(%arg0: i32, %arg1: i32) -> (i32, i32, i32, i32) {
    %c1_i32 = arith.constant 1 : i32
    %0 = arith.addi %arg1, %c1_i32 : i32
    %c0_i32 = arith.constant 0 : i32
    %c0_i32_0 = arith.constant 0 : i32
    %c0_i32_1 = arith.constant 0 : i32
    return %arg0, %c0_i32, %0, %c0_i32_0 : i32, i32, i32, i32
  }
  func.func @transform_2(%arg0: i32, %arg1: i32) -> (i32, i32, i32, i32) {
    %c0_i32 = arith.constant 0 : i32
    %c0_i32_0 = arith.constant 0 : i32
    %c0_i32_1 = arith.constant 0 : i32
    return %arg0, %c0_i32, %arg1, %c0_i32_0 : i32, i32, i32, i32
  }
  func.func @transform_3(%arg0: i32, %arg1: i32) -> (i32, i32, i32, i32) {
    %c1_i32 = arith.constant 1 : i32
    %0 = arith.addi %arg1, %c1_i32 : i32
    %c0_i32 = arith.constant 0 : i32
    %c0_i32_0 = arith.constant 0 : i32
    %c0_i32_1 = arith.constant 0 : i32
    return %arg0, %c0_i32, %0, %c0_i32_0 : i32, i32, i32, i32
  }
  func.func @transform_4(%arg0: i32, %arg1: i32) -> (i32, i32, i32) {
    %c0_i32 = arith.constant 0 : i32
    %c0_i32_0 = arith.constant 0 : i32
    return %arg0, %arg1, %c0_i32 : i32, i32, i32
  }
  func.func @transform_5(%arg0: i32, %arg1: i32) -> (i32, i32, i32) {
    %c1_i32 = arith.constant 1 : i32
    %0 = arith.addi %arg1, %c1_i32 : i32
    %c0_i32 = arith.constant 0 : i32
    %c0_i32_0 = arith.constant 0 : i32
    return %arg0, %0, %c0_i32 : i32, i32, i32
  }
  func.func @transform_6(%arg0: i32, %arg1: i32) -> (i32, i32, i32) {
    %c0_i32 = arith.constant 0 : i32
    %c0_i32_0 = arith.constant 0 : i32
    return %arg0, %arg1, %c0_i32 : i32, i32, i32
  }
  func.func @transform_7(%arg0: i32, %arg1: i32) -> (i32, i32, i32, i32) {
    %c0_i32 = arith.constant 0 : i32
    %c0_i32_0 = arith.constant 0 : i32
    %c0_i32_1 = arith.constant 0 : i32
    return %arg0, %arg1, %c0_i32, %c0_i32_0 : i32, i32, i32, i32
  }
}

</mosaic_0001>

<llo_original>
// kernel: tpu_custom_call.1
$region0: #{tpu_custom_call.1}
  #allocation0 [shape = 'u32[]', space=smem, size = 0x4, offset = 0x4, fixed_abs, tag = 'smem constant byte address 0x4 - core index']
  #allocation1 [shape = 'u32[144,128]{1,0:T(1,128)}', space=vmem, size = 0x12000, scoped, tag = 'internal scratch']
  %s0 = inlined_call_operand.hbm [shape: f32[2,3,24,128], index: 0, kind: input, shape index: {}]
  %s1 = inlined_call_operand.hbm [shape: f32[2,3,24,128], index: 1, kind: input, shape index: {}]
  %s2 = inlined_call_operand.hbm [shape: f32[2,3,24,128], index: 2, kind: input, shape index: {}]
  %s3 = inlined_call_operand.hbm [shape: f32[2,3,24,128], index: 3, kind: input, shape index: {}]
  %s4 = inlined_call_operand.hbm [shape: f32[2,24,128], index: 4, kind: input, shape index: {}]
  %s5 = inlined_call_operand.hbm [shape: f32[2,24,128], index: 5, kind: input, shape index: {}]
  %s6 = inlined_call_operand.hbm [shape: f32[2,16,128], index: 6, kind: input, shape index: {}]
  %s7 = inlined_call_operand.vmem [shape: f32[2,2,1,1], index: 7, kind: output, shape index: {}]
  %s8 = sld [smem:[#allocation0]]
  $region89: #{tpu_custom_call.1} parent=0
    _
  %s10 = ssub.s32 1, %s8
  %s11 = scalar_select 0, %s10, %s8
  $region1: #{tpu_custom_call.1} parent=0
    #allocation2 [shape = 'u8[24576]{0}', space=vmem, size = 0x6000, scoped, tag = 'input window, operand 0']
    #allocation3 [shape = 's32[2]{0}', space=sflag, size = 0x8, scoped, tag = 'scoped memory for tpu_custom_call.1']
    #allocation4 [shape = 'u8[24576]{0}', space=vmem, size = 0x6000, scoped, tag = 'input window, operand 1']
    #allocation5 [shape = 's32[2]{0}', space=sflag, size = 0x8, scoped, tag = 'scoped memory for tpu_custom_call.1']
    #allocation6 [shape = 'u8[24576]{0}', space=vmem, size = 0x6000, scoped, tag = 'input window, operand 2']
    #allocation7 [shape = 'u8[24576]{0}', space=vmem, size = 0x6000, scoped, tag = 'input window, operand 3']
    #allocation8 [shape = 's32[2]{0}', space=sflag, size = 0x8, scoped, tag = 'scoped memory for tpu_custom_call.1']
    #allocation9 [shape = 'u8[8192]{0}', space=vmem, size = 0x2000, scoped, tag = 'input window, operand 4']
    #allocation10 [shape = 'u8[8192]{0}', space=vmem, size = 0x2000, scoped, tag = 'input window, operand 5']
    #allocation11 [shape = 's32[2]{0}', space=sflag, size = 0x8, scoped, tag = 'scoped memory for tpu_custom_call.1']
    #allocation12 [shape = 'u8[8192]{0}', space=vmem, size = 0x2000, scoped, tag = 'input window, operand 6']
    %12 = vsyncpa [#allocation3], 0
    %s13 = scalar_lea.sflag [#allocation3], 1
    %14 = vsyncpa %s13, 0
    %15 = vsyncpa [#allocation5], 0
    %s16 = scalar_lea.sflag [#allocation5], 1
    %17 = vsyncpa %s16, 0
    %18 = vsyncpa [#allocation8], 0
    %s19 = scalar_lea.sflag [#allocation8], 1
    %20 = vsyncpa %s19, 0
    %21 = vsyncpa [#allocation11], 0
    %s22 = scalar_lea.sflag [#allocation11], 1
    %23 = vsyncpa %s22, 0
    loop: start=0, step=1, limit=6
    $region2: #{tpu_custom_call.1} parent=1 // loop_pre_header
      _
    $region3: #{tpu_custom_call.1} parent=1 // loop_header
      %s25 = sphi 0, %s29
      %p26 = scmp.ge.s32.totalorder %s25, 6
      %s32 = sphi 0, %s44
      %s33 = sphi 0, %s40
      %s34 = sphi 0, %s32
      %s35 = sphi 0, %s33
      %s36 = sphi 0, %s34
      %s37 = sphi 0, %s35
      %s49 = sphi 0, %s51
      %s52 = sphi 0, %s49
      %s53 = sphi 0, %s52
      %s69 = sphi 0, %s53
      %s79 = sphi 0, %s81
      %s82 = sphi 0, %s79
      %s83 = sphi 0, %s82
      %s99 = sphi 0, %s83
      %s107 = sphi 0, %s109
      %s110 = sphi 0, %s107
      %s111 = sphi 0, %s110
      %s127 = sphi 0, %s111
      %s137 = sphi 0, %s139
      %s140 = sphi 0, %s137
      %s141 = sphi 0, %s140
      %s157 = sphi 0, %s141
      %s165 = sphi 0, %s167
      %s168 = sphi 0, %s165
      %s169 = sphi 0, %s168
      %s185 = sphi 0, %s169
      %s195 = sphi 0, %s197
      %s198 = sphi 0, %s195
      %s199 = sphi 0, %s198
      %s215 = sphi 0, %s199
      %s223 = sphi 0, %s225
      %s226 = sphi 0, %s223
      %s227 = sphi 0, %s226
      %s243 = sphi 0, %s227
      %s251 = sphi 0, %s253
      %s254 = sphi 0, %s251
      %s255 = sphi 0, %s254
      %s271 = sphi 0, %s255
    $region4: #{tpu_custom_call.1} parent=1 // loop_header_branch
      %28 = sbr.rel (%p26) target = $region8
    $region5: #{tpu_custom_call.1} parent=1 // loop_body
      %s30 = ssub.s32 %s25, 1
      %s31 = ssub.s32 %s25, 2
      %s38 = sadd.s32 1, %s33
      %p39 = scmp.ge.s32.totalorder %s38, 2
      %s40 = scalar_select %p39, 0, %s38
      %s41 = sadd.s32 1, %s32
      %s42 = scalar_select %p39, %s41, %s32
      %p43 = scmp.ge.s32.totalorder %s42, 2
      %s44 = scalar_select %p43, 0, %s42
      %s45 = ssub.s32 %s32, %s44
      %s46 = ssub.s32 %s33, %s40
      %s47 = sor.u32 %s45, %s46
      %p48 = scmp.eq.s32.totalorder %s47, 0
      %s50 = sadd.s32 %s49, 1
      %s51 = scalar_select %p48, %s49, %s50
      %p54 = pneg %p48
      %p55 = scmp.eq.s32.totalorder %s25, 3
      %p56 = por %p54, %p55
      %p57 = scmp.ne.s32.totalorder %s49, %s52
      %p58 = scmp.eq.s32.totalorder %s25, 0
      %p59 = por %p57, %p58
      %p60 = scmp.ne.s32.totalorder %s49, %s52
      %p61 = scmp.eq.s32.totalorder %s30, 3
      %p62 = por %p60, %p61
      %p63 = scmp.ne.s32.totalorder %s52, %s53
      %p64 = scmp.eq.s32.totalorder %s30, 0
      %p65 = por %p63, %p64
      %p66 = scmp.ne.s32.totalorder %s52, %s53
      %p67 = scmp.eq.s32.totalorder %s31, 3
      %p68 = por %p66, %p67
      %p70 = scmp.ne.s32.totalorder %s53, %s69
      %p71 = scmp.eq.s32.totalorder %s31, 0
      %p72 = por %p70, %p71
      %s73 = sadd.s32 %s33, 1
      %s74 = sadd.s32 %s40, 1
      %s75 = ssub.s32 %s32, %s44
      %s76 = ssub.s32 %s73, %s74
      %s77 = sor.u32 %s75, %s76
      %p78 = scmp.eq.s32.totalorder %s77, 0
      %s80 = sadd.s32 %s79, 1
      %s81 = scalar_select %p78, %s79, %s80
      %p84 = pneg %p78
      %p85 = scmp.eq.s32.totalorder %s25, 3
      %p86 = por %p84, %p85
      %p87 = scmp.ne.s32.totalorder %s79, %s82
      %p88 = scmp.eq.s32.totalorder %s25, 0
      %p89 = por %p87, %p88
      %p90 = scmp.ne.s32.totalorder %s79, %s82
      %p91 = scmp.eq.s32.totalorder %s30, 3
      %p92 = por %p90, %p91
      %p93 = scmp.ne.s32.totalorder %s82, %s83
      %p94 = scmp.eq.s32.totalorder %s30, 0
      %p95 = por %p93, %p94
      %p96 = scmp.ne.s32.totalorder %s82, %s83
      %p97 = scmp.eq.s32.totalorder %s31, 3
      %p98 = por %p96, %p97
      %p100 = scmp.ne.s32.totalorder %s83, %s99
      %p101 = scmp.eq.s32.totalorder %s31, 0
      %p102 = por %p100, %p101
      %s103 = ssub.s32 %s32, %s44
      %s104 = ssub.s32 %s33, %s40
      %s105 = sor.u32 %s103, %s104
      %p106 = scmp.eq.s32.totalorder %s105, 0
      %s108 = sadd.s32 %s107, 1
      %s109 = scalar_select %p106, %s107, %s108
      %p112 = pneg %p106
      %p113 = scmp.eq.s32.totalorder %s25, 3
      %p114 = por %p112, %p113
      %p115 = scmp.ne.s32.totalorder %s107, %s110
      %p116 = scmp.eq.s32.totalorder %s25, 0
      %p117 = por %p115, %p116
      %p118 = scmp.ne.s32.totalorder %s107, %s110
      %p119 = scmp.eq.s32.totalorder %s30, 3
      %p120 = por %p118, %p119
      %p121 = scmp.ne.s32.totalorder %s110, %s111
      %p122 = scmp.eq.s32.totalorder %s30, 0
      %p123 = por %p121, %p122
      %p124 = scmp.ne.s32.totalorder %s110, %s111
      %p125 = scmp.eq.s32.totalorder %s31, 3
      %p126 = por %p124, %p125
      %p128 = scmp.ne.s32.totalorder %s111, %s127
      %p129 = scmp.eq.s32.totalorder %s31, 0
      %p130 = por %p128, %p129
      %s131 = sadd.s32 %s33, 1
      %s132 = sadd.s32 %s40, 1
      %s133 = ssub.s32 %s32, %s44
      %s134 = ssub.s32 %s131, %s132
      %s135 = sor.u32 %s133, %s134
      %p136 = scmp.eq.s32.totalorder %s135, 0
      %s138 = sadd.s32 %s137, 1
      %s139 = scalar_select %p136, %s137, %s138
      %p142 = pneg %p136
      %p143 = scmp.eq.s32.totalorder %s25, 3
      %p144 = por %p142, %p143
      %p145 = scmp.ne.s32.totalorder %s137, %s140
      %p146 = scmp.eq.s32.totalorder %s25, 0
      %p147 = por %p145, %p146
      %p148 = scmp.ne.s32.totalorder %s137, %s140
      %p149 = scmp.eq.s32.totalorder %s30, 3
      %p150 = por %p148, %p149
      %p151 = scmp.ne.s32.totalorder %s140, %s141
      %p152 = scmp.eq.s32.totalorder %s30, 0
      %p153 = por %p151, %p152
      %p154 = scmp.ne.s32.totalorder %s140, %s141
      %p155 = scmp.eq.s32.totalorder %s31, 3
      %p156 = por %p154, %p155
      %p158 = scmp.ne.s32.totalorder %s141, %s157
      %p159 = scmp.eq.s32.totalorder %s31, 0
      %p160 = por %p158, %p159
      %s161 = ssub.s32 %s32, %s44
      %s162 = ssub.s32 %s33, %s40
      %s163 = sor.u32 %s161, %s162
      %p164 = scmp.eq.s32.totalorder %s163, 0
      %s166 = sadd.s32 %s165, 1
      %s167 = scalar_select %p164, %s165, %s166
      %p170 = pneg %p164
      %p171 = scmp.eq.s32.totalorder %s25, 3
      %p172 = por %p170, %p171
      %p173 = scmp.ne.s32.totalorder %s165, %s168
      %p174 = scmp.eq.s32.totalorder %s25, 0
      %p175 = por %p173, %p174
      %p176 = scmp.ne.s32.totalorder %s165, %s168
      %p177 = scmp.eq.s32.totalorder %s30, 3
      %p178 = por %p176, %p177
      %p179 = scmp.ne.s32.totalorder %s168, %s169
      %p180 = scmp.eq.s32.totalorder %s30, 0
      %p181 = por %p179, %p180
      %p182 = scmp.ne.s32.totalorder %s168, %s169
      %p183 = scmp.eq.s32.totalorder %s31, 3
      %p184 = por %p182, %p183
      %p186 = scmp.ne.s32.totalorder %s169, %s185
      %p187 = scmp.eq.s32.totalorder %s31, 0
      %p188 = por %p186, %p187
      %s189 = sadd.s32 %s33, 1
      %s190 = sadd.s32 %s40, 1
      %s191 = ssub.s32 %s32, %s44
      %s192 = ssub.s32 %s189, %s190
      %s193 = sor.u32 %s191, %s192
      %p194 = scmp.eq.s32.totalorder %s193, 0
      %s196 = sadd.s32 %s195, 1
      %s197 = scalar_select %p194, %s195, %s196
      %p200 = pneg %p194
      %p201 = scmp.eq.s32.totalorder %s25, 3
      %p202 = por %p200, %p201
      %p203 = scmp.ne.s32.totalorder %s195, %s198
      %p204 = scmp.eq.s32.totalorder %s25, 0
      %p205 = por %p203, %p204
      %p206 = scmp.ne.s32.totalorder %s195, %s198
      %p207 = scmp.eq.s32.totalorder %s30, 3
      %p208 = por %p206, %p207
      %p209 = scmp.ne.s32.totalorder %s198, %s199
      %p210 = scmp.eq.s32.totalorder %s30, 0
      %p211 = por %p209, %p210
      %p212 = scmp.ne.s32.totalorder %s198, %s199
      %p213 = scmp.eq.s32.totalorder %s31, 3
      %p214 = por %p212, %p213
      %p216 = scmp.ne.s32.totalorder %s199, %s215
      %p217 = scmp.eq.s32.totalorder %s31, 0
      %p218 = por %p216, %p217
      %s219 = ssub.s32 %s32, %s44
      %s220 = ssub.s32 %s33, %s40
      %s221 = sor.u32 %s219, %s220
      %p222 = scmp.eq.s32.totalorder %s221, 0
      %s224 = sadd.s32 %s223, 1
      %s225 = scalar_select %p222, %s223, %s224
      %p228 = pneg %p222
      %p229 = scmp.eq.s32.totalorder %s25, 3
      %p230 = por %p228, %p229
      %p231 = scmp.ne.s32.totalorder %s223, %s226
      %p232 = scmp.eq.s32.totalorder %s25, 0
      %p233 = por %p231, %p232
      %p234 = scmp.ne.s32.totalorder %s223, %s226
      %p235 = scmp.eq.s32.totalorder %s30, 3
      %p236 = por %p234, %p235
      %p237 = scmp.ne.s32.totalorder %s226, %s227
      %p238 = scmp.eq.s32.totalorder %s30, 0
      %p239 = por %p237, %p238
      %p240 = scmp.ne.s32.totalorder %s226, %s227
      %p241 = scmp.eq.s32.totalorder %s31, 3
      %p242 = por %p240, %p241
      %p244 = scmp.ne.s32.totalorder %s227, %s243
      %p245 = scmp.eq.s32.totalorder %s31, 0
      %p246 = por %p244, %p245
      %s247 = ssub.s32 %s32, %s44
      %s248 = ssub.s32 %s33, %s40
      %s249 = sor.u32 %s247, %s248
      %p250 = scmp.eq.s32.totalorder %s249, 0
      %s252 = sadd.s32 %s251, 1
      %s253 = scalar_select %p250, %s251, %s252
      %p256 = pneg %p250
      %p257 = scmp.eq.s32.totalorder %s25, 3
      %p258 = por %p256, %p257
      %p259 = scmp.ne.s32.totalorder %s251, %s254
      %p260 = scmp.eq.s32.totalorder %s25, 0
      %p261 = por %p259, %p260
      %p262 = scmp.ne.s32.totalorder %s251, %s254
      %p263 = scmp.eq.s32.totalorder %s30, 3
      %p264 = por %p262, %p263
      %p265 = scmp.ne.s32.totalorder %s254, %s255
      %p266 = scmp.eq.s32.totalorder %s30, 0
      %p267 = por %p265, %p266
      %p268 = scmp.ne.s32.totalorder %s254, %s255
      %p269 = scmp.eq.s32.totalorder %s31, 3
      %p270 = por %p268, %p269
      %p272 = scmp.ne.s32.totalorder %s255, %s271
      %p273 = scmp.eq.s32.totalorder %s31, 0
      %p274 = por %p272, %p273
      %p275 = scmp.le.s32.totalorder 1, %s25
      %p276 = scmp.lt.s32.totalorder %s25, 5
      %p277 = pnand %p275, %p276
      %p278 = pneg %p277
      // Predicated region
      $region9: #{tpu_custom_call.1} parent=5 // pred_check
        _
      $region10: #{tpu_custom_call.1} parent=5 // pred_check_branch
        %280 = sbr.rel (%p277) target = $region12
      $region11: #{tpu_custom_call.1} parent=5 // pred_region
        %s281 = ssub.s32 %s25, 1
      $region12: #{tpu_custom_call.1} parent=5 // pred_fallthru
        _
      %p282 = scmp.lt.s32.totalorder %s25, 4
      // Predicated region
      $region13: #{tpu_custom_call.1} parent=5 // pred_check
        %p283 = pneg %p282
      $region14: #{tpu_custom_call.1} parent=5 // pred_check_branch
        %285 = sbr.rel (%p283) target = $region16
      $region15: #{tpu_custom_call.1} parent=5 // pred_region
        // Predicated region
        $region17: #{tpu_custom_call.1} parent=15 // pred_check
          %p286 = pneg %p59
        $region18: #{tpu_custom_call.1} parent=15 // pred_check_branch
          %288 = sbr.rel (%p286) target = $region20
        $region19: #{tpu_custom_call.1} parent=15 // pred_region
          %s289 = sand.u32 %s49, 1
          %s290 = scalar_lea.sflag [#allocation3], %s289
          %s291 = sand.u32 %s49, 1
          %s292 = smul.addr %s291, 24
          %s293 = scalar_lea.vmem [#allocation2], %s292
          %s295 = ssub.s32 384, 384
          %296 = vsyncadd %s290, %s295
          %s297 = smul.addr %s32, 9
          %s298 = sadd.s32 %s33, %s297
          %s299 = smul.addr %s298, 128
          %s300 = scalar_lea.hbm %s0, %s299
          %s301 = sshll.u32 %s293, 4
          %s302 = int_to_ptr.vmem [resolvable:$true] %s301
          %307 = dma.hbm_to_vmem [thread:$0]  %s300, 384, %s302, %s290, 384, 128, 8
        $region20: #{tpu_custom_call.1} parent=15 // pred_fallthru
          _
        // Predicated region
        $region21: #{tpu_custom_call.1} parent=15 // pred_check
          %p308 = pneg %p89
        $region22: #{tpu_custom_call.1} parent=15 // pred_check_branch
          %310 = sbr.rel (%p308) target = $region24
        $region23: #{tpu_custom_call.1} parent=15 // pred_region
          %s311 = sand.u32 %s25, 1
          %s312 = scalar_lea.sflag [#allocation5], %s311
          %s313 = sand.u32 %s79, 1
          %s314 = smul.addr %s313, 24
          %s315 = scalar_lea.vmem [#allocation4], %s314
          %s316 = sadd.s32 %s33, 1
          %s318 = ssub.s32 384, 384
          %319 = vsyncadd %s312, %s318
          %s320 = smul.addr %s32, 9
          %s321 = sadd.s32 %s316, %s320
          %s322 = smul.addr %s321, 128
          %s323 = scalar_lea.hbm %s1, %s322
          %s324 = sshll.u32 %s315, 4
          %s325 = int_to_ptr.vmem [resolvable:$true] %s324
          %330 = dma.hbm_to_vmem [thread:$0]  %s323, 384, %s325, %s312, 384, 128, 8
        $region24: #{tpu_custom_call.1} parent=15 // pred_fallthru
          _
        // Predicated region
        $region25: #{tpu_custom_call.1} parent=15 // pred_check
          %p331 = pneg %p117
        $region26: #{tpu_custom_call.1} parent=15 // pred_check_branch
          %333 = sbr.rel (%p331) target = $region28
        $region27: #{tpu_custom_call.1} parent=15 // pred_region
          %s334 = sand.u32 %s25, 1
          %s335 = scalar_lea.sflag [#allocation5], %s334
          %s336 = sand.u32 %s107, 1
          %s337 = smul.addr %s336, 24
          %s338 = scalar_lea.vmem [#allocation6], %s337
          %s340 = ssub.s32 384, 384
          %341 = vsyncadd %s335, %s340
          %s342 = smul.addr %s32, 9
          %s343 = sadd.s32 %s33, %s342
          %s344 = smul.addr %s343, 128
          %s345 = scalar_lea.hbm %s2, %s344
          %s346 = sshll.u32 %s338, 4
          %s347 = int_to_ptr.vmem [resolvable:$true] %s346
          %352 = dma.hbm_to_vmem [thread:$0]  %s345, 384, %s347, %s335, 384, 128, 8
        $region28: #{tpu_custom_call.1} parent=15 // pred_fallthru
          _
        // Predicated region
        $region29: #{tpu_custom_call.1} parent=15 // pred_check
          %p353 = pneg %p147
        $region30: #{tpu_custom_call.1} parent=15 // pred_check_branch
          %355 = sbr.rel (%p353) target = $region32
        $region31: #{tpu_custom_call.1} parent=15 // pred_region
          %s356 = sand.u32 %s25, 1
          %s357 = scalar_lea.sflag [#allocation8], %s356
          %s358 = sand.u32 %s137, 1
          %s359 = smul.addr %s358, 24
          %s360 = scalar_lea.vmem [#allocation7], %s359
          %s361 = sadd.s32 %s33, 1
          %s363 = ssub.s32 384, 384
          %364 = vsyncadd %s357, %s363
          %s365 = smul.addr %s32, 9
          %s366 = sadd.s32 %s361, %s365
          %s367 = smul.addr %s366, 128
          %s368 = scalar_lea.hbm %s3, %s367
          %s369 = sshll.u32 %s360, 4
          %s370 = int_to_ptr.vmem [resolvable:$true] %s369
          %375 = dma.hbm_to_vmem [thread:$0]  %s368, 384, %s370, %s357, 384, 128, 8
        $region32: #{tpu_custom_call.1} parent=15 // pred_fallthru
          _
        // Predicated region
        $region33: #{tpu_custom_call.1} parent=15 // pred_check
          %p376 = pneg %p175
        $region34: #{tpu_custom_call.1} parent=15 // pred_check_branch
          %378 = sbr.rel (%p376) target = $region36
        $region35: #{tpu_custom_call.1} parent=15 // pred_region
          %s379 = sand.u32 %s25, 1
          %s380 = scalar_lea.sflag [#allocation8], %s379
          %s381 = sand.u32 %s165, 1
          %s382 = smul.addr %s381, 8
          %s383 = scalar_lea.vmem [#allocation9], %s382
          %s385 = ssub.s32 128, 128
          %386 = vsyncadd %s380, %s385
          %s387 = smul.addr %s32, 3
          %s388 = sadd.s32 %s33, %s387
          %s389 = smul.addr %s388, 128
          %s390 = scalar_lea.hbm %s4, %s389
          %s392 = sshll.u32 %s383, 4
          %s393 = int_to_ptr.vmem [resolvable:$true] %s392
          %395 = dma.hbm_to_vmem [thread:$0]  %s390, 128, %s393, %s380
        $region36: #{tpu_custom_call.1} parent=15 // pred_fallthru
          _
        // Predicated region
        $region37: #{tpu_custom_call.1} parent=15 // pred_check
          %p396 = pneg %p205
        $region38: #{tpu_custom_call.1} parent=15 // pred_check_branch
          %398 = sbr.rel (%p396) target = $region40
        $region39: #{tpu_custom_call.1} parent=15 // pred_region
          %s399 = sand.u32 %s25, 1
          %s400 = scalar_lea.sflag [#allocation11], %s399
          %s401 = sand.u32 %s195, 1
          %s402 = smul.addr %s401, 8
          %s403 = scalar_lea.vmem [#allocation10], %s402
          %s404 = sadd.s32 %s33, 1
          %s406 = ssub.s32 128, 128
          %407 = vsyncadd %s400, %s406
          %s408 = smul.addr %s32, 3
          %s409 = sadd.s32 %s404, %s408
          %s410 = smul.addr %s409, 128
          %s411 = scalar_lea.hbm %s5, %s410
          %s413 = sshll.u32 %s403, 4
          %s414 = int_to_ptr.vmem [resolvable:$true] %s413
          %416 = dma.hbm_to_vmem [thread:$0]  %s411, 128, %s414, %s400
        $region40: #{tpu_custom_call.1} parent=15 // pred_fallthru
          _
        // Predicated region
        $region41: #{tpu_custom_call.1} parent=15 // pred_check
          %p417 = pneg %p233
        $region42: #{tpu_custom_call.1} parent=15 // pred_check_branch
          %419 = sbr.rel (%p417) target = $region44
        $region43: #{tpu_custom_call.1} parent=15 // pred_region
          %s420 = sand.u32 %s25, 1
          %s421 = scalar_lea.sflag [#allocation11], %s420
          %s422 = sand.u32 %s223, 1
          %s423 = smul.addr %s422, 8
          %s424 = scalar_lea.vmem [#allocation12], %s423
          %s426 = ssub.s32 128, 128
          %427 = vsyncadd %s421, %s426
          %s428 = smul.addr %s32, 2
          %s429 = sadd.s32 %s33, %s428
          %s430 = smul.addr %s429, 128
          %s431 = scalar_lea.hbm %s6, %s430
          %s433 = sshll.u32 %s424, 4
          %s434 = int_to_ptr.vmem [resolvable:$true] %s433
          %436 = dma.hbm_to_vmem [thread:$0]  %s431, 128, %s434, %s421
        $region44: #{tpu_custom_call.1} parent=15 // pred_fallthru
          _
      $region16: #{tpu_custom_call.1} parent=5 // pred_fallthru
        _
      %p437 = scmp.le.s32.totalorder 1, %s25
      %p438 = scmp.lt.s32.totalorder %s25, 5
      %p439 = pnand %p437, %p438
      %p440 = pneg %p439
      // Predicated region
      $region45: #{tpu_custom_call.1} parent=5 // pred_check
        _
      $region46: #{tpu_custom_call.1} parent=5 // pred_check_branch
        %442 = sbr.rel (%p439) target = $region48
      $region47: #{tpu_custom_call.1} parent=5 // pred_region
        %s443 = ssub.s32 %s25, 1
        %s444 = sand.u32 %s52, 1
        %s445 = scalar_lea.sflag [#allocation3], %s444
        %s446 = sand.u32 %s52, 1
        %s447 = smul.addr %s446, 24
        %s448 = scalar_lea.vmem [#allocation2], %s447
        // Predicated region
        $region49: #{tpu_custom_call.1} parent=47 // pred_check
          %p449 = pneg %p65
        $region50: #{tpu_custom_call.1} parent=47 // pred_check_branch
          %451 = sbr.rel (%p449) target = $region52
        $region51: #{tpu_custom_call.1} parent=47 // pred_region
          %452 = dma.done %s445, 384
        $region52: #{tpu_custom_call.1} parent=47 // pred_fallthru
          _
        %s453 = sand.u32 %s30, 1
        %s454 = scalar_lea.sflag [#allocation5], %s453
        %s455 = sand.u32 %s82, 1
        %s456 = smul.addr %s455, 24
        %s457 = scalar_lea.vmem [#allocation4], %s456
        // Predicated region
        $region53: #{tpu_custom_call.1} parent=47 // pred_check
          %p458 = pneg %p95
        $region54: #{tpu_custom_call.1} parent=47 // pred_check_branch
          %460 = sbr.rel (%p458) target = $region56
        $region55: #{tpu_custom_call.1} parent=47 // pred_region
          %461 = dma.done %s454, 384
        $region56: #{tpu_custom_call.1} parent=47 // pred_fallthru
          _
        %s462 = sand.u32 %s30, 1
        %s463 = scalar_lea.sflag [#allocation5], %s462
        %s464 = sand.u32 %s110, 1
        %s465 = smul.addr %s464, 24
        %s466 = scalar_lea.vmem [#allocation6], %s465
        // Predicated region
        $region57: #{tpu_custom_call.1} parent=47 // pred_check
          %p467 = pneg %p123
        $region58: #{tpu_custom_call.1} parent=47 // pred_check_branch
          %469 = sbr.rel (%p467) target = $region60
        $region59: #{tpu_custom_call.1} parent=47 // pred_region
          %470 = dma.done %s463, 384
        $region60: #{tpu_custom_call.1} parent=47 // pred_fallthru
          _
        %s471 = sand.u32 %s30, 1
        %s472 = scalar_lea.sflag [#allocation8], %s471
        %s473 = sand.u32 %s140, 1
        %s474 = smul.addr %s473, 24
        %s475 = scalar_lea.vmem [#allocation7], %s474
        // Predicated region
        $region61: #{tpu_custom_call.1} parent=47 // pred_check
          %p476 = pneg %p153
        $region62: #{tpu_custom_call.1} parent=47 // pred_check_branch
          %478 = sbr.rel (%p476) target = $region64
        $region63: #{tpu_custom_call.1} parent=47 // pred_region
          %479 = dma.done %s472, 384
        $region64: #{tpu_custom_call.1} parent=47 // pred_fallthru
          _
        %s480 = sand.u32 %s30, 1
        %s481 = scalar_lea.sflag [#allocation8], %s480
        %s482 = sand.u32 %s168, 1
        %s483 = smul.addr %s482, 8
        %s484 = scalar_lea.vmem [#allocation9], %s483
        // Predicated region
        $region65: #{tpu_custom_call.1} parent=47 // pred_check
          %p485 = pneg %p181
        $region66: #{tpu_custom_call.1} parent=47 // pred_check_branch
          %487 = sbr.rel (%p485) target = $region68
        $region67: #{tpu_custom_call.1} parent=47 // pred_region
          %488 = dma.done %s481, 128
        $region68: #{tpu_custom_call.1} parent=47 // pred_fallthru
          _
        %s489 = sand.u32 %s30, 1
        %s490 = scalar_lea.sflag [#allocation11], %s489
        %s491 = sand.u32 %s198, 1
        %s492 = smul.addr %s491, 8
        %s493 = scalar_lea.vmem [#allocation10], %s492
        // Predicated region
        $region69: #{tpu_custom_call.1} parent=47 // pred_check
          %p494 = pneg %p211
        $region70: #{tpu_custom_call.1} parent=47 // pred_check_branch
          %496 = sbr.rel (%p494) target = $region72
        $region71: #{tpu_custom_call.1} parent=47 // pred_region
          %497 = dma.done %s490, 128
        $region72: #{tpu_custom_call.1} parent=47 // pred_fallthru
          _
        %s498 = sand.u32 %s30, 1
        %s499 = scalar_lea.sflag [#allocation11], %s498
        %s500 = sand.u32 %s226, 1
        %s501 = smul.addr %s500, 8
        %s502 = scalar_lea.vmem [#allocation12], %s501
        // Predicated region
        $region73: #{tpu_custom_call.1} parent=47 // pred_check
          %p503 = pneg %p239
        $region74: #{tpu_custom_call.1} parent=47 // pred_check_branch
          %505 = sbr.rel (%p503) target = $region76
        $region75: #{tpu_custom_call.1} parent=47 // pred_region
          %506 = dma.done %s499, 128
        $region76: #{tpu_custom_call.1} parent=47 // pred_fallthru
          _
        %s507 = sand.u32 %s52, 1
        %s508 = scalar_lea.sflag [#allocation3], %s507
        %s509 = sand.u32 %s52, 1
        %s510 = smul.addr %s509, 24
        %s511 = scalar_lea.vmem [#allocation2], %s510
        %p512 = pneg %p65
        %p513 = pneg %p62
        %s514 = sand.u32 %s30, 1
        %s515 = scalar_lea.sflag [#allocation5], %s514
        %s516 = sand.u32 %s82, 1
        %s517 = smul.addr %s516, 24
        %s518 = scalar_lea.vmem [#allocation4], %s517
        %p519 = pneg %p95
        %p520 = pneg %p92
        %s521 = sand.u32 %s30, 1
        %s522 = scalar_lea.sflag [#allocation5], %s521
        %s523 = sand.u32 %s110, 1
        %s524 = smul.addr %s523, 24
        %s525 = scalar_lea.vmem [#allocation6], %s524
        %p526 = pneg %p123
        %p527 = pneg %p120
        %s528 = sand.u32 %s30, 1
        %s529 = scalar_lea.sflag [#allocation8], %s528
        %s530 = sand.u32 %s140, 1
        %s531 = smul.addr %s530, 24
        %s532 = scalar_lea.vmem [#allocation7], %s531
        %p533 = pneg %p153
        %p534 = pneg %p150
        %s535 = sand.u32 %s30, 1
        %s536 = scalar_lea.sflag [#allocation8], %s535
        %s537 = sand.u32 %s168, 1
        %s538 = smul.addr %s537, 8
        %s539 = scalar_lea.vmem [#allocation9], %s538
        %p540 = pneg %p181
        %p541 = pneg %p178
        %s542 = sand.u32 %s30, 1
        %s543 = scalar_lea.sflag [#allocation11], %s542
        %s544 = sand.u32 %s198, 1
        %s545 = smul.addr %s544, 8
        %s546 = scalar_lea.vmem [#allocation10], %s545
        %p547 = pneg %p211
        %p548 = pneg %p208
        %s549 = sand.u32 %s30, 1
        %s550 = scalar_lea.sflag [#allocation11], %s549
        %s551 = sand.u32 %s226, 1
        %s552 = smul.addr %s551, 8
        %s553 = scalar_lea.vmem [#allocation12], %s552
        %p554 = pneg %p239
        %p555 = pneg %p236
        %p556 = pneg %p267
        %p557 = pneg %p264
        %p558 = scmp.lt.s32.totalorder %s34, 1
        %s559 = scalar_select %p558, %s34, 1
        %p560 = scmp.lt.s32.totalorder %s35, 1
        %s561 = scalar_select %p560, %s35, 1
        %s562 = smul.addr %s559, 2
        %s563 = sadd.s32 %s561, %s562
        %s564 = scalar_lea.vmem %s7, %s563
        %s565 = sadd.s32 %s35, 1
        %s566 = sadd.s32 %s35, 1
        %s567 = sadd.s32 %s35, 1
        %p568 = scmp.lt.s32.totalorder %s34, 1
        %s569 = scalar_select %p568, %s34, 1
        %p570 = scmp.lt.s32.totalorder %s35, 1
        %s571 = scalar_select %p570, %s35, 1
        %s572 = smul.addr %s569, 2
        %s573 = sadd.s32 %s571, %s572
        %s574 = scalar_lea.vmem %s7, %s573
        %v575 = vld [vmem:[%s448] sm:$0xff]
        %v576 = vld [vmem:[%s448 + $0x8] sm:$0xff]
        %v577 = vld [vmem:[%s448 + $0x10] sm:$0xff]
        %v578 = vld [vmem:[%s457] sm:$0xf]
        %v579 = vld [vmem:[%s457 + $0x8] sm:$0xf]
        %v580 = vld [vmem:[%s457 + $0x10] sm:$0xf]
        %v581 = vld [vmem:[%s466] sm:$0xff]
        %v582 = vld [vmem:[%s466 + $0x8] sm:$0xff]
        %v583 = vld [vmem:[%s466 + $0x10] sm:$0xff]
        %v584 = vld [vmem:[%s475] sm:$0xf]
        %v585 = vld [vmem:[%s475 + $0x8] sm:$0xf]
        %v586 = vld [vmem:[%s475 + $0x10] sm:$0xf]
        %v587 = vld [vmem:[%s484] sm:$0xff]
        %v588 = vld [vmem:[%s493] sm:$0xf]
        %v589 = vld [vmem:[%s502] sm:$0xff]
        %vm592 = vcmask 1046528
        %v593 = vrot.slane %v575, 1
        %v594 = vrot.slane %v578, 1
        %v595 = vsel %vm592, %v593, %v594
        %vm598 = vcmask 1042432
        %v599 = vsel %vm598, %v594, 0.0
        %v600 = vadd.f32 %v575, %v595
        %v601 = vadd.f32 %v578, %v599
        %vm602 = vcmask 1040384
        %v603 = vrot.slane %v575, 7
        %v604 = vrot.slane %v578, 7
        %v605 = vsel %vm602, %v603, %v604
        %v608 = vsel %vm602, 0.0, %v603
        %v609 = vadd.f32 %v600, %v608
        %v610 = vadd.f32 %v601, %v605
        %611 = vrot.lane.b32.xlu0 %v609, 1
        %v612 = vpop.permute.xlu0 %611
        %613 = vrot.lane.b32.xlu0 %v610, 1
        %v614 = vpop.permute.xlu0 %613
        %v615 = vadd.f32 %v609, %v612
        %v616 = vadd.f32 %v610, %v614
        %617 = vrot.lane.b32.xlu0 %v609, 127
        %v618 = vpop.permute.xlu0 %617
        %619 = vrot.lane.b32.xlu0 %v610, 127
        %v620 = vpop.permute.xlu0 %619
        %v621 = vadd.f32 %v615, %v618
        %v622 = vadd.f32 %v616, %v620
        %v623 = vmul.f32 %v621, 0.11111111
        %v624 = vmul.f32 %v622, 0.11111111
        %v627 = vrot.slane %v576, 1
        %v628 = vrot.slane %v579, 1
        %v629 = vsel %vm592, %v627, %v628
        %v632 = vsel %vm598, %v628, 0.0
        %v633 = vadd.f32 %v576, %v629
        %v634 = vadd.f32 %v579, %v632
        %v635 = vrot.slane %v576, 7
        %v636 = vrot.slane %v579, 7
        %v637 = vsel %vm602, %v635, %v636
        %v640 = vsel %vm602, 0.0, %v635
        %v641 = vadd.f32 %v633, %v640
        %v642 = vadd.f32 %v634, %v637
        %643 = vrot.lane.b32.xlu0 %v641, 1
        %v644 = vpop.permute.xlu0 %643
        %645 = vrot.lane.b32.xlu0 %v642, 1
        %v646 = vpop.permute.xlu0 %645
        %v647 = vadd.f32 %v641, %v644
        %v648 = vadd.f32 %v642, %v646
        %649 = vrot.lane.b32.xlu0 %v641, 127
        %v650 = vpop.permute.xlu0 %649
        %651 = vrot.lane.b32.xlu0 %v642, 127
        %v652 = vpop.permute.xlu0 %651
        %v653 = vadd.f32 %v647, %v650
        %v654 = vadd.f32 %v648, %v652
        %v655 = vmul.f32 %v653, 0.11111111
        %v656 = vmul.f32 %v654, 0.11111111
        %v659 = vrot.slane %v577, 1
        %v660 = vrot.slane %v580, 1
        %v661 = vsel %vm592, %v659, %v660
        %v664 = vsel %vm598, %v660, 0.0
        %v665 = vadd.f32 %v577, %v661
        %v666 = vadd.f32 %v580, %v664
        %v667 = vrot.slane %v577, 7
        %v668 = vrot.slane %v580, 7
        %v669 = vsel %vm602, %v667, %v668
        %v672 = vsel %vm602, 0.0, %v667
        %v673 = vadd.f32 %v665, %v672
        %v674 = vadd.f32 %v666, %v669
        %675 = vrot.lane.b32.xlu0 %v673, 1
        %v676 = vpop.permute.xlu0 %675
        %677 = vrot.lane.b32.xlu0 %v674, 1
        %v678 = vpop.permute.xlu0 %677
        %v679 = vadd.f32 %v673, %v676
        %v680 = vadd.f32 %v674, %v678
        %681 = vrot.lane.b32.xlu0 %v673, 127
        %v682 = vpop.permute.xlu0 %681
        %683 = vrot.lane.b32.xlu0 %v674, 127
        %v684 = vpop.permute.xlu0 %683
        %v685 = vadd.f32 %v679, %v682
        %v686 = vadd.f32 %v680, %v684
        %v687 = vmul.f32 %v685, 0.11111111
        %v688 = vmul.f32 %v686, 0.11111111
        %v689 = vmul.f32 %v575, %v575
        %v690 = vmul.f32 %v578, %v578
        %v693 = vrot.slane %v689, 1
        %v694 = vrot.slane %v690, 1
        %v695 = vsel %vm592, %v693, %v694
        %v698 = vsel %vm598, %v694, 0.0
        %v699 = vadd.f32 %v689, %v695
        %v700 = vadd.f32 %v690, %v698
        %v701 = vrot.slane %v689, 7
        %v702 = vrot.slane %v690, 7
        %v703 = vsel %vm602, %v701, %v702
        %v706 = vsel %vm602, 0.0, %v701
        %v707 = vadd.f32 %v699, %v706
        %v708 = vadd.f32 %v700, %v703
        %709 = vrot.lane.b32.xlu0 %v707, 1
        %v710 = vpop.permute.xlu0 %709
        %711 = vrot.lane.b32.xlu0 %v708, 1
        %v712 = vpop.permute.xlu0 %711
        %v713 = vadd.f32 %v707, %v710
        %v714 = vadd.f32 %v708, %v712
        %715 = vrot.lane.b32.xlu0 %v707, 127
        %v716 = vpop.permute.xlu0 %715
        %717 = vrot.lane.b32.xlu0 %v708, 127
        %v718 = vpop.permute.xlu0 %717
        %v719 = vadd.f32 %v713, %v716
        %v720 = vadd.f32 %v714, %v718
        %v721 = vmul.f32 %v719, 0.11111111
        %v722 = vmul.f32 %v720, 0.11111111
        %v723 = vmul.f32 %v623, %v623
        %v724 = vmul.f32 %v624, %v624
        %v725 = vsub.f32 %v721, %v723
        %v726 = vsub.f32 %v722, %v724
        %v727 = vadd.f32 %v725, 1.1111111e-08
        %v728 = vadd.f32 %v726, 1.1111111e-08
        %v729 = vmul.f32 %v575, %v576
        %v730 = vmul.f32 %v578, %v579
        %v733 = vrot.slane %v729, 1
        %v734 = vrot.slane %v730, 1
        %v735 = vsel %vm592, %v733, %v734
        %v738 = vsel %vm598, %v734, 0.0
        %v739 = vadd.f32 %v729, %v735
        %v740 = vadd.f32 %v730, %v738
        %v741 = vrot.slane %v729, 7
        %v742 = vrot.slane %v730, 7
        %v743 = vsel %vm602, %v741, %v742
        %v746 = vsel %vm602, 0.0, %v741
        %v747 = vadd.f32 %v739, %v746
        %v748 = vadd.f32 %v740, %v743
        %749 = vrot.lane.b32.xlu0 %v747, 1
        %v750 = vpop.permute.xlu0 %749
        %751 = vrot.lane.b32.xlu0 %v748, 1
        %v752 = vpop.permute.xlu0 %751
        %v753 = vadd.f32 %v747, %v750
        %v754 = vadd.f32 %v748, %v752
        %755 = vrot.lane.b32.xlu0 %v747, 127
        %v756 = vpop.permute.xlu0 %755
        %757 = vrot.lane.b32.xlu0 %v748, 127
        %v758 = vpop.permute.xlu0 %757
        %v759 = vadd.f32 %v753, %v756
        %v760 = vadd.f32 %v754, %v758
        %v761 = vmul.f32 %v759, 0.11111111
        %v762 = vmul.f32 %v760, 0.11111111
        %v763 = vmul.f32 %v623, %v655
        %v764 = vmul.f32 %v624, %v656
        %v765 = vsub.f32 %v761, %v763
        %v766 = vsub.f32 %v762, %v764
        %v767 = vmul.f32 %v575, %v577
        %v768 = vmul.f32 %v578, %v580
        %v771 = vrot.slane %v767, 1
        %v772 = vrot.slane %v768, 1
        %v773 = vsel %vm592, %v771, %v772
        %v776 = vsel %vm598, %v772, 0.0
        %v777 = vadd.f32 %v767, %v773
        %v778 = vadd.f32 %v768, %v776
        %v779 = vrot.slane %v767, 7
        %v780 = vrot.slane %v768, 7
        %v781 = vsel %vm602, %v779, %v780
        %v784 = vsel %vm602, 0.0, %v779
        %v785 = vadd.f32 %v777, %v784
        %v786 = vadd.f32 %v778, %v781
        %787 = vrot.lane.b32.xlu0 %v785, 1
        %v788 = vpop.permute.xlu0 %787
        %789 = vrot.lane.b32.xlu0 %v786, 1
        %v790 = vpop.permute.xlu0 %789
        %v791 = vadd.f32 %v785, %v788
        %v792 = vadd.f32 %v786, %v790
        %793 = vrot.lane.b32.xlu0 %v785, 127
        %v794 = vpop.permute.xlu0 %793
        %795 = vrot.lane.b32.xlu0 %v786, 127
        %v796 = vpop.permute.xlu0 %795
        %v797 = vadd.f32 %v791, %v794
        %v798 = vadd.f32 %v792, %v796
        %v799 = vmul.f32 %v797, 0.11111111
        %v800 = vmul.f32 %v798, 0.11111111
        %v801 = vmul.f32 %v623, %v687
        %v802 = vmul.f32 %v624, %v688
        %v803 = vsub.f32 %v799, %v801
        %v804 = vsub.f32 %v800, %v802
        %v805 = vmul.f32 %v576, %v576
        %v806 = vmul.f32 %v579, %v579
        %v809 = vrot.slane %v805, 1
        %v810 = vrot.slane %v806, 1
        %v811 = vsel %vm592, %v809, %v810
        %v814 = vsel %vm598, %v810, 0.0
        %v815 = vadd.f32 %v805, %v811
        %v816 = vadd.f32 %v806, %v814
        %v817 = vrot.slane %v805, 7
        %v818 = vrot.slane %v806, 7
        %v819 = vsel %vm602, %v817, %v818
        %v822 = vsel %vm602, 0.0, %v817
        %v823 = vadd.f32 %v815, %v822
        %v824 = vadd.f32 %v816, %v819
        %825 = vrot.lane.b32.xlu0 %v823, 1
        %v826 = vpop.permute.xlu0 %825
        %827 = vrot.lane.b32.xlu0 %v824, 1
        %v828 = vpop.permute.xlu0 %827
        %v829 = vadd.f32 %v823, %v826
        %v830 = vadd.f32 %v824, %v828
        %831 = vrot.lane.b32.xlu0 %v823, 127
        %v832 = vpop.permute.xlu0 %831
        %833 = vrot.lane.b32.xlu0 %v824, 127
        %v834 = vpop.permute.xlu0 %833
        %v835 = vadd.f32 %v829, %v832
        %v836 = vadd.f32 %v830, %v834
        %v837 = vmul.f32 %v835, 0.11111111
        %v838 = vmul.f32 %v836, 0.11111111
        %v839 = vmul.f32 %v655, %v655
        %v840 = vmul.f32 %v656, %v656
        %v841 = vsub.f32 %v837, %v839
        %v842 = vsub.f32 %v838, %v840
        %v843 = vadd.f32 %v841, 1.1111111e-08
        %v844 = vadd.f32 %v842, 1.1111111e-08
        %v845 = vmul.f32 %v576, %v577
        %v846 = vmul.f32 %v579, %v580
        %v849 = vrot.slane %v845, 1
        %v850 = vrot.slane %v846, 1
        %v851 = vsel %vm592, %v849, %v850
        %v854 = vsel %vm598, %v850, 0.0
        %v855 = vadd.f32 %v845, %v851
        %v856 = vadd.f32 %v846, %v854
        %v857 = vrot.slane %v845, 7
        %v858 = vrot.slane %v846, 7
        %v859 = vsel %vm602, %v857, %v858
        %v862 = vsel %vm602, 0.0, %v857
        %v863 = vadd.f32 %v855, %v862
        %v864 = vadd.f32 %v856, %v859
        %865 = vrot.lane.b32.xlu0 %v863, 1
        %v866 = vpop.permute.xlu0 %865
        %867 = vrot.lane.b32.xlu0 %v864, 1
        %v868 = vpop.permute.xlu0 %867
        %v869 = vadd.f32 %v863, %v866
        %v870 = vadd.f32 %v864, %v868
        %871 = vrot.lane.b32.xlu0 %v863, 127
        %v872 = vpop.permute.xlu0 %871
        %873 = vrot.lane.b32.xlu0 %v864, 127
        %v874 = vpop.permute.xlu0 %873
        %v875 = vadd.f32 %v869, %v872
        %v876 = vadd.f32 %v870, %v874
        %v877 = vmul.f32 %v875, 0.11111111
        %v878 = vmul.f32 %v876, 0.11111111
        %v879 = vmul.f32 %v655, %v687
        %v880 = vmul.f32 %v656, %v688
        %v881 = vsub.f32 %v877, %v879
        %v882 = vsub.f32 %v878, %v880
        %v883 = vmul.f32 %v577, %v577
        %v884 = vmul.f32 %v580, %v580
        %v887 = vrot.slane %v883, 1
        %v888 = vrot.slane %v884, 1
        %v889 = vsel %vm592, %v887, %v888
        %v892 = vsel %vm598, %v888, 0.0
        %v893 = vadd.f32 %v883, %v889
        %v894 = vadd.f32 %v884, %v892
        %v895 = vrot.slane %v883, 7
        %v896 = vrot.slane %v884, 7
        %v897 = vsel %vm602, %v895, %v896
        %v900 = vsel %vm602, 0.0, %v895
        %v901 = vadd.f32 %v893, %v900
        %v902 = vadd.f32 %v894, %v897
        %903 = vrot.lane.b32.xlu0 %v901, 1
        %v904 = vpop.permute.xlu0 %903
        %905 = vrot.lane.b32.xlu0 %v902, 1
        %v906 = vpop.permute.xlu0 %905
        %v907 = vadd.f32 %v901, %v904
        %v908 = vadd.f32 %v902, %v906
        %909 = vrot.lane.b32.xlu0 %v901, 127
        %v910 = vpop.permute.xlu0 %909
        %911 = vrot.lane.b32.xlu0 %v902, 127
        %v912 = vpop.permute.xlu0 %911
        %v913 = vadd.f32 %v907, %v910
        %v914 = vadd.f32 %v908, %v912
        %v915 = vmul.f32 %v913, 0.11111111
        %v916 = vmul.f32 %v914, 0.11111111
        %v917 = vmul.f32 %v687, %v687
        %v918 = vmul.f32 %v688, %v688
        %v919 = vsub.f32 %v915, %v917
        %v920 = vsub.f32 %v916, %v918
        %v921 = vadd.f32 %v919, 1.1111111e-08
        %v922 = vadd.f32 %v920, 1.1111111e-08
        %v923 = vmul.f32 %v843, %v921
        %v924 = vmul.f32 %v844, %v922
        %v925 = vmul.f32 %v881, %v881
        %v926 = vmul.f32 %v882, %v882
        %v927 = vsub.f32 %v923, %v925
        %v928 = vsub.f32 %v924, %v926
        %v929 = vmul.f32 %v803, %v881
        %v930 = vmul.f32 %v804, %v882
        %v931 = vmul.f32 %v765, %v921
        %v932 = vmul.f32 %v766, %v922
        %v933 = vsub.f32 %v929, %v931
        %v934 = vsub.f32 %v930, %v932
        %v935 = vmul.f32 %v765, %v881
        %v936 = vmul.f32 %v766, %v882
        %v937 = vmul.f32 %v803, %v843
        %v938 = vmul.f32 %v804, %v844
        %v939 = vsub.f32 %v935, %v937
        %v940 = vsub.f32 %v936, %v938
        %v941 = vmul.f32 %v727, %v927
        %v942 = vmul.f32 %v728, %v928
        %v943 = vmul.f32 %v765, %v933
        %v944 = vmul.f32 %v766, %v934
        %v945 = vadd.f32 %v941, %v943
        %v946 = vadd.f32 %v942, %v944
        %v947 = vmul.f32 %v803, %v939
        %v948 = vmul.f32 %v804, %v940
        %v949 = vadd.f32 %v945, %v947
        %v950 = vadd.f32 %v946, %v948
        %v951 = vrcp.pop %v949
        %v952 = vrcp.pop %v950
        %v953 = vmul.f32 %v927, %v951
        %v954 = vmul.f32 %v928, %v952
        %v955 = vmul.f32 %v933, %v951
        %v956 = vmul.f32 %v934, %v952
        %v957 = vmul.f32 %v939, %v951
        %v958 = vmul.f32 %v940, %v952
        %v959 = vmul.f32 %v727, %v921
        %v960 = vmul.f32 %v728, %v922
        %v961 = vmul.f32 %v803, %v803
        %v962 = vmul.f32 %v804, %v804
        %v963 = vsub.f32 %v959, %v961
        %v964 = vsub.f32 %v960, %v962
        %v965 = vmul.f32 %v963, %v951
        %v966 = vmul.f32 %v964, %v952
        %v967 = vmul.f32 %v803, %v765
        %v968 = vmul.f32 %v804, %v766
        %v969 = vmul.f32 %v727, %v881
        %v970 = vmul.f32 %v728, %v882
        %v971 = vsub.f32 %v967, %v969
        %v972 = vsub.f32 %v968, %v970
        %v973 = vmul.f32 %v971, %v951
        %v974 = vmul.f32 %v972, %v952
        %v975 = vmul.f32 %v727, %v843
        %v976 = vmul.f32 %v728, %v844
        %v977 = vmul.f32 %v765, %v765
        %v978 = vmul.f32 %v766, %v766
        %v979 = vsub.f32 %v975, %v977
        %v980 = vsub.f32 %v976, %v978
        %v981 = vmul.f32 %v979, %v951
        %v982 = vmul.f32 %v980, %v952
        %v985 = vrot.slane %v587, 1
        %v986 = vrot.slane %v588, 1
        %v987 = vsel %vm592, %v985, %v986
        %v990 = vsel %vm598, %v986, 0.0
        %v991 = vadd.f32 %v587, %v987
        %v992 = vadd.f32 %v588, %v990
        %v993 = vrot.slane %v587, 7
        %v994 = vrot.slane %v588, 7
        %v995 = vsel %vm602, %v993, %v994
        %v998 = vsel %vm602, 0.0, %v993
        %v999 = vadd.f32 %v991, %v998
        %v1000 = vadd.f32 %v992, %v995
        %1001 = vrot.lane.b32.xlu0 %v999, 1
        %v1002 = vpop.permute.xlu0 %1001
        %1003 = vrot.lane.b32.xlu0 %v1000, 1
        %v1004 = vpop.permute.xlu0 %1003
        %v1005 = vadd.f32 %v999, %v1002
        %v1006 = vadd.f32 %v1000, %v1004
        %1007 = vrot.lane.b32.xlu0 %v999, 127
        %v1008 = vpop.permute.xlu0 %1007
        %1009 = vrot.lane.b32.xlu0 %v1000, 127
        %v1010 = vpop.permute.xlu0 %1009
        %v1011 = vadd.f32 %v1005, %v1008
        %v1012 = vadd.f32 %v1006, %v1010
        %vm1013 = vcmp.ne.f32.partialorder %v589, 128.0
        %v1014 = vsel %vm1013, 100.0, 0.0
        %v1017 = vrot.slane %v581, 1
        %v1018 = vrot.slane %v584, 1
        %v1019 = vsel %vm592, %v1017, %v1018
        %v1022 = vsel %vm598, %v1018, 0.0
        %v1023 = vadd.f32 %v581, %v1019
        %v1024 = vadd.f32 %v584, %v1022
        %v1025 = vrot.slane %v581, 7
        %v1026 = vrot.slane %v584, 7
        %v1027 = vsel %vm602, %v1025, %v1026
        %v1030 = vsel %vm602, 0.0, %v1025
        %v1031 = vadd.f32 %v1023, %v1030
        %v1032 = vadd.f32 %v1024, %v1027
        %1033 = vrot.lane.b32.xlu0 %v1031, 1
        %v1034 = vpop.permute.xlu0 %1033
        %1035 = vrot.lane.b32.xlu0 %v1032, 1
        %v1036 = vpop.permute.xlu0 %1035
        %v1037 = vadd.f32 %v1031, %v1034
        %v1038 = vadd.f32 %v1032, %v1036
        %1039 = vrot.lane.b32.xlu0 %v1031, 127
        %v1040 = vpop.permute.xlu0 %1039
        %1041 = vrot.lane.b32.xlu0 %v1032, 127
        %v1042 = vpop.permute.xlu0 %1041
        %v1043 = vadd.f32 %v1037, %v1040
        %v1044 = vadd.f32 %v1038, %v1042
        %v1045 = vmul.f32 %v575, %v581
        %v1046 = vmul.f32 %v578, %v584
        %v1049 = vrot.slane %v1045, 1
        %v1050 = vrot.slane %v1046, 1
        %v1051 = vsel %vm592, %v1049, %v1050
        %v1054 = vsel %vm598, %v1050, 0.0
        %v1055 = vadd.f32 %v1045, %v1051
        %v1056 = vadd.f32 %v1046, %v1054
        %v1057 = vrot.slane %v1045, 7
        %v1058 = vrot.slane %v1046, 7
        %v1059 = vsel %vm602, %v1057, %v1058
        %v1062 = vsel %vm602, 0.0, %v1057
        %v1063 = vadd.f32 %v1055, %v1062
        %v1064 = vadd.f32 %v1056, %v1059
        %1065 = vrot.lane.b32.xlu0 %v1063, 1
        %v1066 = vpop.permute.xlu0 %1065
        %1067 = vrot.lane.b32.xlu0 %v1064, 1
        %v1068 = vpop.permute.xlu0 %1067
        %v1069 = vadd.f32 %v1063, %v1066
        %v1070 = vadd.f32 %v1064, %v1068
        %1071 = vrot.lane.b32.xlu0 %v1063, 127
        %v1072 = vpop.permute.xlu0 %1071
        %1073 = vrot.lane.b32.xlu0 %v1064, 127
        %v1074 = vpop.permute.xlu0 %1073
        %v1075 = vadd.f32 %v1069, %v1072
        %v1076 = vadd.f32 %v1070, %v1074
        %v1077 = vmul.f32 %v623, %v1043
        %v1078 = vmul.f32 %v624, %v1044
        %v1079 = vsub.f32 %v1075, %v1077
        %v1080 = vsub.f32 %v1076, %v1078
        %v1081 = vmul.f32 %v576, %v581
        %v1082 = vmul.f32 %v579, %v584
        %v1085 = vrot.slane %v1081, 1
        %v1086 = vrot.slane %v1082, 1
        %v1087 = vsel %vm592, %v1085, %v1086
        %v1090 = vsel %vm598, %v1086, 0.0
        %v1091 = vadd.f32 %v1081, %v1087
        %v1092 = vadd.f32 %v1082, %v1090
        %v1093 = vrot.slane %v1081, 7
        %v1094 = vrot.slane %v1082, 7
        %v1095 = vsel %vm602, %v1093, %v1094
        %v1098 = vsel %vm602, 0.0, %v1093
        %v1099 = vadd.f32 %v1091, %v1098
        %v1100 = vadd.f32 %v1092, %v1095
        %1101 = vrot.lane.b32.xlu0 %v1099, 1
        %v1102 = vpop.permute.xlu0 %1101
        %1103 = vrot.lane.b32.xlu0 %v1100, 1
        %v1104 = vpop.permute.xlu0 %1103
        %v1105 = vadd.f32 %v1099, %v1102
        %v1106 = vadd.f32 %v1100, %v1104
        %1107 = vrot.lane.b32.xlu0 %v1099, 127
        %v1108 = vpop.permute.xlu0 %1107
        %1109 = vrot.lane.b32.xlu0 %v1100, 127
        %v1110 = vpop.permute.xlu0 %1109
        %v1111 = vadd.f32 %v1105, %v1108
        %v1112 = vadd.f32 %v1106, %v1110
        %v1113 = vmul.f32 %v655, %v1043
        %v1114 = vmul.f32 %v656, %v1044
        %v1115 = vsub.f32 %v1111, %v1113
        %v1116 = vsub.f32 %v1112, %v1114
        %v1117 = vmul.f32 %v577, %v581
        %v1118 = vmul.f32 %v580, %v584
        %v1121 = vrot.slane %v1117, 1
        %v1122 = vrot.slane %v1118, 1
        %v1123 = vsel %vm592, %v1121, %v1122
        %v1126 = vsel %vm598, %v1122, 0.0
        %v1127 = vadd.f32 %v1117, %v1123
        %v1128 = vadd.f32 %v1118, %v1126
        %v1129 = vrot.slane %v1117, 7
        %v1130 = vrot.slane %v1118, 7
        %v1131 = vsel %vm602, %v1129, %v1130
        %v1134 = vsel %vm602, 0.0, %v1129
        %v1135 = vadd.f32 %v1127, %v1134
        %v1136 = vadd.f32 %v1128, %v1131
        %1137 = vrot.lane.b32.xlu0 %v1135, 1
        %v1138 = vpop.permute.xlu0 %1137
        %1139 = vrot.lane.b32.xlu0 %v1136, 1
        %v1140 = vpop.permute.xlu0 %1139
        %v1141 = vadd.f32 %v1135, %v1138
        %v1142 = vadd.f32 %v1136, %v1140
        %1143 = vrot.lane.b32.xlu0 %v1135, 127
        %v1144 = vpop.permute.xlu0 %1143
        %1145 = vrot.lane.b32.xlu0 %v1136, 127
        %v1146 = vpop.permute.xlu0 %1145
        %v1147 = vadd.f32 %v1141, %v1144
        %v1148 = vadd.f32 %v1142, %v1146
        %v1149 = vmul.f32 %v687, %v1043
        %v1150 = vmul.f32 %v688, %v1044
        %v1151 = vsub.f32 %v1147, %v1149
        %v1152 = vsub.f32 %v1148, %v1150
        %v1153 = vmul.f32 %v953, %v1079
        %v1154 = vmul.f32 %v954, %v1080
        %v1155 = vmul.f32 %v955, %v1115
        %v1156 = vmul.f32 %v956, %v1116
        %v1157 = vadd.f32 %v1153, %v1155
        %v1158 = vadd.f32 %v1154, %v1156
        %v1159 = vmul.f32 %v957, %v1151
        %v1160 = vmul.f32 %v958, %v1152
        %v1161 = vadd.f32 %v1157, %v1159
        %v1162 = vadd.f32 %v1158, %v1160
        %v1163 = vmul.f32 %v955, %v1079
        %v1164 = vmul.f32 %v956, %v1080
        %v1165 = vmul.f32 %v965, %v1115
        %v1166 = vmul.f32 %v966, %v1116
        %v1167 = vadd.f32 %v1163, %v1165
        %v1168 = vadd.f32 %v1164, %v1166
        %v1169 = vmul.f32 %v973, %v1151
        %v1170 = vmul.f32 %v974, %v1152
        %v1171 = vadd.f32 %v1167, %v1169
        %v1172 = vadd.f32 %v1168, %v1170
        %v1173 = vmul.f32 %v957, %v1079
        %v1174 = vmul.f32 %v958, %v1080
        %v1175 = vmul.f32 %v973, %v1115
        %v1176 = vmul.f32 %v974, %v1116
        %v1177 = vadd.f32 %v1173, %v1175
        %v1178 = vadd.f32 %v1174, %v1176
        %v1179 = vmul.f32 %v981, %v1151
        %v1180 = vmul.f32 %v982, %v1152
        %v1181 = vadd.f32 %v1177, %v1179
        %v1182 = vadd.f32 %v1178, %v1180
        %v1183 = vmul.f32 %v623, %v1161
        %v1184 = vmul.f32 %v624, %v1162
        %v1185 = vmul.f32 %v655, %v1171
        %v1186 = vmul.f32 %v656, %v1172
        %v1187 = vadd.f32 %v1183, %v1185
        %v1188 = vadd.f32 %v1184, %v1186
        %v1189 = vmul.f32 %v687, %v1181
        %v1190 = vmul.f32 %v688, %v1182
        %v1191 = vadd.f32 %v1187, %v1189
        %v1192 = vadd.f32 %v1188, %v1190
        %v1193 = vsub.f32 %v1043, %v1191
        %v1194 = vsub.f32 %v1044, %v1192
        %v1195 = vmul.f32 %v587, %v1193
        %v1196 = vmul.f32 %v588, %v1194
        %v1197 = vmul.f32 %v587, %v1161
        %v1198 = vmul.f32 %v588, %v1162
        %v1199 = vmul.f32 %v587, %v1171
        %v1200 = vmul.f32 %v588, %v1172
        %v1201 = vmul.f32 %v587, %v1181
        %v1202 = vmul.f32 %v588, %v1182
        %v1205 = vrot.slane %v1195, 1
        %v1206 = vrot.slane %v1196, 1
        %v1207 = vsel %vm592, %v1205, %v1206
        %v1210 = vsel %vm598, %v1206, 0.0
        %v1211 = vadd.f32 %v1195, %v1207
        %v1212 = vadd.f32 %v1196, %v1210
        %v1213 = vrot.slane %v1195, 7
        %v1214 = vrot.slane %v1196, 7
        %v1215 = vsel %vm602, %v1213, %v1214
        %v1218 = vsel %vm602, 0.0, %v1213
        %v1219 = vadd.f32 %v1211, %v1218
        %v1220 = vadd.f32 %v1212, %v1215
        %1221 = vrot.lane.b32.xlu0 %v1219, 1
        %v1222 = vpop.permute.xlu0 %1221
        %1223 = vrot.lane.b32.xlu0 %v1220, 1
        %v1224 = vpop.permute.xlu0 %1223
        %v1225 = vadd.f32 %v1219, %v1222
        %v1226 = vadd.f32 %v1220, %v1224
        %1227 = vrot.lane.b32.xlu0 %v1219, 127
        %v1228 = vpop.permute.xlu0 %1227
        %1229 = vrot.lane.b32.xlu0 %v1220, 127
        %v1230 = vpop.permute.xlu0 %1229
        %v1231 = vadd.f32 %v1225, %v1228
        %v1232 = vadd.f32 %v1226, %v1230
        %v1235 = vrot.slane %v1197, 1
        %v1236 = vrot.slane %v1198, 1
        %v1237 = vsel %vm592, %v1235, %v1236
        %v1240 = vsel %vm598, %v1236, 0.0
        %v1241 = vadd.f32 %v1197, %v1237
        %v1242 = vadd.f32 %v1198, %v1240
        %v1243 = vrot.slane %v1197, 7
        %v1244 = vrot.slane %v1198, 7
        %v1245 = vsel %vm602, %v1243, %v1244
        %v1248 = vsel %vm602, 0.0, %v1243
        %v1249 = vadd.f32 %v1241, %v1248
        %v1250 = vadd.f32 %v1242, %v1245
        %1251 = vrot.lane.b32.xlu0 %v1249, 1
        %v1252 = vpop.permute.xlu0 %1251
        %1253 = vrot.lane.b32.xlu0 %v1250, 1
        %v1254 = vpop.permute.xlu0 %1253
        %v1255 = vadd.f32 %v1249, %v1252
        %v1256 = vadd.f32 %v1250, %v1254
        %1257 = vrot.lane.b32.xlu0 %v1249, 127
        %v1258 = vpop.permute.xlu0 %1257
        %1259 = vrot.lane.b32.xlu0 %v1250, 127
        %v1260 = vpop.permute.xlu0 %1259
        %v1261 = vadd.f32 %v1255, %v1258
        %v1262 = vadd.f32 %v1256, %v1260
        %v1265 = vrot.slane %v1199, 1
        %v1266 = vrot.slane %v1200, 1
        %v1267 = vsel %vm592, %v1265, %v1266
        %v1270 = vsel %vm598, %v1266, 0.0
        %v1271 = vadd.f32 %v1199, %v1267
        %v1272 = vadd.f32 %v1200, %v1270
        %v1273 = vrot.slane %v1199, 7
        %v1274 = vrot.slane %v1200, 7
        %v1275 = vsel %vm602, %v1273, %v1274
        %v1278 = vsel %vm602, 0.0, %v1273
        %v1279 = vadd.f32 %v1271, %v1278
        %v1280 = vadd.f32 %v1272, %v1275
        %1281 = vrot.lane.b32.xlu0 %v1279, 1
        %v1282 = vpop.permute.xlu0 %1281
        %1283 = vrot.lane.b32.xlu0 %v1280, 1
        %v1284 = vpop.permute.xlu0 %1283
        %v1285 = vadd.f32 %v1279, %v1282
        %v1286 = vadd.f32 %v1280, %v1284
        %1287 = vrot.lane.b32.xlu0 %v1279, 127
        %v1288 = vpop.permute.xlu0 %1287
        %1289 = vrot.lane.b32.xlu0 %v1280, 127
        %v1290 = vpop.permute.xlu0 %1289
        %v1291 = vadd.f32 %v1285, %v1288
        %v1292 = vadd.f32 %v1286, %v1290
        %v1295 = vrot.slane %v1201, 1
        %v1296 = vrot.slane %v1202, 1
        %v1297 = vsel %vm592, %v1295, %v1296
        %v1300 = vsel %vm598, %v1296, 0.0
        %v1301 = vadd.f32 %v1201, %v1297
        %v1302 = vadd.f32 %v1202, %v1300
        %v1303 = vrot.slane %v1201, 7
        %v1304 = vrot.slane %v1202, 7
        %v1305 = vsel %vm602, %v1303, %v1304
        %v1308 = vsel %vm602, 0.0, %v1303
        %v1309 = vadd.f32 %v1301, %v1308
        %v1310 = vadd.f32 %v1302, %v1305
        %1311 = vrot.lane.b32.xlu0 %v1309, 1
        %v1312 = vpop.permute.xlu0 %1311
        %1313 = vrot.lane.b32.xlu0 %v1310, 1
        %v1314 = vpop.permute.xlu0 %1313
        %v1315 = vadd.f32 %v1309, %v1312
        %v1316 = vadd.f32 %v1310, %v1314
        %1317 = vrot.lane.b32.xlu0 %v1309, 127
        %v1318 = vpop.permute.xlu0 %1317
        %1319 = vrot.lane.b32.xlu0 %v1310, 127
        %v1320 = vpop.permute.xlu0 %1319
        %v1321 = vadd.f32 %v1315, %v1318
        %v1322 = vadd.f32 %v1316, %v1320
        %v1323 = vmul.f32 %v581, %v1011
        %v1324 = vmul.f32 %v584, %v1012
        %v1325 = vmul.f32 %v575, %v1261
        %v1326 = vmul.f32 %v578, %v1262
        %v1327 = vadd.f32 %v1231, %v1325
        %v1328 = vadd.f32 %v1232, %v1326
        %v1329 = vmul.f32 %v576, %v1291
        %v1330 = vmul.f32 %v579, %v1292
        %v1331 = vadd.f32 %v1327, %v1329
        %v1332 = vadd.f32 %v1328, %v1330
        %v1333 = vmul.f32 %v577, %v1321
        %v1334 = vmul.f32 %v580, %v1322
        %v1335 = vadd.f32 %v1331, %v1333
        %v1336 = vadd.f32 %v1332, %v1334
        %v1337 = vmul.f32 %v1335, 0.11111111
        %v1338 = vmul.f32 %v1336, 0.11111111
        %v1339 = vsub.f32 %v1323, %v1337
        %v1340 = vsub.f32 %v1324, %v1338
        %vm1341 = vcmp.eq.f32.partialorder %v589, 1.0
        %v1342 = vsel %vm1341, 100.0, 0.0
        %vm1343 = vcmask 1045504
        %v1344 = vrot.slane %v581, 2
        %v1345 = vrot.slane %v584, 2
        %v1346 = vsel %vm1343, %v1344, %v1345
        %v1348 = vmul.f32 %v1014, %v1346
        %v1350 = vrot.slane %v1348, 6
        %v1352 = vadd.f32 %v1339, %v1350
        %v1353 = vadd.f32 %v1340, %v1350
        %v1355 = vrot.slane %v1342, 6
        %v1357 = vsub.f32 %v1352, %v1355
        %v1358 = vsub.f32 %v1353, %v1355
        %v1359 = vmul.f32 %v1357, %v1357
        %v1360 = vmul.f32 %v1358, %v1358
        %v1361 = vadd.f32 %v1359, 0.0
        %v1362 = vadd.f32 %v1360, 0.0
        %v1365 = vrot.slane %v582, 1
        %v1366 = vrot.slane %v585, 1
        %v1367 = vsel %vm592, %v1365, %v1366
        %v1370 = vsel %vm598, %v1366, 0.0
        %v1371 = vadd.f32 %v582, %v1367
        %v1372 = vadd.f32 %v585, %v1370
        %v1373 = vrot.slane %v582, 7
        %v1374 = vrot.slane %v585, 7
        %v1375 = vsel %vm602, %v1373, %v1374
        %v1378 = vsel %vm602, 0.0, %v1373
        %v1379 = vadd.f32 %v1371, %v1378
        %v1380 = vadd.f32 %v1372, %v1375
        %1381 = vrot.lane.b32.xlu0 %v1379, 1
        %v1382 = vpop.permute.xlu0 %1381
        %1383 = vrot.lane.b32.xlu0 %v1380, 1
        %v1384 = vpop.permute.xlu0 %1383
        %v1385 = vadd.f32 %v1379, %v1382
        %v1386 = vadd.f32 %v1380, %v1384
        %1387 = vrot.lane.b32.xlu0 %v1379, 127
        %v1388 = vpop.permute.xlu0 %1387
        %1389 = vrot.lane.b32.xlu0 %v1380, 127
        %v1390 = vpop.permute.xlu0 %1389
        %v1391 = vadd.f32 %v1385, %v1388
        %v1392 = vadd.f32 %v1386, %v1390
        %v1393 = vmul.f32 %v575, %v582
        %v1394 = vmul.f32 %v578, %v585
        %v1397 = vrot.slane %v1393, 1
        %v1398 = vrot.slane %v1394, 1
        %v1399 = vsel %vm592, %v1397, %v1398
        %v1402 = vsel %vm598, %v1398, 0.0
        %v1403 = vadd.f32 %v1393, %v1399
        %v1404 = vadd.f32 %v1394, %v1402
        %v1405 = vrot.slane %v1393, 7
        %v1406 = vrot.slane %v1394, 7
        %v1407 = vsel %vm602, %v1405, %v1406
        %v1410 = vsel %vm602, 0.0, %v1405
        %v1411 = vadd.f32 %v1403, %v1410
        %v1412 = vadd.f32 %v1404, %v1407
        %1413 = vrot.lane.b32.xlu0 %v1411, 1
        %v1414 = vpop.permute.xlu0 %1413
        %1415 = vrot.lane.b32.xlu0 %v1412, 1
        %v1416 = vpop.permute.xlu0 %1415
        %v1417 = vadd.f32 %v1411, %v1414
        %v1418 = vadd.f32 %v1412, %v1416
        %1419 = vrot.lane.b32.xlu0 %v1411, 127
        %v1420 = vpop.permute.xlu0 %1419
        %1421 = vrot.lane.b32.xlu0 %v1412, 127
        %v1422 = vpop.permute.xlu0 %1421
        %v1423 = vadd.f32 %v1417, %v1420
        %v1424 = vadd.f32 %v1418, %v1422
        %v1425 = vmul.f32 %v623, %v1391
        %v1426 = vmul.f32 %v624, %v1392
        %v1427 = vsub.f32 %v1423, %v1425
        %v1428 = vsub.f32 %v1424, %v1426
        %v1429 = vmul.f32 %v576, %v582
        %v1430 = vmul.f32 %v579, %v585
        %v1433 = vrot.slane %v1429, 1
        %v1434 = vrot.slane %v1430, 1
        %v1435 = vsel %vm592, %v1433, %v1434
        %v1438 = vsel %vm598, %v1434, 0.0
        %v1439 = vadd.f32 %v1429, %v1435
        %v1440 = vadd.f32 %v1430, %v1438
        %v1441 = vrot.slane %v1429, 7
        %v1442 = vrot.slane %v1430, 7
        %v1443 = vsel %vm602, %v1441, %v1442
        %v1446 = vsel %vm602, 0.0, %v1441
        %v1447 = vadd.f32 %v1439, %v1446
        %v1448 = vadd.f32 %v1440, %v1443
        %1449 = vrot.lane.b32.xlu0 %v1447, 1
        %v1450 = vpop.permute.xlu0 %1449
        %1451 = vrot.lane.b32.xlu0 %v1448, 1
        %v1452 = vpop.permute.xlu0 %1451
        %v1453 = vadd.f32 %v1447, %v1450
        %v1454 = vadd.f32 %v1448, %v1452
        %1455 = vrot.lane.b32.xlu0 %v1447, 127
        %v1456 = vpop.permute.xlu0 %1455
        %1457 = vrot.lane.b32.xlu0 %v1448, 127
        %v1458 = vpop.permute.xlu0 %1457
        %v1459 = vadd.f32 %v1453, %v1456
        %v1460 = vadd.f32 %v1454, %v1458
        %v1461 = vmul.f32 %v655, %v1391
        %v1462 = vmul.f32 %v656, %v1392
        %v1463 = vsub.f32 %v1459, %v1461
        %v1464 = vsub.f32 %v1460, %v1462
        %v1465 = vmul.f32 %v577, %v582
        %v1466 = vmul.f32 %v580, %v585
        %v1469 = vrot.slane %v1465, 1
        %v1470 = vrot.slane %v1466, 1
        %v1471 = vsel %vm592, %v1469, %v1470
        %v1474 = vsel %vm598, %v1470, 0.0
        %v1475 = vadd.f32 %v1465, %v1471
        %v1476 = vadd.f32 %v1466, %v1474
        %v1477 = vrot.slane %v1465, 7
        %v1478 = vrot.slane %v1466, 7
        %v1479 = vsel %vm602, %v1477, %v1478
        %v1482 = vsel %vm602, 0.0, %v1477
        %v1483 = vadd.f32 %v1475, %v1482
        %v1484 = vadd.f32 %v1476, %v1479
        %1485 = vrot.lane.b32.xlu0 %v1483, 1
        %v1486 = vpop.permute.xlu0 %1485
        %1487 = vrot.lane.b32.xlu0 %v1484, 1
        %v1488 = vpop.permute.xlu0 %1487
        %v1489 = vadd.f32 %v1483, %v1486
        %v1490 = vadd.f32 %v1484, %v1488
        %1491 = vrot.lane.b32.xlu0 %v1483, 127
        %v1492 = vpop.permute.xlu0 %1491
        %1493 = vrot.lane.b32.xlu0 %v1484, 127
        %v1494 = vpop.permute.xlu0 %1493
        %v1495 = vadd.f32 %v1489, %v1492
        %v1496 = vadd.f32 %v1490, %v1494
        %v1497 = vmul.f32 %v687, %v1391
        %v1498 = vmul.f32 %v688, %v1392
        %v1499 = vsub.f32 %v1495, %v1497
        %v1500 = vsub.f32 %v1496, %v1498
        %v1501 = vmul.f32 %v953, %v1427
        %v1502 = vmul.f32 %v954, %v1428
        %v1503 = vmul.f32 %v955, %v1463
        %v1504 = vmul.f32 %v956, %v1464
        %v1505 = vadd.f32 %v1501, %v1503
        %v1506 = vadd.f32 %v1502, %v1504
        %v1507 = vmul.f32 %v957, %v1499
        %v1508 = vmul.f32 %v958, %v1500
        %v1509 = vadd.f32 %v1505, %v1507
        %v1510 = vadd.f32 %v1506, %v1508
        %v1511 = vmul.f32 %v955, %v1427
        %v1512 = vmul.f32 %v956, %v1428
        %v1513 = vmul.f32 %v965, %v1463
        %v1514 = vmul.f32 %v966, %v1464
        %v1515 = vadd.f32 %v1511, %v1513
        %v1516 = vadd.f32 %v1512, %v1514
        %v1517 = vmul.f32 %v973, %v1499
        %v1518 = vmul.f32 %v974, %v1500
        %v1519 = vadd.f32 %v1515, %v1517
        %v1520 = vadd.f32 %v1516, %v1518
        %v1521 = vmul.f32 %v957, %v1427
        %v1522 = vmul.f32 %v958, %v1428
        %v1523 = vmul.f32 %v973, %v1463
        %v1524 = vmul.f32 %v974, %v1464
        %v1525 = vadd.f32 %v1521, %v1523
        %v1526 = vadd.f32 %v1522, %v1524
        %v1527 = vmul.f32 %v981, %v1499
        %v1528 = vmul.f32 %v982, %v1500
        %v1529 = vadd.f32 %v1525, %v1527
        %v1530 = vadd.f32 %v1526, %v1528
        %v1531 = vmul.f32 %v623, %v1509
        %v1532 = vmul.f32 %v624, %v1510
        %v1533 = vmul.f32 %v655, %v1519
        %v1534 = vmul.f32 %v656, %v1520
        %v1535 = vadd.f32 %v1531, %v1533
        %v1536 = vadd.f32 %v1532, %v1534
        %v1537 = vmul.f32 %v687, %v1529
        %v1538 = vmul.f32 %v688, %v1530
        %v1539 = vadd.f32 %v1535, %v1537
        %v1540 = vadd.f32 %v1536, %v1538
        %v1541 = vsub.f32 %v1391, %v1539
        %v1542 = vsub.f32 %v1392, %v1540
        %v1543 = vmul.f32 %v587, %v1541
        %v1544 = vmul.f32 %v588, %v1542
        %v1545 = vmul.f32 %v587, %v1509
        %v1546 = vmul.f32 %v588, %v1510
        %v1547 = vmul.f32 %v587, %v1519
        %v1548 = vmul.f32 %v588, %v1520
        %v1549 = vmul.f32 %v587, %v1529
        %v1550 = vmul.f32 %v588, %v1530
        %v1553 = vrot.slane %v1543, 1
        %v1554 = vrot.slane %v1544, 1
        %v1555 = vsel %vm592, %v1553, %v1554
        %v1558 = vsel %vm598, %v1554, 0.0
        %v1559 = vadd.f32 %v1543, %v1555
        %v1560 = vadd.f32 %v1544, %v1558
        %v1561 = vrot.slane %v1543, 7
        %v1562 = vrot.slane %v1544, 7
        %v1563 = vsel %vm602, %v1561, %v1562
        %v1566 = vsel %vm602, 0.0, %v1561
        %v1567 = vadd.f32 %v1559, %v1566
        %v1568 = vadd.f32 %v1560, %v1563
        %1569 = vrot.lane.b32.xlu0 %v1567, 1
        %v1570 = vpop.permute.xlu0 %1569
        %1571 = vrot.lane.b32.xlu0 %v1568, 1
        %v1572 = vpop.permute.xlu0 %1571
        %v1573 = vadd.f32 %v1567, %v1570
        %v1574 = vadd.f32 %v1568, %v1572
        %1575 = vrot.lane.b32.xlu0 %v1567, 127
        %v1576 = vpop.permute.xlu0 %1575
        %1577 = vrot.lane.b32.xlu0 %v1568, 127
        %v1578 = vpop.permute.xlu0 %1577
        %v1579 = vadd.f32 %v1573, %v1576
        %v1580 = vadd.f32 %v1574, %v1578
        %v1583 = vrot.slane %v1545, 1
        %v1584 = vrot.slane %v1546, 1
        %v1585 = vsel %vm592, %v1583, %v1584
        %v1588 = vsel %vm598, %v1584, 0.0
        %v1589 = vadd.f32 %v1545, %v1585
        %v1590 = vadd.f32 %v1546, %v1588
        %v1591 = vrot.slane %v1545, 7
        %v1592 = vrot.slane %v1546, 7
        %v1593 = vsel %vm602, %v1591, %v1592
        %v1596 = vsel %vm602, 0.0, %v1591
        %v1597 = vadd.f32 %v1589, %v1596
        %v1598 = vadd.f32 %v1590, %v1593
        %1599 = vrot.lane.b32.xlu0 %v1597, 1
        %v1600 = vpop.permute.xlu0 %1599
        %1601 = vrot.lane.b32.xlu0 %v1598, 1
        %v1602 = vpop.permute.xlu0 %1601
        %v1603 = vadd.f32 %v1597, %v1600
        %v1604 = vadd.f32 %v1598, %v1602
        %1605 = vrot.lane.b32.xlu0 %v1597, 127
        %v1606 = vpop.permute.xlu0 %1605
        %1607 = vrot.lane.b32.xlu0 %v1598, 127
        %v1608 = vpop.permute.xlu0 %1607
        %v1609 = vadd.f32 %v1603, %v1606
        %v1610 = vadd.f32 %v1604, %v1608
        %v1613 = vrot.slane %v1547, 1
        %v1614 = vrot.slane %v1548, 1
        %v1615 = vsel %vm592, %v1613, %v1614
        %v1618 = vsel %vm598, %v1614, 0.0
        %v1619 = vadd.f32 %v1547, %v1615
        %v1620 = vadd.f32 %v1548, %v1618
        %v1621 = vrot.slane %v1547, 7
        %v1622 = vrot.slane %v1548, 7
        %v1623 = vsel %vm602, %v1621, %v1622
        %v1626 = vsel %vm602, 0.0, %v1621
        %v1627 = vadd.f32 %v1619, %v1626
        %v1628 = vadd.f32 %v1620, %v1623
        %1629 = vrot.lane.b32.xlu0 %v1627, 1
        %v1630 = vpop.permute.xlu0 %1629
        %1631 = vrot.lane.b32.xlu0 %v1628, 1
        %v1632 = vpop.permute.xlu0 %1631
        %v1633 = vadd.f32 %v1627, %v1630
        %v1634 = vadd.f32 %v1628, %v1632
        %1635 = vrot.lane.b32.xlu0 %v1627, 127
        %v1636 = vpop.permute.xlu0 %1635
        %1637 = vrot.lane.b32.xlu0 %v1628, 127
        %v1638 = vpop.permute.xlu0 %1637
        %v1639 = vadd.f32 %v1633, %v1636
        %v1640 = vadd.f32 %v1634, %v1638
        %v1643 = vrot.slane %v1549, 1
        %v1644 = vrot.slane %v1550, 1
        %v1645 = vsel %vm592, %v1643, %v1644
        %v1648 = vsel %vm598, %v1644, 0.0
        %v1649 = vadd.f32 %v1549, %v1645
        %v1650 = vadd.f32 %v1550, %v1648
        %v1651 = vrot.slane %v1549, 7
        %v1652 = vrot.slane %v1550, 7
        %v1653 = vsel %vm602, %v1651, %v1652
        %v1656 = vsel %vm602, 0.0, %v1651
        %v1657 = vadd.f32 %v1649, %v1656
        %v1658 = vadd.f32 %v1650, %v1653
        %1659 = vrot.lane.b32.xlu0 %v1657, 1
        %v1660 = vpop.permute.xlu0 %1659
        %1661 = vrot.lane.b32.xlu0 %v1658, 1
        %v1662 = vpop.permute.xlu0 %1661
        %v1663 = vadd.f32 %v1657, %v1660
        %v1664 = vadd.f32 %v1658, %v1662
        %1665 = vrot.lane.b32.xlu0 %v1657, 127
        %v1666 = vpop.permute.xlu0 %1665
        %1667 = vrot.lane.b32.xlu0 %v1658, 127
        %v1668 = vpop.permute.xlu0 %1667
        %v1669 = vadd.f32 %v1663, %v1666
        %v1670 = vadd.f32 %v1664, %v1668
        %v1671 = vmul.f32 %v582, %v1011
        %v1672 = vmul.f32 %v585, %v1012
        %v1673 = vmul.f32 %v575, %v1609
        %v1674 = vmul.f32 %v578, %v1610
        %v1675 = vadd.f32 %v1579, %v1673
        %v1676 = vadd.f32 %v1580, %v1674
        %v1677 = vmul.f32 %v576, %v1639
        %v1678 = vmul.f32 %v579, %v1640
        %v1679 = vadd.f32 %v1675, %v1677
        %v1680 = vadd.f32 %v1676, %v1678
        %v1681 = vmul.f32 %v577, %v1669
        %v1682 = vmul.f32 %v580, %v1670
        %v1683 = vadd.f32 %v1679, %v1681
        %v1684 = vadd.f32 %v1680, %v1682
        %v1685 = vmul.f32 %v1683, 0.11111111
        %v1686 = vmul.f32 %v1684, 0.11111111
        %v1687 = vsub.f32 %v1671, %v1685
        %v1688 = vsub.f32 %v1672, %v1686
        %vm1689 = vcmp.eq.f32.partialorder %v589, 2.0
        %v1690 = vsel %vm1689, 100.0, 0.0
        %v1691 = vrot.slane %v582, 2
        %v1692 = vrot.slane %v585, 2
        %v1693 = vsel %vm1343, %v1691, %v1692
        %v1695 = vmul.f32 %v1014, %v1693
        %v1697 = vrot.slane %v1695, 6
        %v1699 = vadd.f32 %v1687, %v1697
        %v1700 = vadd.f32 %v1688, %v1697
        %v1702 = vrot.slane %v1690, 6
        %v1704 = vsub.f32 %v1699, %v1702
        %v1705 = vsub.f32 %v1700, %v1702
        %v1706 = vmul.f32 %v1704, %v1704
        %v1707 = vmul.f32 %v1705, %v1705
        %v1708 = vadd.f32 %v1361, %v1706
        %v1709 = vadd.f32 %v1362, %v1707
        %v1712 = vrot.slane %v583, 1
        %v1713 = vrot.slane %v586, 1
        %v1714 = vsel %vm592, %v1712, %v1713
        %v1717 = vsel %vm598, %v1713, 0.0
        %v1718 = vadd.f32 %v583, %v1714
        %v1719 = vadd.f32 %v586, %v1717
        %v1720 = vrot.slane %v583, 7
        %v1721 = vrot.slane %v586, 7
        %v1722 = vsel %vm602, %v1720, %v1721
        %v1725 = vsel %vm602, 0.0, %v1720
        %v1726 = vadd.f32 %v1718, %v1725
        %v1727 = vadd.f32 %v1719, %v1722
        %1728 = vrot.lane.b32.xlu0 %v1726, 1
        %v1729 = vpop.permute.xlu0 %1728
        %1730 = vrot.lane.b32.xlu0 %v1727, 1
        %v1731 = vpop.permute.xlu0 %1730
        %v1732 = vadd.f32 %v1726, %v1729
        %v1733 = vadd.f32 %v1727, %v1731
        %1734 = vrot.lane.b32.xlu0 %v1726, 127
        %v1735 = vpop.permute.xlu0 %1734
        %1736 = vrot.lane.b32.xlu0 %v1727, 127
        %v1737 = vpop.permute.xlu0 %1736
        %v1738 = vadd.f32 %v1732, %v1735
        %v1739 = vadd.f32 %v1733, %v1737
        %v1740 = vmul.f32 %v575, %v583
        %v1741 = vmul.f32 %v578, %v586
        %v1744 = vrot.slane %v1740, 1
        %v1745 = vrot.slane %v1741, 1
        %v1746 = vsel %vm592, %v1744, %v1745
        %v1749 = vsel %vm598, %v1745, 0.0
        %v1750 = vadd.f32 %v1740, %v1746
        %v1751 = vadd.f32 %v1741, %v1749
        %v1752 = vrot.slane %v1740, 7
        %v1753 = vrot.slane %v1741, 7
        %v1754 = vsel %vm602, %v1752, %v1753
        %v1757 = vsel %vm602, 0.0, %v1752
        %v1758 = vadd.f32 %v1750, %v1757
        %v1759 = vadd.f32 %v1751, %v1754
        %1760 = vrot.lane.b32.xlu0 %v1758, 1
        %v1761 = vpop.permute.xlu0 %1760
        %1762 = vrot.lane.b32.xlu0 %v1759, 1
        %v1763 = vpop.permute.xlu0 %1762
        %v1764 = vadd.f32 %v1758, %v1761
        %v1765 = vadd.f32 %v1759, %v1763
        %1766 = vrot.lane.b32.xlu0 %v1758, 127
        %v1767 = vpop.permute.xlu0 %1766
        %1768 = vrot.lane.b32.xlu0 %v1759, 127
        %v1769 = vpop.permute.xlu0 %1768
        %v1770 = vadd.f32 %v1764, %v1767
        %v1771 = vadd.f32 %v1765, %v1769
        %v1772 = vmul.f32 %v623, %v1738
        %v1773 = vmul.f32 %v624, %v1739
        %v1774 = vsub.f32 %v1770, %v1772
        %v1775 = vsub.f32 %v1771, %v1773
        %v1776 = vmul.f32 %v576, %v583
        %v1777 = vmul.f32 %v579, %v586
        %v1780 = vrot.slane %v1776, 1
        %v1781 = vrot.slane %v1777, 1
        %v1782 = vsel %vm592, %v1780, %v1781
        %v1785 = vsel %vm598, %v1781, 0.0
        %v1786 = vadd.f32 %v1776, %v1782
        %v1787 = vadd.f32 %v1777, %v1785
        %v1788 = vrot.slane %v1776, 7
        %v1789 = vrot.slane %v1777, 7
        %v1790 = vsel %vm602, %v1788, %v1789
        %v1793 = vsel %vm602, 0.0, %v1788
        %v1794 = vadd.f32 %v1786, %v1793
        %v1795 = vadd.f32 %v1787, %v1790
        %1796 = vrot.lane.b32.xlu0 %v1794, 1
        %v1797 = vpop.permute.xlu0 %1796
        %1798 = vrot.lane.b32.xlu0 %v1795, 1
        %v1799 = vpop.permute.xlu0 %1798
        %v1800 = vadd.f32 %v1794, %v1797
        %v1801 = vadd.f32 %v1795, %v1799
        %1802 = vrot.lane.b32.xlu0 %v1794, 127
        %v1803 = vpop.permute.xlu0 %1802
        %1804 = vrot.lane.b32.xlu0 %v1795, 127
        %v1805 = vpop.permute.xlu0 %1804
        %v1806 = vadd.f32 %v1800, %v1803
        %v1807 = vadd.f32 %v1801, %v1805
        %v1808 = vmul.f32 %v655, %v1738
        %v1809 = vmul.f32 %v656, %v1739
        %v1810 = vsub.f32 %v1806, %v1808
        %v1811 = vsub.f32 %v1807, %v1809
        %v1812 = vmul.f32 %v577, %v583
        %v1813 = vmul.f32 %v580, %v586
        %v1816 = vrot.slane %v1812, 1
        %v1817 = vrot.slane %v1813, 1
        %v1818 = vsel %vm592, %v1816, %v1817
        %v1821 = vsel %vm598, %v1817, 0.0
        %v1822 = vadd.f32 %v1812, %v1818
        %v1823 = vadd.f32 %v1813, %v1821
        %v1824 = vrot.slane %v1812, 7
        %v1825 = vrot.slane %v1813, 7
        %v1826 = vsel %vm602, %v1824, %v1825
        %v1829 = vsel %vm602, 0.0, %v1824
        %v1830 = vadd.f32 %v1822, %v1829
        %v1831 = vadd.f32 %v1823, %v1826
        %1832 = vrot.lane.b32.xlu0 %v1830, 1
        %v1833 = vpop.permute.xlu0 %1832
        %1834 = vrot.lane.b32.xlu0 %v1831, 1
        %v1835 = vpop.permute.xlu0 %1834
        %v1836 = vadd.f32 %v1830, %v1833
        %v1837 = vadd.f32 %v1831, %v1835
        %1838 = vrot.lane.b32.xlu0 %v1830, 127
        %v1839 = vpop.permute.xlu0 %1838
        %1840 = vrot.lane.b32.xlu0 %v1831, 127
        %v1841 = vpop.permute.xlu0 %1840
        %v1842 = vadd.f32 %v1836, %v1839
        %v1843 = vadd.f32 %v1837, %v1841
        %v1844 = vmul.f32 %v687, %v1738
        %v1845 = vmul.f32 %v688, %v1739
        %v1846 = vsub.f32 %v1842, %v1844
        %v1847 = vsub.f32 %v1843, %v1845
        %v1848 = vmul.f32 %v953, %v1774
        %v1849 = vmul.f32 %v954, %v1775
        %v1850 = vmul.f32 %v955, %v1810
        %v1851 = vmul.f32 %v956, %v1811
        %v1852 = vadd.f32 %v1848, %v1850
        %v1853 = vadd.f32 %v1849, %v1851
        %v1854 = vmul.f32 %v957, %v1846
        %v1855 = vmul.f32 %v958, %v1847
        %v1856 = vadd.f32 %v1852, %v1854
        %v1857 = vadd.f32 %v1853, %v1855
        %v1858 = vmul.f32 %v955, %v1774
        %v1859 = vmul.f32 %v956, %v1775
        %v1860 = vmul.f32 %v965, %v1810
        %v1861 = vmul.f32 %v966, %v1811
        %v1862 = vadd.f32 %v1858, %v1860
        %v1863 = vadd.f32 %v1859, %v1861
        %v1864 = vmul.f32 %v973, %v1846
        %v1865 = vmul.f32 %v974, %v1847
        %v1866 = vadd.f32 %v1862, %v1864
        %v1867 = vadd.f32 %v1863, %v1865
        %v1868 = vmul.f32 %v957, %v1774
        %v1869 = vmul.f32 %v958, %v1775
        %v1870 = vmul.f32 %v973, %v1810
        %v1871 = vmul.f32 %v974, %v1811
        %v1872 = vadd.f32 %v1868, %v1870
        %v1873 = vadd.f32 %v1869, %v1871
        %v1874 = vmul.f32 %v981, %v1846
        %v1875 = vmul.f32 %v982, %v1847
        %v1876 = vadd.f32 %v1872, %v1874
        %v1877 = vadd.f32 %v1873, %v1875
        %v1878 = vmul.f32 %v623, %v1856
        %v1879 = vmul.f32 %v624, %v1857
        %v1880 = vmul.f32 %v655, %v1866
        %v1881 = vmul.f32 %v656, %v1867
        %v1882 = vadd.f32 %v1878, %v1880
        %v1883 = vadd.f32 %v1879, %v1881
        %v1884 = vmul.f32 %v687, %v1876
        %v1885 = vmul.f32 %v688, %v1877
        %v1886 = vadd.f32 %v1882, %v1884
        %v1887 = vadd.f32 %v1883, %v1885
        %v1888 = vsub.f32 %v1738, %v1886
        %v1889 = vsub.f32 %v1739, %v1887
        %v1890 = vmul.f32 %v587, %v1888
        %v1891 = vmul.f32 %v588, %v1889
        %v1892 = vmul.f32 %v587, %v1856
        %v1893 = vmul.f32 %v588, %v1857
        %v1894 = vmul.f32 %v587, %v1866
        %v1895 = vmul.f32 %v588, %v1867
        %v1896 = vmul.f32 %v587, %v1876
        %v1897 = vmul.f32 %v588, %v1877
        %v1900 = vrot.slane %v1890, 1
        %v1901 = vrot.slane %v1891, 1
        %v1902 = vsel %vm592, %v1900, %v1901
        %v1905 = vsel %vm598, %v1901, 0.0
        %v1906 = vadd.f32 %v1890, %v1902
        %v1907 = vadd.f32 %v1891, %v1905
        %v1908 = vrot.slane %v1890, 7
        %v1909 = vrot.slane %v1891, 7
        %v1910 = vsel %vm602, %v1908, %v1909
        %v1913 = vsel %vm602, 0.0, %v1908
        %v1914 = vadd.f32 %v1906, %v1913
        %v1915 = vadd.f32 %v1907, %v1910
        %1916 = vrot.lane.b32.xlu0 %v1914, 1
        %v1917 = vpop.permute.xlu0 %1916
        %1918 = vrot.lane.b32.xlu0 %v1915, 1
        %v1919 = vpop.permute.xlu0 %1918
        %v1920 = vadd.f32 %v1914, %v1917
        %v1921 = vadd.f32 %v1915, %v1919
        %1922 = vrot.lane.b32.xlu0 %v1914, 127
        %v1923 = vpop.permute.xlu0 %1922
        %1924 = vrot.lane.b32.xlu0 %v1915, 127
        %v1925 = vpop.permute.xlu0 %1924
        %v1926 = vadd.f32 %v1920, %v1923
        %v1927 = vadd.f32 %v1921, %v1925
        %v1930 = vrot.slane %v1892, 1
        %v1931 = vrot.slane %v1893, 1
        %v1932 = vsel %vm592, %v1930, %v1931
        %v1935 = vsel %vm598, %v1931, 0.0
        %v1936 = vadd.f32 %v1892, %v1932
        %v1937 = vadd.f32 %v1893, %v1935
        %v1938 = vrot.slane %v1892, 7
        %v1939 = vrot.slane %v1893, 7
        %v1940 = vsel %vm602, %v1938, %v1939
        %v1943 = vsel %vm602, 0.0, %v1938
        %v1944 = vadd.f32 %v1936, %v1943
        %v1945 = vadd.f32 %v1937, %v1940
        %1946 = vrot.lane.b32.xlu0 %v1944, 1
        %v1947 = vpop.permute.xlu0 %1946
        %1948 = vrot.lane.b32.xlu0 %v1945, 1
        %v1949 = vpop.permute.xlu0 %1948
        %v1950 = vadd.f32 %v1944, %v1947
        %v1951 = vadd.f32 %v1945, %v1949
        %1952 = vrot.lane.b32.xlu0 %v1944, 127
        %v1953 = vpop.permute.xlu0 %1952
        %1954 = vrot.lane.b32.xlu0 %v1945, 127
        %v1955 = vpop.permute.xlu0 %1954
        %v1956 = vadd.f32 %v1950, %v1953
        %v1957 = vadd.f32 %v1951, %v1955
        %v1960 = vrot.slane %v1894, 1
        %v1961 = vrot.slane %v1895, 1
        %v1962 = vsel %vm592, %v1960, %v1961
        %v1965 = vsel %vm598, %v1961, 0.0
        %v1966 = vadd.f32 %v1894, %v1962
        %v1967 = vadd.f32 %v1895, %v1965
        %v1968 = vrot.slane %v1894, 7
        %v1969 = vrot.slane %v1895, 7
        %v1970 = vsel %vm602, %v1968, %v1969
        %v1973 = vsel %vm602, 0.0, %v1968
        %v1974 = vadd.f32 %v1966, %v1973
        %v1975 = vadd.f32 %v1967, %v1970
        %1976 = vrot.lane.b32.xlu0 %v1974, 1
        %v1977 = vpop.permute.xlu0 %1976
        %1978 = vrot.lane.b32.xlu0 %v1975, 1
        %v1979 = vpop.permute.xlu0 %1978
        %v1980 = vadd.f32 %v1974, %v1977
        %v1981 = vadd.f32 %v1975, %v1979
        %1982 = vrot.lane.b32.xlu0 %v1974, 127
        %v1983 = vpop.permute.xlu0 %1982
        %1984 = vrot.lane.b32.xlu0 %v1975, 127
        %v1985 = vpop.permute.xlu0 %1984
        %v1986 = vadd.f32 %v1980, %v1983
        %v1987 = vadd.f32 %v1981, %v1985
        %v1990 = vrot.slane %v1896, 1
        %v1991 = vrot.slane %v1897, 1
        %v1992 = vsel %vm592, %v1990, %v1991
        %v1995 = vsel %vm598, %v1991, 0.0
        %v1996 = vadd.f32 %v1896, %v1992
        %v1997 = vadd.f32 %v1897, %v1995
        %v1998 = vrot.slane %v1896, 7
        %v1999 = vrot.slane %v1897, 7
        %v2000 = vsel %vm602, %v1998, %v1999
        %v2003 = vsel %vm602, 0.0, %v1998
        %v2004 = vadd.f32 %v1996, %v2003
        %v2005 = vadd.f32 %v1997, %v2000
        %2006 = vrot.lane.b32.xlu0 %v2004, 1
        %v2007 = vpop.permute.xlu0 %2006
        %2008 = vrot.lane.b32.xlu0 %v2005, 1
        %v2009 = vpop.permute.xlu0 %2008
        %v2010 = vadd.f32 %v2004, %v2007
        %v2011 = vadd.f32 %v2005, %v2009
        %2012 = vrot.lane.b32.xlu0 %v2004, 127
        %v2013 = vpop.permute.xlu0 %2012
        %2014 = vrot.lane.b32.xlu0 %v2005, 127
        %v2015 = vpop.permute.xlu0 %2014
        %v2016 = vadd.f32 %v2010, %v2013
        %v2017 = vadd.f32 %v2011, %v2015
        %v2018 = vmul.f32 %v583, %v1011
        %v2019 = vmul.f32 %v586, %v1012
        %v2020 = vmul.f32 %v575, %v1956
        %v2021 = vmul.f32 %v578, %v1957
        %v2022 = vadd.f32 %v1926, %v2020
        %v2023 = vadd.f32 %v1927, %v2021
        %v2024 = vmul.f32 %v576, %v1986
        %v2025 = vmul.f32 %v579, %v1987
        %v2026 = vadd.f32 %v2022, %v2024
        %v2027 = vadd.f32 %v2023, %v2025
        %v2028 = vmul.f32 %v577, %v2016
        %v2029 = vmul.f32 %v580, %v2017
        %v2030 = vadd.f32 %v2026, %v2028
        %v2031 = vadd.f32 %v2027, %v2029
        %v2032 = vmul.f32 %v2030, 0.11111111
        %v2033 = vmul.f32 %v2031, 0.11111111
        %v2034 = vsub.f32 %v2018, %v2032
        %v2035 = vsub.f32 %v2019, %v2033
        %vm2036 = vcmp.eq.f32.partialorder %v589, 3.0
        %v2037 = vsel %vm2036, 100.0, 0.0
        %v2038 = vrot.slane %v583, 2
        %v2039 = vrot.slane %v586, 2
        %v2040 = vsel %vm1343, %v2038, %v2039
        %v2042 = vmul.f32 %v1014, %v2040
        %v2044 = vrot.slane %v2042, 6
        %v2046 = vadd.f32 %v2034, %v2044
        %v2047 = vadd.f32 %v2035, %v2044
        %v2049 = vrot.slane %v2037, 6
        %v2051 = vsub.f32 %v2046, %v2049
        %v2052 = vsub.f32 %v2047, %v2049
        %v2053 = vmul.f32 %v2051, %v2051
        %v2054 = vmul.f32 %v2052, %v2052
        %v2055 = vadd.f32 %v1708, %v2053
        %v2056 = vadd.f32 %v1709, %v2054
        %vm2057 = vcmask 1047554
        %v2058 = vsel %vm2057, %v2055, 0.0
        %2059 = vadd.xlane.f32.xlu0 %v2058
        %v2060 = vpop.xlane.xlu0 %2059
        %vm2061 = vcmask 1041408
        %v2062 = vsel %vm2061, %v2056, 0.0
        %2063 = vadd.xlane.f32.xlu0 %v2062
        %v2064 = vpop.xlane.xlu0 %2063
        %v2067 = vrot.slane %v2060, 2
        %v2068 = vrot.slane %v2064, 2
        %v2069 = vsel %vm1343, %v2067, %v2068
        %v2071 = vrot.slane %v2069, 4
        %v2072 = vadd.f32 %v2069, %v2071
        %v2073 = vrot.slane %v2072, 2
        %v2074 = vadd.f32 %v2072, %v2073
        %v2075 = vrot.slane %v2074, 1
        %v2076 = vadd.f32 %v2074, %v2075
        %vm2077 = vcmask 0
        %2078 = vst.msk [vmem:[%s574] sm:$0x1] %vm2077, %v2076
        %p2079 = scmp.lt.s32.totalorder %s34, 1
        %s2080 = scalar_select %p2079, %s34, 1
        %p2081 = scmp.lt.s32.totalorder %s35, 1
        %s2082 = scalar_select %p2081, %s35, 1
        %s2083 = smul.addr %s2080, 2
        %s2084 = sadd.s32 %s2082, %s2083
        %s2085 = scalar_lea.vmem %s7, %s2084
        // Predicated region
        $region77: #{tpu_custom_call.1} parent=47 // pred_check
          %p2086 = pneg %p264
        $region78: #{tpu_custom_call.1} parent=47 // pred_check_branch
          %2088 = sbr.rel (%p2086) target = $region80
        $region79: #{tpu_custom_call.1} parent=47 // pred_region
          _
        $region80: #{tpu_custom_call.1} parent=47 // pred_fallthru
          _
      $region48: #{tpu_custom_call.1} parent=5 // pred_fallthru
        _
      %p2089 = scmp.le.s32.totalorder 2, %s25
      // Predicated region
      $region81: #{tpu_custom_call.1} parent=5 // pred_check
        %p2090 = pneg %p2089
      $region82: #{tpu_custom_call.1} parent=5 // pred_check_branch
        %2092 = sbr.rel (%p2090) target = $region84
      $region83: #{tpu_custom_call.1} parent=5 // pred_region
        %s2093 = ssub.s32 %s25, 2
        // Predicated region
        $region85: #{tpu_custom_call.1} parent=83 // pred_check
          %p2094 = pneg %p270
        $region86: #{tpu_custom_call.1} parent=83 // pred_check_branch
          %2096 = sbr.rel (%p2094) target = $region88
        $region87: #{tpu_custom_call.1} parent=83 // pred_region
          %p2097 = scmp.lt.s32.totalorder %s36, 1
          %s2098 = scalar_select %p2097, %s36, 1
          %p2099 = scmp.lt.s32.totalorder %s37, 1
          %s2100 = scalar_select %p2099, %s37, 1
          %s2101 = smul.addr %s2098, 2
          %s2102 = sadd.s32 %s2100, %s2101
          %s2103 = scalar_lea.vmem %s7, %s2102
        $region88: #{tpu_custom_call.1} parent=83 // pred_fallthru
          _
      $region84: #{tpu_custom_call.1} parent=5 // pred_fallthru
        _
    $region6: #{tpu_custom_call.1} parent=1 // loop_footer
      %s29 = sadd.s32 1, %s25
    $region7: #{tpu_custom_call.1} parent=1 // loop_footer_branch
      %24 = sbr.rel target = $region3
    $region8: #{tpu_custom_call.1} parent=1 // loop_exit
      _
    %2104 = vsyncpa [#allocation3], 1
    %s2105 = scalar_lea.sflag [#allocation3], 1
    %2106 = vsyncpa %s2105, 1
    %2107 = vsyncpa [#allocation5], 1
    %s2108 = scalar_lea.sflag [#allocation5], 1
    %2109 = vsyncpa %s2108, 1
    %2110 = vsyncpa [#allocation8], 1
    %s2111 = scalar_lea.sflag [#allocation8], 1
    %2112 = vsyncpa %s2111, 1
    %2113 = vsyncpa [#allocation11], 1
    %s2114 = scalar_lea.sflag [#allocation11], 1
    %2115 = vsyncpa %s2114, 1

</llo_original>
